<compile_context>
chip_gen: v7x
topology: tpu7x:2x2x1
jax: 0.10.0
libtpu: 0.0.40
codegen_flags: <defaults>
</compile_context>

<pallas_src>
import functools
import numpy as np

import jax
import jax.numpy as jnp
from jax.experimental import pallas as pl
from jax.experimental.pallas import tpu as pltpu  # noqa: F401  (TPU backend)

F32 = jnp.float32


# --------------------------------------------------------------------------
# Fused Pallas kernel: the whole EdgeCycleAutobahnLvl forward in one body.
# --------------------------------------------------------------------------
def _mm(a, b):
    return jnp.dot(a, b, preferred_element_type=jnp.float32)


def _fused_forward_kernel(*refs, treedef):
    # refs = (*input_leaf_refs, edge_out_ref, cycle_out_ref)
    edge_out_ref, cycle_out_ref = refs[-2], refs[-1]
    bundle = jax.tree_util.tree_unflatten(treedef, refs[:-2])

    G = bundle["G"]
    P = bundle["P"]
    edge_attr = bundle["edge_attr"][...]      # (E, H)
    cycle_attr = bundle["cycle_attr"][...]    # (R, H)

    # gather / pooling linear maps (stacked across both cycle types)
    M1 = G["M1"][...]        # (R, E)  edge->cycle, min_overlaps=1
    M2 = G["M2"][...]        # (R, E)  edge->cycle, min_overlaps=2
    A = G["A"][...]          # (R, R)  cycle->cycle transfer linmap
    B = G["B"][...]          # (R, R)  cycle->cycle broadcast linmap
    S = G["S"][...]          # (R, R)  block-diagonal per-cycle pooling
    sel0 = G["sel0"][...]    # (R, 1)  rows of cycle type 0
    sel1 = G["sel1"][...]    # (R, 1)  rows of cycle type 1
    C2E1 = G["C2E1"][...]    # (E, R)  cycle->edge, min_overlaps=1
    C2E2 = G["C2E2"][...]    # (E, R)  cycle->edge, min_overlaps=2

    def mlp(layers, xs):
        # First layer: split weights -- one partial matmul per input chunk
        # (replaces a lane concat followed by one wide matmul).  BN scale is
        # already folded into the weights; `shift` carries bias + BN shift.
        ws, sh = layers[0]
        z = _mm(xs[0], ws[0][...])
        for x, w in zip(xs[1:], ws[1:]):
            z = z + _mm(x, w[...])
        x = jnp.maximum(z + sh[...], 0.0)
        for w, sh2 in layers[1:]:
            x = jnp.maximum(_mm(x, w[...]) + sh2[...], 0.0)
        return x

    def autobahn(prm, x, pooled):
        # Permutation-equivariant mixing per cycle (self term + cycle-pool
        # term), both cycle types in one batched pass via row-select masks;
        # per-type biases are pre-masked/summed on the host into prm["b"].
        # TODO(synk): ptens.Autobahn uses a cycle-symmetry band convolution;
        # only the (self, cycle-pool) equivariant basis is implemented here.
        y0 = _mm(x, prm["w1"][0][...]) + _mm(pooled, prm["w2"][0][...])
        y1 = _mm(x, prm["w1"][1][...]) + _mm(pooled, prm["w2"][1][...])
        return sel0 * y0 + sel1 * y1 + prm["b"][...]

    one_pe1 = 1.0 + P["eps_edge_1"][...]
    one_pe2 = 1.0 + P["eps_edge_2"][...]
    one_pc1 = 1.0 + P["eps_cycle_1"][...]
    one_pc2 = 1.0 + P["eps_cycle_2"][...]

    # ---- edge -> cycle lifts (min_overlaps 1 and 2) ----
    e2c1 = _mm(M1, edge_attr)                 # (R, H)
    e2c2 = _mm(M2, edge_attr)                 # (R, H)

    # ---- cycle -> cycle linmaps; channel-concat folded into cycle_mlp_2 via
    #      split first-layer weights (order: [A@e2c2 | B@e2c2 | A@e2c1 | B@e2c1])
    lift_aggr = mlp(P["cycle_mlp_2"],
                    (_mm(A, e2c2), _mm(B, e2c2), _mm(A, e2c1), _mm(B, e2c1)))  # (R, 2H)

    cycle_lm = jnp.concatenate([_mm(A, cycle_attr), _mm(B, cycle_attr)],
                               axis=-1)       # (R, 2H), needed elementwise

    # ---- cycle autobahns on the edge->cycle lifts + cycle_autobahn_mlp ----
    ab1 = autobahn(P["cycle_autobahns"], e2c1, _mm(S, e2c1))        # (R, AC)
    ab2 = autobahn(P["cycle_autobahns"], e2c2, _mm(S, e2c2))        # (R, AC)
    e2c_ab = mlp(P["cycle_autobahn_mlp"], (ab1, ab2))               # (R, 2H)

    # ---- cycle output: GIN combine fused into cycle_mlp_1 prologue ----
    cycle_pre = one_pc1 * cycle_lm + one_pc2 * lift_aggr + e2c_ab
    cycle_out = mlp(P["cycle_mlp_1"], (cycle_pre,))                 # (R, H)

    # ---- level aggregation back to edges ----
    lvl_aggr_cycle = mlp(P["edge_mlp_1"], (lift_aggr, cycle_attr))  # (R, H)

    lvl_cat = jnp.concatenate([_mm(A, lvl_aggr_cycle), _mm(B, lvl_aggr_cycle)],
                              axis=-1)                              # (R, 2H)
    lvl_ab = autobahn(P["lvl_autobahn"], lvl_cat, _mm(S, lvl_cat))  # (R, AC)

    lvl_ab_1 = _mm(C2E1, lvl_ab)                                    # (E, AC)
    lvl_ab_2 = _mm(C2E2, lvl_ab)                                    # (E, AC)
    lvl_1 = _mm(C2E1, lvl_cat)                                      # (E, 2H)
    lvl_2 = _mm(C2E2, lvl_cat)                                      # (E, 2H)

    lvl_aggr_torch = mlp(P["edge_mlp_3"], (lvl_1, lvl_2))           # (E, H)
    lvl_aggr_ab_torch = mlp(P["edge_mlp_4"], (lvl_ab_1, lvl_ab_2))  # (E, H)

    # ---- edge output: GIN combine fused into edge_mlp_2 prologue ----
    edge_pre = (one_pe1 * edge_attr
                + one_pe2 * lvl_aggr_torch
                + lvl_aggr_ab_torch)
    edge_out = mlp(P["edge_mlp_2"], (edge_pre,))                    # (E, H)

    edge_out_ref[...] = edge_out
    cycle_out_ref[...] = cycle_out


def edge_cycle_autobahn_lvl_forward(params, edge_attr, cycle_attr, G):
    """Single fused, VMEM-resident Pallas launch for the whole forward."""
    E, H = edge_attr.shape
    R = cycle_attr.shape[0]

    bundle = {"G": G, "P": params, "edge_attr": edge_attr, "cycle_attr": cycle_attr}
    leaves, treedef = jax.tree_util.tree_flatten(bundle)

    kernel = functools.partial(_fused_forward_kernel, treedef=treedef)
    edge_out, cycle_out = pl.pallas_call(
        kernel,
        out_shape=(jax.ShapeDtypeStruct((E, H), F32),
                   jax.ShapeDtypeStruct((R, H), F32)),
        # no grid / no BlockSpecs: every (tiny) operand is a whole-array VMEM
        # block; total footprint is a few hundred KiB, far under scoped-VMEM
        # limits on v5e/v6e/v7x, so pipelining machinery is skipped on purpose.
    )(*leaves)
    return edge_out, cycle_out


# --------------------------------------------------------------------------
# Parameter init (deterministic, synthetic) -- mirrors the torch module.
# --------------------------------------------------------------------------
def init_mlp(key, in_dim, dense_dim, out_dim, num_layers, bn_eps=1e-5):
    # get_mlp_invertible assumed [Linear -> BatchNorm1d -> ReLU] x num_layers
    # with widths in_dim -> dense_dim ... dense_dim -> out_dim.  BatchNorm uses
    # inference-mode running stats (mean=0, var=1) folded into scale/shift.
    dims = [in_dim] + [dense_dim] * (num_layers - 1) + [out_dim]
    layers = []
    for i in range(num_layers):
        key, kw, kb, kg, kbt = jax.random.split(key, 5)
        bound = 1.0 / float(np.sqrt(dims[i]))
        w = jax.random.uniform(kw, (dims[i], dims[i + 1]), F32, -bound, bound)
        b = jax.random.uniform(kb, (dims[i + 1],), F32, -bound, bound)
        gamma = 1.0 + 0.1 * jax.random.normal(kg, (dims[i + 1],), F32)
        beta = 0.1 * jax.random.normal(kbt, (dims[i + 1],), F32)
        run_mean = jnp.zeros((dims[i + 1],), F32)
        run_var = jnp.ones((dims[i + 1],), F32)
        scale = gamma / jnp.sqrt(run_var + bn_eps)
        shift = (b - run_mean) * scale + beta
        layers.append((w, scale.reshape(1, -1), shift.reshape(1, -1)))
    return layers


def init_autobahn(key, in_dim, out_dim):
    kw1, kw2, kb = jax.random.split(key, 3)
    bound = 1.0 / float(np.sqrt(in_dim))
    return {
        "w1": jax.random.uniform(kw1, (in_dim, out_dim), F32, -bound, bound),
        "w2": jax.random.uniform(kw2, (in_dim, out_dim), F32, -bound, bound),
        "b": jax.random.uniform(kb, (1, out_dim), F32, -bound, bound),
    }


def init_params(key, H, AC, bn_eps=1e-5):
    ks = list(jax.random.split(key, 16))
    p = {}
    p["edge_mlp_1"] = init_mlp(ks[0], H + 2 * H, H, H, 2, bn_eps)
    p["edge_mlp_2"] = init_mlp(ks[1], H, H, H, 2, bn_eps)
    p["edge_mlp_3"] = init_mlp(ks[2], 4 * H, H, H, 3, bn_eps)
    p["edge_mlp_4"] = init_mlp(ks[3], 2 * AC, H, H, 2, bn_eps)
    p["cycle_mlp_1"] = init_mlp(ks[4], 2 * H, H, H, 2, bn_eps)
    p["cycle_mlp_2"] = init_mlp(ks[5], 4 * H, H, 2 * H, 3, bn_eps)
    p["cycle_autobahn_mlp"] = init_mlp(ks[6], 2 * AC, H, 2 * H, 2, bn_eps)
    p["cycle_autobahns"] = [init_autobahn(ks[7], H, AC), init_autobahn(ks[8], H, AC)]
    p["lvl_autobahn"] = [init_autobahn(ks[9], 2 * H, AC), init_autobahn(ks[10], 2 * H, AC)]
    p["eps_edge_1"] = jnp.zeros((1, 1), F32)
    p["eps_edge_2"] = jnp.zeros((1, 1), F32)
    p["eps_cycle_1"] = jnp.zeros((1, 1), F32)
    p["eps_cycle_2"] = jnp.zeros((1, 1), F32)
    return p


# --------------------------------------------------------------------------
# Host-side weight surgery (done once, outside the kernel / hot path):
#   * fold BN scale into the Linear weights,
#   * split concat-fed first-layer weights row-wise,
#   * pre-mask + sum the per-cycle-type Autobahn biases.
# --------------------------------------------------------------------------
def _fold_and_split(layers, split_sizes=None):
    out = []
    for li, (w, scale, shift) in enumerate(layers):
        w = w * scale  # (x @ W) * scale == x @ (W * scale)   (per-output-col)
        if li == 0:
            if split_sizes is None:
                ws = [w]
            else:
                offs = np.cumsum([0] + list(split_sizes))
                ws = [w[int(offs[i]):int(offs[i + 1]), :]
                      for i in range(len(split_sizes))]
            out.append((ws, shift))
        else:
            out.append((w, shift))
    return out


def _prep_autobahn_pair(pair, sel0, sel1):
    return {"w1": [pair[0]["w1"], pair[1]["w1"]],
            "w2": [pair[0]["w2"], pair[1]["w2"]],
            "b": sel0 * pair[0]["b"] + sel1 * pair[1]["b"]}


def prepare_params(raw, G, H, AC):
    P = {}
    P["edge_mlp_1"] = _fold_and_split(raw["edge_mlp_1"], (2 * H, H))
    P["edge_mlp_2"] = _fold_and_split(raw["edge_mlp_2"])
    P["edge_mlp_3"] = _fold_and_split(raw["edge_mlp_3"], (2 * H, 2 * H))
    P["edge_mlp_4"] = _fold_and_split(raw["edge_mlp_4"], (AC, AC))
    P["cycle_mlp_1"] = _fold_and_split(raw["cycle_mlp_1"])
    P["cycle_mlp_2"] = _fold_and_split(raw["cycle_mlp_2"], (H, H, H, H))
    P["cycle_autobahn_mlp"] = _fold_and_split(raw["cycle_autobahn_mlp"], (AC, AC))
    P["cycle_autobahns"] = _prep_autobahn_pair(raw["cycle_autobahns"],
                                               G["sel0"], G["sel1"])
    P["lvl_autobahn"] = _prep_autobahn_pair(raw["lvl_autobahn"],
                                            G["sel0"], G["sel1"])
    for k in ("eps_edge_1", "eps_edge_2", "eps_cycle_1", "eps_cycle_2"):
        P[k] = raw[k]
    return P


# --------------------------------------------------------------------------
# Synthetic graph + ptens gather linear maps (built once on host as numpy,
# stacked/block-diagonal across the two cycle types so the kernel needs only
# single matmuls per gather phase).
# --------------------------------------------------------------------------
def build_graph_mats():
    # nodes 0..9: a 5-cycle [0..4] and a 6-cycle [4..9] sharing node 4, plus a
    # bridge edge (2,7).   included_cycles = [5, 6]
    cycles = [[0, 1, 2, 3, 4], [4, 5, 6, 7, 8, 9]]
    sizes = [5, 6]
    edges = [(0, 1), (1, 2), (2, 3), (3, 4), (0, 4),
             (4, 5), (5, 6), (6, 7), (7, 8), (8, 9), (4, 9), (2, 7)]
    E = len(edges)
    offsets = np.cumsum([0] + [len(c) for c in cycles])[:-1]
    R = int(sum(len(c) for c in cycles))

    M1 = np.zeros((R, E), np.float32)   # edge->cycle, min_overlaps=1
    M2 = np.zeros((R, E), np.float32)   # edge->cycle, min_overlaps=2
    A = np.zeros((R, R), np.float32)    # cycle->cycle transfer linmap
    B = np.zeros((R, R), np.float32)    # cycle->cycle broadcast linmap
    S = np.zeros((R, R), np.float32)    # block-diagonal per-cycle pooling
    sel = np.zeros((R, 2), np.float32)  # row -> cycle-type masks

    for t, cyc in enumerate(cycles):
        size = len(cyc)
        off = int(offsets[t])
        for e_idx, (u, v) in enumerate(edges):
            ov = sorted(set((u, v)) & set(cyc))
            for a in ov:
                M1[off + cyc.index(a), e_idx] += 1.0
            if len(ov) >= 2:
                for a in ov:
                    M2[off + cyc.index(a), e_idx] += 1.0
        for s_idx, src in enumerate(cycles):
            ov = sorted(set(cyc) & set(src))
            if len(ov) >= sizes[t]:            # min_overlaps = target cycle size
                for at in ov:
                    A[off + cyc.index(at), int(offsets[s_idx]) + src.index(at)] += 1.0
                    for asrc in ov:
                        B[off + cyc.index(at), int(offsets[s_idx]) + src.index(asrc)] += 1.0
        S[off:off + size, off:off + size] = 1.0
        sel[off:off + size, t] = 1.0

    C2E1 = np.zeros((E, R), np.float32)
    C2E2 = np.zeros((E, R), np.float32)
    for e_idx, (u, v) in enumerate(edges):
        for s_idx, src in enumerate(cycles):
            ov = sorted(set((u, v)) & set(src))
            for a in ov:
                C2E1[e_idx, int(offsets[s_idx]) + src.index(a)] += 1.0
            if len(ov) >= 2:
                for a in ov:
                    C2E2[e_idx, int(offsets[s_idx]) + src.index(a)] += 1.0

    G = {"M1": jnp.asarray(M1), "M2": jnp.asarray(M2),
         "A": jnp.asarray(A), "B": jnp.asarray(B), "S": jnp.asarray(S),
         "sel0": jnp.asarray(sel[:, 0:1]), "sel1": jnp.asarray(sel[:, 1:2]),
         "C2E1": jnp.asarray(C2E1), "C2E2": jnp.asarray(C2E2)}
    return G, E, R


# --------------------------------------------------------------------------
if __name__ == "__main__":
    H = 32    # edge_hidden = edge_dense = cycle_hidden = cycle_dense
    AC = 32   # autobahn_channels

    G, E, R = build_graph_mats()

    key = jax.random.PRNGKey(0)
    k_e, k_c, k_p = jax.random.split(key, 3)
    edge_attr = jax.random.normal(k_e, (E, H), F32)    # ptensors0b over edges
    cycle_attr = jax.random.normal(k_c, (R, H), F32)   # ptensors1b over cycles

    raw_params = init_params(k_p, H, AC)
    params = prepare_params(raw_params, G, H, AC)
    params = jax.tree_util.tree_map(jax.block_until_ready, params)  # host prep done once

    edge_out, cycle_out = edge_cycle_autobahn_lvl_forward(
        params, edge_attr, cycle_attr, G)
    jax.block_until_ready((edge_out, cycle_out))

    assert edge_out.shape == (E, H) and cycle_out.shape == (R, H)
    assert bool(jnp.all(jnp.isfinite(edge_out))) and bool(jnp.all(jnp.isfinite(cycle_out)))
    print("KERNEL_OK")
</pallas_src>

<mosaic_0001>
module attributes {stable_mosaic.version = 11 : i64} {
  func.func @_fused_forward_kernel(%arg0: memref<11x11xf32, #tpu.memory_space<vmem>>, %arg1: memref<11x11xf32, #tpu.memory_space<vmem>>, %arg2: memref<12x11xf32, #tpu.memory_space<vmem>>, %arg3: memref<12x11xf32, #tpu.memory_space<vmem>>, %arg4: memref<11x12xf32, #tpu.memory_space<vmem>>, %arg5: memref<11x12xf32, #tpu.memory_space<vmem>>, %arg6: memref<11x11xf32, #tpu.memory_space<vmem>>, %arg7: memref<11x1xf32, #tpu.memory_space<vmem>>, %arg8: memref<11x1xf32, #tpu.memory_space<vmem>>, %arg9: memref<32x32xf32, #tpu.memory_space<vmem>>, %arg10: memref<32x32xf32, #tpu.memory_space<vmem>>, %arg11: memref<1x32xf32, #tpu.memory_space<vmem>>, %arg12: memref<32x64xf32, #tpu.memory_space<vmem>>, %arg13: memref<1x64xf32, #tpu.memory_space<vmem>>, %arg14: memref<11x32xf32, #tpu.memory_space<vmem>>, %arg15: memref<32x32xf32, #tpu.memory_space<vmem>>, %arg16: memref<32x32xf32, #tpu.memory_space<vmem>>, %arg17: memref<32x32xf32, #tpu.memory_space<vmem>>, %arg18: memref<32x32xf32, #tpu.memory_space<vmem>>, %arg19: memref<64x32xf32, #tpu.memory_space<vmem>>, %arg20: memref<1x32xf32, #tpu.memory_space<vmem>>, %arg21: memref<32x32xf32, #tpu.memory_space<vmem>>, %arg22: memref<1x32xf32, #tpu.memory_space<vmem>>, %arg23: memref<32x32xf32, #tpu.memory_space<vmem>>, %arg24: memref<32x32xf32, #tpu.memory_space<vmem>>, %arg25: memref<32x32xf32, #tpu.memory_space<vmem>>, %arg26: memref<32x32xf32, #tpu.memory_space<vmem>>, %arg27: memref<1x32xf32, #tpu.memory_space<vmem>>, %arg28: memref<32x32xf32, #tpu.memory_space<vmem>>, %arg29: memref<1x32xf32, #tpu.memory_space<vmem>>, %arg30: memref<32x64xf32, #tpu.memory_space<vmem>>, %arg31: memref<1x64xf32, #tpu.memory_space<vmem>>, %arg32: memref<64x32xf32, #tpu.memory_space<vmem>>, %arg33: memref<32x32xf32, #tpu.memory_space<vmem>>, %arg34: memref<1x32xf32, #tpu.memory_space<vmem>>, %arg35: memref<32x32xf32, #tpu.memory_space<vmem>>, %arg36: memref<1x32xf32, #tpu.memory_space<vmem>>, %arg37: memref<32x32xf32, #tpu.memory_space<vmem>>, %arg38: memref<1x32xf32, #tpu.memory_space<vmem>>, %arg39: memref<32x32xf32, #tpu.memory_space<vmem>>, %arg40: memref<1x32xf32, #tpu.memory_space<vmem>>, %arg41: memref<64x32xf32, #tpu.memory_space<vmem>>, %arg42: memref<64x32xf32, #tpu.memory_space<vmem>>, %arg43: memref<1x32xf32, #tpu.memory_space<vmem>>, %arg44: memref<32x32xf32, #tpu.memory_space<vmem>>, %arg45: memref<1x32xf32, #tpu.memory_space<vmem>>, %arg46: memref<32x32xf32, #tpu.memory_space<vmem>>, %arg47: memref<1x32xf32, #tpu.memory_space<vmem>>, %arg48: memref<32x32xf32, #tpu.memory_space<vmem>>, %arg49: memref<32x32xf32, #tpu.memory_space<vmem>>, %arg50: memref<1x32xf32, #tpu.memory_space<vmem>>, %arg51: memref<32x32xf32, #tpu.memory_space<vmem>>, %arg52: memref<1x32xf32, #tpu.memory_space<vmem>>, %arg53: memref<1x1xf32, #tpu.memory_space<vmem>>, %arg54: memref<1x1xf32, #tpu.memory_space<vmem>>, %arg55: memref<1x1xf32, #tpu.memory_space<vmem>>, %arg56: memref<1x1xf32, #tpu.memory_space<vmem>>, %arg57: memref<11x32xf32, #tpu.memory_space<vmem>>, %arg58: memref<64x32xf32, #tpu.memory_space<vmem>>, %arg59: memref<64x32xf32, #tpu.memory_space<vmem>>, %arg60: memref<64x32xf32, #tpu.memory_space<vmem>>, %arg61: memref<64x32xf32, #tpu.memory_space<vmem>>, %arg62: memref<11x32xf32, #tpu.memory_space<vmem>>, %arg63: memref<12x32xf32, #tpu.memory_space<vmem>>, %arg64: memref<12x32xf32, #tpu.memory_space<vmem>>, %arg65: memref<11x32xf32, #tpu.memory_space<vmem>>) attributes {dimension_semantics = [], scalar_prefetch = 0 : i64, scratch_operands = 0 : i64, tpu.core_type = #tpu.core_type<tc>} {
    %c0 = arith.constant 0 : index
    %c0_0 = arith.constant 0 : index
    %0 = vector.load %arg63[%c0, %c0_0] : memref<12x32xf32, #tpu.memory_space<vmem>>, vector<12x32xf32>
    %c0_1 = arith.constant 0 : index
    %c0_2 = arith.constant 0 : index
    %1 = vector.load %arg62[%c0_1, %c0_2] : memref<11x32xf32, #tpu.memory_space<vmem>>, vector<11x32xf32>
    %c0_3 = arith.constant 0 : index
    %c0_4 = arith.constant 0 : index
    %2 = vector.load %arg4[%c0_3, %c0_4] : memref<11x12xf32, #tpu.memory_space<vmem>>, vector<11x12xf32>
    %c0_5 = arith.constant 0 : index
    %c0_6 = arith.constant 0 : index
    %3 = vector.load %arg5[%c0_5, %c0_6] : memref<11x12xf32, #tpu.memory_space<vmem>>, vector<11x12xf32>
    %c0_7 = arith.constant 0 : index
    %c0_8 = arith.constant 0 : index
    %4 = vector.load %arg0[%c0_7, %c0_8] : memref<11x11xf32, #tpu.memory_space<vmem>>, vector<11x11xf32>
    %c0_9 = arith.constant 0 : index
    %c0_10 = arith.constant 0 : index
    %5 = vector.load %arg1[%c0_9, %c0_10] : memref<11x11xf32, #tpu.memory_space<vmem>>, vector<11x11xf32>
    %c0_11 = arith.constant 0 : index
    %c0_12 = arith.constant 0 : index
    %6 = vector.load %arg6[%c0_11, %c0_12] : memref<11x11xf32, #tpu.memory_space<vmem>>, vector<11x11xf32>
    %c0_13 = arith.constant 0 : index
    %c0_14 = arith.constant 0 : index
    %7 = vector.load %arg7[%c0_13, %c0_14] : memref<11x1xf32, #tpu.memory_space<vmem>>, vector<11x1xf32>
    %c0_15 = arith.constant 0 : index
    %c0_16 = arith.constant 0 : index
    %8 = vector.load %arg8[%c0_15, %c0_16] : memref<11x1xf32, #tpu.memory_space<vmem>>, vector<11x1xf32>
    %c0_17 = arith.constant 0 : index
    %c0_18 = arith.constant 0 : index
    %9 = vector.load %arg2[%c0_17, %c0_18] : memref<12x11xf32, #tpu.memory_space<vmem>>, vector<12x11xf32>
    %c0_19 = arith.constant 0 : index
    %c0_20 = arith.constant 0 : index
    %10 = vector.load %arg3[%c0_19, %c0_20] : memref<12x11xf32, #tpu.memory_space<vmem>>, vector<12x11xf32>
    %c0_21 = arith.constant 0 : index
    %c0_22 = arith.constant 0 : index
    %11 = vector.load %arg55[%c0_21, %c0_22] : memref<1x1xf32, #tpu.memory_space<vmem>>, vector<1x1xf32>
    %cst = arith.constant 1.000000e+00 : f32
    %12 = vector.broadcast %cst : f32 to vector<1x1xf32>
    %13 = arith.addf %12, %11 : vector<1x1xf32>
    %c0_23 = arith.constant 0 : index
    %c0_24 = arith.constant 0 : index
    %14 = vector.load %arg56[%c0_23, %c0_24] : memref<1x1xf32, #tpu.memory_space<vmem>>, vector<1x1xf32>
    %cst_25 = arith.constant 1.000000e+00 : f32
    %15 = vector.broadcast %cst_25 : f32 to vector<1x1xf32>
    %16 = arith.addf %15, %14 : vector<1x1xf32>
    %c0_26 = arith.constant 0 : index
    %c0_27 = arith.constant 0 : index
    %17 = vector.load %arg53[%c0_26, %c0_27] : memref<1x1xf32, #tpu.memory_space<vmem>>, vector<1x1xf32>
    %cst_28 = arith.constant 1.000000e+00 : f32
    %18 = vector.broadcast %cst_28 : f32 to vector<1x1xf32>
    %19 = arith.addf %18, %17 : vector<1x1xf32>
    %c0_29 = arith.constant 0 : index
    %c0_30 = arith.constant 0 : index
    %20 = vector.load %arg54[%c0_29, %c0_30] : memref<1x1xf32, #tpu.memory_space<vmem>>, vector<1x1xf32>
    %cst_31 = arith.constant 1.000000e+00 : f32
    %21 = vector.broadcast %cst_31 : f32 to vector<1x1xf32>
    %22 = arith.addf %21, %20 : vector<1x1xf32>
    %cst_32 = arith.constant dense<0.000000e+00> : vector<11x32xf32>
    %23 = tpu.matmul %2, %0, %cst_32 {dimension_numbers = #tpu.dot_dimension_numbers<[1], [0], [0], [1], [0, 0, 1, 1], [], []>} : vector<11x12xf32>, vector<12x32xf32>, vector<11x32xf32> -> vector<11x32xf32>
    %cst_33 = arith.constant dense<0.000000e+00> : vector<11x32xf32>
    %24 = tpu.matmul %3, %0, %cst_33 {dimension_numbers = #tpu.dot_dimension_numbers<[1], [0], [0], [1], [0, 0, 1, 1], [], []>} : vector<11x12xf32>, vector<12x32xf32>, vector<11x32xf32> -> vector<11x32xf32>
    %cst_34 = arith.constant dense<0.000000e+00> : vector<11x32xf32>
    %25 = tpu.matmul %4, %24, %cst_34 {dimension_numbers = #tpu.dot_dimension_numbers<[1], [0], [0], [1], [0, 0, 1, 1], [], []>} : vector<11x11xf32>, vector<11x32xf32>, vector<11x32xf32> -> vector<11x32xf32>
    %cst_35 = arith.constant dense<0.000000e+00> : vector<11x32xf32>
    %26 = tpu.matmul %5, %24, %cst_35 {dimension_numbers = #tpu.dot_dimension_numbers<[1], [0], [0], [1], [0, 0, 1, 1], [], []>} : vector<11x11xf32>, vector<11x32xf32>, vector<11x32xf32> -> vector<11x32xf32>
    %cst_36 = arith.constant dense<0.000000e+00> : vector<11x32xf32>
    %27 = tpu.matmul %4, %23, %cst_36 {dimension_numbers = #tpu.dot_dimension_numbers<[1], [0], [0], [1], [0, 0, 1, 1], [], []>} : vector<11x11xf32>, vector<11x32xf32>, vector<11x32xf32> -> vector<11x32xf32>
    %cst_37 = arith.constant dense<0.000000e+00> : vector<11x32xf32>
    %28 = tpu.matmul %5, %23, %cst_37 {dimension_numbers = #tpu.dot_dimension_numbers<[1], [0], [0], [1], [0, 0, 1, 1], [], []>} : vector<11x11xf32>, vector<11x32xf32>, vector<11x32xf32> -> vector<11x32xf32>
    %c0_38 = arith.constant 0 : index
    %c0_39 = arith.constant 0 : index
    %29 = vector.load %arg23[%c0_38, %c0_39] : memref<32x32xf32, #tpu.memory_space<vmem>>, vector<32x32xf32>
    %cst_40 = arith.constant dense<0.000000e+00> : vector<11x32xf32>
    %30 = tpu.matmul %25, %29, %cst_40 {dimension_numbers = #tpu.dot_dimension_numbers<[1], [0], [0], [1], [0, 0, 1, 1], [], []>} : vector<11x32xf32>, vector<32x32xf32>, vector<11x32xf32> -> vector<11x32xf32>
    %c0_41 = arith.constant 0 : index
    %c0_42 = arith.constant 0 : index
    %31 = vector.load %arg24[%c0_41, %c0_42] : memref<32x32xf32, #tpu.memory_space<vmem>>, vector<32x32xf32>
    %cst_43 = arith.constant dense<0.000000e+00> : vector<11x32xf32>
    %32 = tpu.matmul %26, %31, %cst_43 {dimension_numbers = #tpu.dot_dimension_numbers<[1], [0], [0], [1], [0, 0, 1, 1], [], []>} : vector<11x32xf32>, vector<32x32xf32>, vector<11x32xf32> -> vector<11x32xf32>
    %33 = arith.addf %30, %32 : vector<11x32xf32>
    %c0_44 = arith.constant 0 : index
    %c0_45 = arith.constant 0 : index
    %34 = vector.load %arg25[%c0_44, %c0_45] : memref<32x32xf32, #tpu.memory_space<vmem>>, vector<32x32xf32>
    %cst_46 = arith.constant dense<0.000000e+00> : vector<11x32xf32>
    %35 = tpu.matmul %27, %34, %cst_46 {dimension_numbers = #tpu.dot_dimension_numbers<[1], [0], [0], [1], [0, 0, 1, 1], [], []>} : vector<11x32xf32>, vector<32x32xf32>, vector<11x32xf32> -> vector<11x32xf32>
    %36 = arith.addf %33, %35 : vector<11x32xf32>
    %c0_47 = arith.constant 0 : index
    %c0_48 = arith.constant 0 : index
    %37 = vector.load %arg26[%c0_47, %c0_48] : memref<32x32xf32, #tpu.memory_space<vmem>>, vector<32x32xf32>
    %cst_49 = arith.constant dense<0.000000e+00> : vector<11x32xf32>
    %38 = tpu.matmul %28, %37, %cst_49 {dimension_numbers = #tpu.dot_dimension_numbers<[1], [0], [0], [1], [0, 0, 1, 1], [], []>} : vector<11x32xf32>, vector<32x32xf32>, vector<11x32xf32> -> vector<11x32xf32>
    %39 = arith.addf %36, %38 : vector<11x32xf32>
    %c0_50 = arith.constant 0 : index
    %c0_51 = arith.constant 0 : index
    %40 = vector.load %arg27[%c0_50, %c0_51] : memref<1x32xf32, #tpu.memory_space<vmem>>, vector<1x32xf32>
    %41 = vector.broadcast %40 : vector<1x32xf32> to vector<11x32xf32>
    %42 = arith.addf %39, %41 : vector<11x32xf32>
    %cst_52 = arith.constant 0.000000e+00 : f32
    %43 = vector.broadcast %cst_52 : f32 to vector<11x32xf32>
    %44 = arith.maximumf %42, %43 : vector<11x32xf32>
    %c0_53 = arith.constant 0 : index
    %c0_54 = arith.constant 0 : index
    %45 = vector.load %arg28[%c0_53, %c0_54] : memref<32x32xf32, #tpu.memory_space<vmem>>, vector<32x32xf32>
    %cst_55 = arith.constant dense<0.000000e+00> : vector<11x32xf32>
    %46 = tpu.matmul %44, %45, %cst_55 {dimension_numbers = #tpu.dot_dimension_numbers<[1], [0], [0], [1], [0, 0, 1, 1], [], []>} : vector<11x32xf32>, vector<32x32xf32>, vector<11x32xf32> -> vector<11x32xf32>
    %c0_56 = arith.constant 0 : index
    %c0_57 = arith.constant 0 : index
    %47 = vector.load %arg29[%c0_56, %c0_57] : memref<1x32xf32, #tpu.memory_space<vmem>>, vector<1x32xf32>
    %48 = vector.broadcast %47 : vector<1x32xf32> to vector<11x32xf32>
    %49 = arith.addf %46, %48 : vector<11x32xf32>
    %cst_58 = arith.constant 0.000000e+00 : f32
    %50 = vector.broadcast %cst_58 : f32 to vector<11x32xf32>
    %51 = arith.maximumf %49, %50 : vector<11x32xf32>
    %c0_59 = arith.constant 0 : index
    %c0_60 = arith.constant 0 : index
    %52 = vector.load %arg30[%c0_59, %c0_60] : memref<32x64xf32, #tpu.memory_space<vmem>>, vector<32x64xf32>
    %cst_61 = arith.constant dense<0.000000e+00> : vector<11x64xf32>
    %53 = tpu.matmul %51, %52, %cst_61 {dimension_numbers = #tpu.dot_dimension_numbers<[1], [0], [0], [1], [0, 0, 1, 1], [], []>} : vector<11x32xf32>, vector<32x64xf32>, vector<11x64xf32> -> vector<11x64xf32>
    %c0_62 = arith.constant 0 : index
    %c0_63 = arith.constant 0 : index
    %54 = vector.load %arg31[%c0_62, %c0_63] : memref<1x64xf32, #tpu.memory_space<vmem>>, vector<1x64xf32>
    %55 = vector.broadcast %54 : vector<1x64xf32> to vector<11x64xf32>
    %56 = arith.addf %53, %55 : vector<11x64xf32>
    %cst_64 = arith.constant 0.000000e+00 : f32
    %57 = vector.broadcast %cst_64 : f32 to vector<11x64xf32>
    %58 = arith.maximumf %56, %57 : vector<11x64xf32>
    %cst_65 = arith.constant dense<0.000000e+00> : vector<11x32xf32>
    %59 = tpu.matmul %4, %1, %cst_65 {dimension_numbers = #tpu.dot_dimension_numbers<[1], [0], [0], [1], [0, 0, 1, 1], [], []>} : vector<11x11xf32>, vector<11x32xf32>, vector<11x32xf32> -> vector<11x32xf32>
    %cst_66 = arith.constant dense<0.000000e+00> : vector<11x32xf32>
    %60 = tpu.matmul %5, %1, %cst_66 {dimension_numbers = #tpu.dot_dimension_numbers<[1], [0], [0], [1], [0, 0, 1, 1], [], []>} : vector<11x11xf32>, vector<11x32xf32>, vector<11x32xf32> -> vector<11x32xf32>
    %61 = tpu.concatenate %59, %60 in 1 : vector<11x32xf32>, vector<11x32xf32> -> vector<11x64xf32>
    %cst_67 = arith.constant dense<0.000000e+00> : vector<11x32xf32>
    %62 = tpu.matmul %6, %23, %cst_67 {dimension_numbers = #tpu.dot_dimension_numbers<[1], [0], [0], [1], [0, 0, 1, 1], [], []>} : vector<11x11xf32>, vector<11x32xf32>, vector<11x32xf32> -> vector<11x32xf32>
    %c0_68 = arith.constant 0 : index
    %c0_69 = arith.constant 0 : index
    %63 = vector.load %arg15[%c0_68, %c0_69] : memref<32x32xf32, #tpu.memory_space<vmem>>, vector<32x32xf32>
    %cst_70 = arith.constant dense<0.000000e+00> : vector<11x32xf32>
    %64 = tpu.matmul %23, %63, %cst_70 {dimension_numbers = #tpu.dot_dimension_numbers<[1], [0], [0], [1], [0, 0, 1, 1], [], []>} : vector<11x32xf32>, vector<32x32xf32>, vector<11x32xf32> -> vector<11x32xf32>
    %c0_71 = arith.constant 0 : index
    %c0_72 = arith.constant 0 : index
    %65 = vector.load %arg17[%c0_71, %c0_72] : memref<32x32xf32, #tpu.memory_space<vmem>>, vector<32x32xf32>
    %cst_73 = arith.constant dense<0.000000e+00> : vector<11x32xf32>
    %66 = tpu.matmul %62, %65, %cst_73 {dimension_numbers = #tpu.dot_dimension_numbers<[1], [0], [0], [1], [0, 0, 1, 1], [], []>} : vector<11x32xf32>, vector<32x32xf32>, vector<11x32xf32> -> vector<11x32xf32>
    %67 = arith.addf %64, %66 : vector<11x32xf32>
    %c0_74 = arith.constant 0 : index
    %c0_75 = arith.constant 0 : index
    %68 = vector.load %arg16[%c0_74, %c0_75] : memref<32x32xf32, #tpu.memory_space<vmem>>, vector<32x32xf32>
    %cst_76 = arith.constant dense<0.000000e+00> : vector<11x32xf32>
    %69 = tpu.matmul %23, %68, %cst_76 {dimension_numbers = #tpu.dot_dimension_numbers<[1], [0], [0], [1], [0, 0, 1, 1], [], []>} : vector<11x32xf32>, vector<32x32xf32>, vector<11x32xf32> -> vector<11x32xf32>
    %c0_77 = arith.constant 0 : index
    %c0_78 = arith.constant 0 : index
    %70 = vector.load %arg18[%c0_77, %c0_78] : memref<32x32xf32, #tpu.memory_space<vmem>>, vector<32x32xf32>
    %cst_79 = arith.constant dense<0.000000e+00> : vector<11x32xf32>
    %71 = tpu.matmul %62, %70, %cst_79 {dimension_numbers = #tpu.dot_dimension_numbers<[1], [0], [0], [1], [0, 0, 1, 1], [], []>} : vector<11x32xf32>, vector<32x32xf32>, vector<11x32xf32> -> vector<11x32xf32>
    %72 = arith.addf %69, %71 : vector<11x32xf32>
    %73 = vector.broadcast %7 : vector<11x1xf32> to vector<11x32xf32>
    %74 = arith.mulf %73, %67 : vector<11x32xf32>
    %75 = vector.broadcast %8 : vector<11x1xf32> to vector<11x32xf32>
    %76 = arith.mulf %75, %72 : vector<11x32xf32>
    %77 = arith.addf %74, %76 : vector<11x32xf32>
    %c0_80 = arith.constant 0 : index
    %c0_81 = arith.constant 0 : index
    %78 = vector.load %arg14[%c0_80, %c0_81] : memref<11x32xf32, #tpu.memory_space<vmem>>, vector<11x32xf32>
    %79 = arith.addf %77, %78 : vector<11x32xf32>
    %cst_82 = arith.constant dense<0.000000e+00> : vector<11x32xf32>
    %80 = tpu.matmul %6, %24, %cst_82 {dimension_numbers = #tpu.dot_dimension_numbers<[1], [0], [0], [1], [0, 0, 1, 1], [], []>} : vector<11x11xf32>, vector<11x32xf32>, vector<11x32xf32> -> vector<11x32xf32>
    %c0_83 = arith.constant 0 : index
    %c0_84 = arith.constant 0 : index
    %81 = vector.load %arg15[%c0_83, %c0_84] : memref<32x32xf32, #tpu.memory_space<vmem>>, vector<32x32xf32>
    %cst_85 = arith.constant dense<0.000000e+00> : vector<11x32xf32>
    %82 = tpu.matmul %24, %81, %cst_85 {dimension_numbers = #tpu.dot_dimension_numbers<[1], [0], [0], [1], [0, 0, 1, 1], [], []>} : vector<11x32xf32>, vector<32x32xf32>, vector<11x32xf32> -> vector<11x32xf32>
    %c0_86 = arith.constant 0 : index
    %c0_87 = arith.constant 0 : index
    %83 = vector.load %arg17[%c0_86, %c0_87] : memref<32x32xf32, #tpu.memory_space<vmem>>, vector<32x32xf32>
    %cst_88 = arith.constant dense<0.000000e+00> : vector<11x32xf32>
    %84 = tpu.matmul %80, %83, %cst_88 {dimension_numbers = #tpu.dot_dimension_numbers<[1], [0], [0], [1], [0, 0, 1, 1], [], []>} : vector<11x32xf32>, vector<32x32xf32>, vector<11x32xf32> -> vector<11x32xf32>
    %85 = arith.addf %82, %84 : vector<11x32xf32>
    %c0_89 = arith.constant 0 : index
    %c0_90 = arith.constant 0 : index
    %86 = vector.load %arg16[%c0_89, %c0_90] : memref<32x32xf32, #tpu.memory_space<vmem>>, vector<32x32xf32>
    %cst_91 = arith.constant dense<0.000000e+00> : vector<11x32xf32>
    %87 = tpu.matmul %24, %86, %cst_91 {dimension_numbers = #tpu.dot_dimension_numbers<[1], [0], [0], [1], [0, 0, 1, 1], [], []>} : vector<11x32xf32>, vector<32x32xf32>, vector<11x32xf32> -> vector<11x32xf32>
    %c0_92 = arith.constant 0 : index
    %c0_93 = arith.constant 0 : index
    %88 = vector.load %arg18[%c0_92, %c0_93] : memref<32x32xf32, #tpu.memory_space<vmem>>, vector<32x32xf32>
    %cst_94 = arith.constant dense<0.000000e+00> : vector<11x32xf32>
    %89 = tpu.matmul %80, %88, %cst_94 {dimension_numbers = #tpu.dot_dimension_numbers<[1], [0], [0], [1], [0, 0, 1, 1], [], []>} : vector<11x32xf32>, vector<32x32xf32>, vector<11x32xf32> -> vector<11x32xf32>
    %90 = arith.addf %87, %89 : vector<11x32xf32>
    %91 = vector.broadcast %7 : vector<11x1xf32> to vector<11x32xf32>
    %92 = arith.mulf %91, %85 : vector<11x32xf32>
    %93 = vector.broadcast %8 : vector<11x1xf32> to vector<11x32xf32>
    %94 = arith.mulf %93, %90 : vector<11x32xf32>
    %95 = arith.addf %92, %94 : vector<11x32xf32>
    %c0_95 = arith.constant 0 : index
    %c0_96 = arith.constant 0 : index
    %96 = vector.load %arg14[%c0_95, %c0_96] : memref<11x32xf32, #tpu.memory_space<vmem>>, vector<11x32xf32>
    %97 = arith.addf %95, %96 : vector<11x32xf32>
    %c0_97 = arith.constant 0 : index
    %c0_98 = arith.constant 0 : index
    %98 = vector.load %arg9[%c0_97, %c0_98] : memref<32x32xf32, #tpu.memory_space<vmem>>, vector<32x32xf32>
    %cst_99 = arith.constant dense<0.000000e+00> : vector<11x32xf32>
    %99 = tpu.matmul %79, %98, %cst_99 {dimension_numbers = #tpu.dot_dimension_numbers<[1], [0], [0], [1], [0, 0, 1, 1], [], []>} : vector<11x32xf32>, vector<32x32xf32>, vector<11x32xf32> -> vector<11x32xf32>
    %c0_100 = arith.constant 0 : index
    %c0_101 = arith.constant 0 : index
    %100 = vector.load %arg10[%c0_100, %c0_101] : memref<32x32xf32, #tpu.memory_space<vmem>>, vector<32x32xf32>
    %cst_102 = arith.constant dense<0.000000e+00> : vector<11x32xf32>
    %101 = tpu.matmul %97, %100, %cst_102 {dimension_numbers = #tpu.dot_dimension_numbers<[1], [0], [0], [1], [0, 0, 1, 1], [], []>} : vector<11x32xf32>, vector<32x32xf32>, vector<11x32xf32> -> vector<11x32xf32>
    %102 = arith.addf %99, %101 : vector<11x32xf32>
    %c0_103 = arith.constant 0 : index
    %c0_104 = arith.constant 0 : index
    %103 = vector.load %arg11[%c0_103, %c0_104] : memref<1x32xf32, #tpu.memory_space<vmem>>, vector<1x32xf32>
    %104 = vector.broadcast %103 : vector<1x32xf32> to vector<11x32xf32>
    %105 = arith.addf %102, %104 : vector<11x32xf32>
    %cst_105 = arith.constant 0.000000e+00 : f32
    %106 = vector.broadcast %cst_105 : f32 to vector<11x32xf32>
    %107 = arith.maximumf %105, %106 : vector<11x32xf32>
    %c0_106 = arith.constant 0 : index
    %c0_107 = arith.constant 0 : index
    %108 = vector.load %arg12[%c0_106, %c0_107] : memref<32x64xf32, #tpu.memory_space<vmem>>, vector<32x64xf32>
    %cst_108 = arith.constant dense<0.000000e+00> : vector<11x64xf32>
    %109 = tpu.matmul %107, %108, %cst_108 {dimension_numbers = #tpu.dot_dimension_numbers<[1], [0], [0], [1], [0, 0, 1, 1], [], []>} : vector<11x32xf32>, vector<32x64xf32>, vector<11x64xf32> -> vector<11x64xf32>
    %c0_109 = arith.constant 0 : index
    %c0_110 = arith.constant 0 : index
    %110 = vector.load %arg13[%c0_109, %c0_110] : memref<1x64xf32, #tpu.memory_space<vmem>>, vector<1x64xf32>
    %111 = vector.broadcast %110 : vector<1x64xf32> to vector<11x64xf32>
    %112 = arith.addf %109, %111 : vector<11x64xf32>
    %cst_111 = arith.constant 0.000000e+00 : f32
    %113 = vector.broadcast %cst_111 : f32 to vector<11x64xf32>
    %114 = arith.maximumf %112, %113 : vector<11x64xf32>
    %115 = vector.broadcast %19 : vector<1x1xf32> to vector<11x64xf32>
    %116 = arith.mulf %115, %61 : vector<11x64xf32>
    %117 = vector.broadcast %22 : vector<1x1xf32> to vector<11x64xf32>
    %118 = arith.mulf %117, %58 : vector<11x64xf32>
    %119 = arith.addf %116, %118 : vector<11x64xf32>
    %120 = arith.addf %119, %114 : vector<11x64xf32>
    %c0_112 = arith.constant 0 : index
    %c0_113 = arith.constant 0 : index
    %121 = vector.load %arg19[%c0_112, %c0_113] : memref<64x32xf32, #tpu.memory_space<vmem>>, vector<64x32xf32>
    %cst_114 = arith.constant dense<0.000000e+00> : vector<11x32xf32>
    %122 = tpu.matmul %120, %121, %cst_114 {dimension_numbers = #tpu.dot_dimension_numbers<[1], [0], [0], [1], [0, 0, 1, 1], [], []>} : vector<11x64xf32>, vector<64x32xf32>, vector<11x32xf32> -> vector<11x32xf32>
    %c0_115 = arith.constant 0 : index
    %c0_116 = arith.constant 0 : index
    %123 = vector.load %arg20[%c0_115, %c0_116] : memref<1x32xf32, #tpu.memory_space<vmem>>, vector<1x32xf32>
    %124 = vector.broadcast %123 : vector<1x32xf32> to vector<11x32xf32>
    %125 = arith.addf %122, %124 : vector<11x32xf32>
    %cst_117 = arith.constant 0.000000e+00 : f32
    %126 = vector.broadcast %cst_117 : f32 to vector<11x32xf32>
    %127 = arith.maximumf %125, %126 : vector<11x32xf32>
    %c0_118 = arith.constant 0 : index
    %c0_119 = arith.constant 0 : index
    %128 = vector.load %arg21[%c0_118, %c0_119] : memref<32x32xf32, #tpu.memory_space<vmem>>, vector<32x32xf32>
    %cst_120 = arith.constant dense<0.000000e+00> : vector<11x32xf32>
    %129 = tpu.matmul %127, %128, %cst_120 {dimension_numbers = #tpu.dot_dimension_numbers<[1], [0], [0], [1], [0, 0, 1, 1], [], []>} : vector<11x32xf32>, vector<32x32xf32>, vector<11x32xf32> -> vector<11x32xf32>
    %c0_121 = arith.constant 0 : index
    %c0_122 = arith.constant 0 : index
    %130 = vector.load %arg22[%c0_121, %c0_122] : memref<1x32xf32, #tpu.memory_space<vmem>>, vector<1x32xf32>
    %131 = vector.broadcast %130 : vector<1x32xf32> to vector<11x32xf32>
    %132 = arith.addf %129, %131 : vector<11x32xf32>
    %cst_123 = arith.constant 0.000000e+00 : f32
    %133 = vector.broadcast %cst_123 : f32 to vector<11x32xf32>
    %134 = arith.maximumf %132, %133 : vector<11x32xf32>
    %c0_124 = arith.constant 0 : index
    %c0_125 = arith.constant 0 : index
    %135 = vector.load %arg32[%c0_124, %c0_125] : memref<64x32xf32, #tpu.memory_space<vmem>>, vector<64x32xf32>
    %cst_126 = arith.constant dense<0.000000e+00> : vector<11x32xf32>
    %136 = tpu.matmul %58, %135, %cst_126 {dimension_numbers = #tpu.dot_dimension_numbers<[1], [0], [0], [1], [0, 0, 1, 1], [], []>} : vector<11x64xf32>, vector<64x32xf32>, vector<11x32xf32> -> vector<11x32xf32>
    %c0_127 = arith.constant 0 : index
    %c0_128 = arith.constant 0 : index
    %137 = vector.load %arg33[%c0_127, %c0_128] : memref<32x32xf32, #tpu.memory_space<vmem>>, vector<32x32xf32>
    %cst_129 = arith.constant dense<0.000000e+00> : vector<11x32xf32>
    %138 = tpu.matmul %1, %137, %cst_129 {dimension_numbers = #tpu.dot_dimension_numbers<[1], [0], [0], [1], [0, 0, 1, 1], [], []>} : vector<11x32xf32>, vector<32x32xf32>, vector<11x32xf32> -> vector<11x32xf32>
    %139 = arith.addf %136, %138 : vector<11x32xf32>
    %c0_130 = arith.constant 0 : index
    %c0_131 = arith.constant 0 : index
    %140 = vector.load %arg34[%c0_130, %c0_131] : memref<1x32xf32, #tpu.memory_space<vmem>>, vector<1x32xf32>
    %141 = vector.broadcast %140 : vector<1x32xf32> to vector<11x32xf32>
    %142 = arith.addf %139, %141 : vector<11x32xf32>
    %cst_132 = arith.constant 0.000000e+00 : f32
    %143 = vector.broadcast %cst_132 : f32 to vector<11x32xf32>
    %144 = arith.maximumf %142, %143 : vector<11x32xf32>
    %c0_133 = arith.constant 0 : index
    %c0_134 = arith.constant 0 : index
    %145 = vector.load %arg35[%c0_133, %c0_134] : memref<32x32xf32, #tpu.memory_space<vmem>>, vector<32x32xf32>
    %cst_135 = arith.constant dense<0.000000e+00> : vector<11x32xf32>
    %146 = tpu.matmul %144, %145, %cst_135 {dimension_numbers = #tpu.dot_dimension_numbers<[1], [0], [0], [1], [0, 0, 1, 1], [], []>} : vector<11x32xf32>, vector<32x32xf32>, vector<11x32xf32> -> vector<11x32xf32>
    %c0_136 = arith.constant 0 : index
    %c0_137 = arith.constant 0 : index
    %147 = vector.load %arg36[%c0_136, %c0_137] : memref<1x32xf32, #tpu.memory_space<vmem>>, vector<1x32xf32>
    %148 = vector.broadcast %147 : vector<1x32xf32> to vector<11x32xf32>
    %149 = arith.addf %146, %148 : vector<11x32xf32>
    %cst_138 = arith.constant 0.000000e+00 : f32
    %150 = vector.broadcast %cst_138 : f32 to vector<11x32xf32>
    %151 = arith.maximumf %149, %150 : vector<11x32xf32>
    %cst_139 = arith.constant dense<0.000000e+00> : vector<11x32xf32>
    %152 = tpu.matmul %4, %151, %cst_139 {dimension_numbers = #tpu.dot_dimension_numbers<[1], [0], [0], [1], [0, 0, 1, 1], [], []>} : vector<11x11xf32>, vector<11x32xf32>, vector<11x32xf32> -> vector<11x32xf32>
    %cst_140 = arith.constant dense<0.000000e+00> : vector<11x32xf32>
    %153 = tpu.matmul %5, %151, %cst_140 {dimension_numbers = #tpu.dot_dimension_numbers<[1], [0], [0], [1], [0, 0, 1, 1], [], []>} : vector<11x11xf32>, vector<11x32xf32>, vector<11x32xf32> -> vector<11x32xf32>
    %154 = tpu.concatenate %152, %153 in 1 : vector<11x32xf32>, vector<11x32xf32> -> vector<11x64xf32>
    %cst_141 = arith.constant dense<0.000000e+00> : vector<11x64xf32>
    %155 = tpu.matmul %6, %154, %cst_141 {dimension_numbers = #tpu.dot_dimension_numbers<[1], [0], [0], [1], [0, 0, 1, 1], [], []>} : vector<11x11xf32>, vector<11x64xf32>, vector<11x64xf32> -> vector<11x64xf32>
    %c0_142 = arith.constant 0 : index
    %c0_143 = arith.constant 0 : index
    %156 = vector.load %arg58[%c0_142, %c0_143] : memref<64x32xf32, #tpu.memory_space<vmem>>, vector<64x32xf32>
    %cst_144 = arith.constant dense<0.000000e+00> : vector<11x32xf32>
    %157 = tpu.matmul %154, %156, %cst_144 {dimension_numbers = #tpu.dot_dimension_numbers<[1], [0], [0], [1], [0, 0, 1, 1], [], []>} : vector<11x64xf32>, vector<64x32xf32>, vector<11x32xf32> -> vector<11x32xf32>
    %c0_145 = arith.constant 0 : index
    %c0_146 = arith.constant 0 : index
    %158 = vector.load %arg60[%c0_145, %c0_146] : memref<64x32xf32, #tpu.memory_space<vmem>>, vector<64x32xf32>
    %cst_147 = arith.constant dense<0.000000e+00> : vector<11x32xf32>
    %159 = tpu.matmul %155, %158, %cst_147 {dimension_numbers = #tpu.dot_dimension_numbers<[1], [0], [0], [1], [0, 0, 1, 1], [], []>} : vector<11x64xf32>, vector<64x32xf32>, vector<11x32xf32> -> vector<11x32xf32>
    %160 = arith.addf %157, %159 : vector<11x32xf32>
    %c0_148 = arith.constant 0 : index
    %c0_149 = arith.constant 0 : index
    %161 = vector.load %arg59[%c0_148, %c0_149] : memref<64x32xf32, #tpu.memory_space<vmem>>, vector<64x32xf32>
    %cst_150 = arith.constant dense<0.000000e+00> : vector<11x32xf32>
    %162 = tpu.matmul %154, %161, %cst_150 {dimension_numbers = #tpu.dot_dimension_numbers<[1], [0], [0], [1], [0, 0, 1, 1], [], []>} : vector<11x64xf32>, vector<64x32xf32>, vector<11x32xf32> -> vector<11x32xf32>
    %c0_151 = arith.constant 0 : index
    %c0_152 = arith.constant 0 : index
    %163 = vector.load %arg61[%c0_151, %c0_152] : memref<64x32xf32, #tpu.memory_space<vmem>>, vector<64x32xf32>
    %cst_153 = arith.constant dense<0.000000e+00> : vector<11x32xf32>
    %164 = tpu.matmul %155, %163, %cst_153 {dimension_numbers = #tpu.dot_dimension_numbers<[1], [0], [0], [1], [0, 0, 1, 1], [], []>} : vector<11x64xf32>, vector<64x32xf32>, vector<11x32xf32> -> vector<11x32xf32>
    %165 = arith.addf %162, %164 : vector<11x32xf32>
    %166 = vector.broadcast %7 : vector<11x1xf32> to vector<11x32xf32>
    %167 = arith.mulf %166, %160 : vector<11x32xf32>
    %168 = vector.broadcast %8 : vector<11x1xf32> to vector<11x32xf32>
    %169 = arith.mulf %168, %165 : vector<11x32xf32>
    %170 = arith.addf %167, %169 : vector<11x32xf32>
    %c0_154 = arith.constant 0 : index
    %c0_155 = arith.constant 0 : index
    %171 = vector.load %arg57[%c0_154, %c0_155] : memref<11x32xf32, #tpu.memory_space<vmem>>, vector<11x32xf32>
    %172 = arith.addf %170, %171 : vector<11x32xf32>
    %cst_156 = arith.constant dense<0.000000e+00> : vector<12x32xf32>
    %173 = tpu.matmul %9, %172, %cst_156 {dimension_numbers = #tpu.dot_dimension_numbers<[1], [0], [0], [1], [0, 0, 1, 1], [], []>} : vector<12x11xf32>, vector<11x32xf32>, vector<12x32xf32> -> vector<12x32xf32>
    %cst_157 = arith.constant dense<0.000000e+00> : vector<12x32xf32>
    %174 = tpu.matmul %10, %172, %cst_157 {dimension_numbers = #tpu.dot_dimension_numbers<[1], [0], [0], [1], [0, 0, 1, 1], [], []>} : vector<12x11xf32>, vector<11x32xf32>, vector<12x32xf32> -> vector<12x32xf32>
    %cst_158 = arith.constant dense<0.000000e+00> : vector<12x64xf32>
    %175 = tpu.matmul %9, %154, %cst_158 {dimension_numbers = #tpu.dot_dimension_numbers<[1], [0], [0], [1], [0, 0, 1, 1], [], []>} : vector<12x11xf32>, vector<11x64xf32>, vector<12x64xf32> -> vector<12x64xf32>
    %cst_159 = arith.constant dense<0.000000e+00> : vector<12x64xf32>
    %176 = tpu.matmul %10, %154, %cst_159 {dimension_numbers = #tpu.dot_dimension_numbers<[1], [0], [0], [1], [0, 0, 1, 1], [], []>} : vector<12x11xf32>, vector<11x64xf32>, vector<12x64xf32> -> vector<12x64xf32>
    %c0_160 = arith.constant 0 : index
    %c0_161 = arith.constant 0 : index
    %177 = vector.load %arg41[%c0_160, %c0_161] : memref<64x32xf32, #tpu.memory_space<vmem>>, vector<64x32xf32>
    %cst_162 = arith.constant dense<0.000000e+00> : vector<12x32xf32>
    %178 = tpu.matmul %175, %177, %cst_162 {dimension_numbers = #tpu.dot_dimension_numbers<[1], [0], [0], [1], [0, 0, 1, 1], [], []>} : vector<12x64xf32>, vector<64x32xf32>, vector<12x32xf32> -> vector<12x32xf32>
    %c0_163 = arith.constant 0 : index
    %c0_164 = arith.constant 0 : index
    %179 = vector.load %arg42[%c0_163, %c0_164] : memref<64x32xf32, #tpu.memory_space<vmem>>, vector<64x32xf32>
    %cst_165 = arith.constant dense<0.000000e+00> : vector<12x32xf32>
    %180 = tpu.matmul %176, %179, %cst_165 {dimension_numbers = #tpu.dot_dimension_numbers<[1], [0], [0], [1], [0, 0, 1, 1], [], []>} : vector<12x64xf32>, vector<64x32xf32>, vector<12x32xf32> -> vector<12x32xf32>
    %181 = arith.addf %178, %180 : vector<12x32xf32>
    %c0_166 = arith.constant 0 : index
    %c0_167 = arith.constant 0 : index
    %182 = vector.load %arg43[%c0_166, %c0_167] : memref<1x32xf32, #tpu.memory_space<vmem>>, vector<1x32xf32>
    %183 = vector.broadcast %182 : vector<1x32xf32> to vector<12x32xf32>
    %184 = arith.addf %181, %183 : vector<12x32xf32>
    %cst_168 = arith.constant 0.000000e+00 : f32
    %185 = vector.broadcast %cst_168 : f32 to vector<12x32xf32>
    %186 = arith.maximumf %184, %185 : vector<12x32xf32>
    %c0_169 = arith.constant 0 : index
    %c0_170 = arith.constant 0 : index
    %187 = vector.load %arg44[%c0_169, %c0_170] : memref<32x32xf32, #tpu.memory_space<vmem>>, vector<32x32xf32>
    %cst_171 = arith.constant dense<0.000000e+00> : vector<12x32xf32>
    %188 = tpu.matmul %186, %187, %cst_171 {dimension_numbers = #tpu.dot_dimension_numbers<[1], [0], [0], [1], [0, 0, 1, 1], [], []>} : vector<12x32xf32>, vector<32x32xf32>, vector<12x32xf32> -> vector<12x32xf32>
    %c0_172 = arith.constant 0 : index
    %c0_173 = arith.constant 0 : index
    %189 = vector.load %arg45[%c0_172, %c0_173] : memref<1x32xf32, #tpu.memory_space<vmem>>, vector<1x32xf32>
    %190 = vector.broadcast %189 : vector<1x32xf32> to vector<12x32xf32>
    %191 = arith.addf %188, %190 : vector<12x32xf32>
    %cst_174 = arith.constant 0.000000e+00 : f32
    %192 = vector.broadcast %cst_174 : f32 to vector<12x32xf32>
    %193 = arith.maximumf %191, %192 : vector<12x32xf32>
    %c0_175 = arith.constant 0 : index
    %c0_176 = arith.constant 0 : index
    %194 = vector.load %arg46[%c0_175, %c0_176] : memref<32x32xf32, #tpu.memory_space<vmem>>, vector<32x32xf32>
    %cst_177 = arith.constant dense<0.000000e+00> : vector<12x32xf32>
    %195 = tpu.matmul %193, %194, %cst_177 {dimension_numbers = #tpu.dot_dimension_numbers<[1], [0], [0], [1], [0, 0, 1, 1], [], []>} : vector<12x32xf32>, vector<32x32xf32>, vector<12x32xf32> -> vector<12x32xf32>
    %c0_178 = arith.constant 0 : index
    %c0_179 = arith.constant 0 : index
    %196 = vector.load %arg47[%c0_178, %c0_179] : memref<1x32xf32, #tpu.memory_space<vmem>>, vector<1x32xf32>
    %197 = vector.broadcast %196 : vector<1x32xf32> to vector<12x32xf32>
    %198 = arith.addf %195, %197 : vector<12x32xf32>
    %cst_180 = arith.constant 0.000000e+00 : f32
    %199 = vector.broadcast %cst_180 : f32 to vector<12x32xf32>
    %200 = arith.maximumf %198, %199 : vector<12x32xf32>
    %c0_181 = arith.constant 0 : index
    %c0_182 = arith.constant 0 : index
    %201 = vector.load %arg48[%c0_181, %c0_182] : memref<32x32xf32, #tpu.memory_space<vmem>>, vector<32x32xf32>
    %cst_183 = arith.constant dense<0.000000e+00> : vector<12x32xf32>
    %202 = tpu.matmul %173, %201, %cst_183 {dimension_numbers = #tpu.dot_dimension_numbers<[1], [0], [0], [1], [0, 0, 1, 1], [], []>} : vector<12x32xf32>, vector<32x32xf32>, vector<12x32xf32> -> vector<12x32xf32>
    %c0_184 = arith.constant 0 : index
    %c0_185 = arith.constant 0 : index
    %203 = vector.load %arg49[%c0_184, %c0_185] : memref<32x32xf32, #tpu.memory_space<vmem>>, vector<32x32xf32>
    %cst_186 = arith.constant dense<0.000000e+00> : vector<12x32xf32>
    %204 = tpu.matmul %174, %203, %cst_186 {dimension_numbers = #tpu.dot_dimension_numbers<[1], [0], [0], [1], [0, 0, 1, 1], [], []>} : vector<12x32xf32>, vector<32x32xf32>, vector<12x32xf32> -> vector<12x32xf32>
    %205 = arith.addf %202, %204 : vector<12x32xf32>
    %c0_187 = arith.constant 0 : index
    %c0_188 = arith.constant 0 : index
    %206 = vector.load %arg50[%c0_187, %c0_188] : memref<1x32xf32, #tpu.memory_space<vmem>>, vector<1x32xf32>
    %207 = vector.broadcast %206 : vector<1x32xf32> to vector<12x32xf32>
    %208 = arith.addf %205, %207 : vector<12x32xf32>
    %cst_189 = arith.constant 0.000000e+00 : f32
    %209 = vector.broadcast %cst_189 : f32 to vector<12x32xf32>
    %210 = arith.maximumf %208, %209 : vector<12x32xf32>
    %c0_190 = arith.constant 0 : index
    %c0_191 = arith.constant 0 : index
    %211 = vector.load %arg51[%c0_190, %c0_191] : memref<32x32xf32, #tpu.memory_space<vmem>>, vector<32x32xf32>
    %cst_192 = arith.constant dense<0.000000e+00> : vector<12x32xf32>
    %212 = tpu.matmul %210, %211, %cst_192 {dimension_numbers = #tpu.dot_dimension_numbers<[1], [0], [0], [1], [0, 0, 1, 1], [], []>} : vector<12x32xf32>, vector<32x32xf32>, vector<12x32xf32> -> vector<12x32xf32>
    %c0_193 = arith.constant 0 : index
    %c0_194 = arith.constant 0 : index
    %213 = vector.load %arg52[%c0_193, %c0_194] : memref<1x32xf32, #tpu.memory_space<vmem>>, vector<1x32xf32>
    %214 = vector.broadcast %213 : vector<1x32xf32> to vector<12x32xf32>
    %215 = arith.addf %212, %214 : vector<12x32xf32>
    %cst_195 = arith.constant 0.000000e+00 : f32
    %216 = vector.broadcast %cst_195 : f32 to vector<12x32xf32>
    %217 = arith.maximumf %215, %216 : vector<12x32xf32>
    %218 = vector.broadcast %13 : vector<1x1xf32> to vector<12x32xf32>
    %219 = arith.mulf %218, %0 : vector<12x32xf32>
    %220 = vector.broadcast %16 : vector<1x1xf32> to vector<12x32xf32>
    %221 = arith.mulf %220, %200 : vector<12x32xf32>
    %222 = arith.addf %219, %221 : vector<12x32xf32>
    %223 = arith.addf %222, %217 : vector<12x32xf32>
    %c0_196 = arith.constant 0 : index
    %c0_197 = arith.constant 0 : index
    %224 = vector.load %arg37[%c0_196, %c0_197] : memref<32x32xf32, #tpu.memory_space<vmem>>, vector<32x32xf32>
    %cst_198 = arith.constant dense<0.000000e+00> : vector<12x32xf32>
    %225 = tpu.matmul %223, %224, %cst_198 {dimension_numbers = #tpu.dot_dimension_numbers<[1], [0], [0], [1], [0, 0, 1, 1], [], []>} : vector<12x32xf32>, vector<32x32xf32>, vector<12x32xf32> -> vector<12x32xf32>
    %c0_199 = arith.constant 0 : index
    %c0_200 = arith.constant 0 : index
    %226 = vector.load %arg38[%c0_199, %c0_200] : memref<1x32xf32, #tpu.memory_space<vmem>>, vector<1x32xf32>
    %227 = vector.broadcast %226 : vector<1x32xf32> to vector<12x32xf32>
    %228 = arith.addf %225, %227 : vector<12x32xf32>
    %cst_201 = arith.constant 0.000000e+00 : f32
    %229 = vector.broadcast %cst_201 : f32 to vector<12x32xf32>
    %230 = arith.maximumf %228, %229 : vector<12x32xf32>
    %c0_202 = arith.constant 0 : index
    %c0_203 = arith.constant 0 : index
    %231 = vector.load %arg39[%c0_202, %c0_203] : memref<32x32xf32, #tpu.memory_space<vmem>>, vector<32x32xf32>
    %cst_204 = arith.constant dense<0.000000e+00> : vector<12x32xf32>
    %232 = tpu.matmul %230, %231, %cst_204 {dimension_numbers = #tpu.dot_dimension_numbers<[1], [0], [0], [1], [0, 0, 1, 1], [], []>} : vector<12x32xf32>, vector<32x32xf32>, vector<12x32xf32> -> vector<12x32xf32>
    %c0_205 = arith.constant 0 : index
    %c0_206 = arith.constant 0 : index
    %233 = vector.load %arg40[%c0_205, %c0_206] : memref<1x32xf32, #tpu.memory_space<vmem>>, vector<1x32xf32>
    %234 = vector.broadcast %233 : vector<1x32xf32> to vector<12x32xf32>
    %235 = arith.addf %232, %234 : vector<12x32xf32>
    %cst_207 = arith.constant 0.000000e+00 : f32
    %236 = vector.broadcast %cst_207 : f32 to vector<12x32xf32>
    %237 = arith.maximumf %235, %236 : vector<12x32xf32>
    %c0_208 = arith.constant 0 : index
    %c0_209 = arith.constant 0 : index
    %238 = vector.load %arg64[%c0_208, %c0_209] : memref<12x32xf32, #tpu.memory_space<vmem>>, vector<12x32xf32>
    tpu.vector_store %arg64[%c0_208, %c0_209], %237 {strides = array<i32>} : memref<12x32xf32, #tpu.memory_space<vmem>>, vector<12x32xf32>,
    %c0_210 = arith.constant 0 : index
    %c0_211 = arith.constant 0 : index
    %239 = vector.load %arg65[%c0_210, %c0_211] : memref<11x32xf32, #tpu.memory_space<vmem>>, vector<11x32xf32>
    tpu.vector_store %arg65[%c0_210, %c0_211], %134 {strides = array<i32>} : memref<11x32xf32, #tpu.memory_space<vmem>>, vector<11x32xf32>,
    return
  }
}

</mosaic_0001>

<llo_original>
// kernel: tpu_custom_call.1
$region0: #{tpu_custom_call.1}
  #allocation0 [shape = 'u32[]', space=smem, size = 0x4, offset = 0x4, fixed_abs, tag = 'smem constant byte address 0x4 - core index']
  #allocation1 [shape = 'u32[144,128]{1,0:T(1,128)}', space=vmem, size = 0x12000, scoped, tag = 'internal scratch']
  #allocation2 [shape = 'f32[1,1]{1,0:T(1,128)S(1)}', space=vmem, size = 0x200, scoped, tag = 'scoped memory for tpu_custom_call.1']
  #allocation3 [shape = 'f32[1,1]{1,0:T(1,128)S(1)}', space=vmem, size = 0x200, scoped, tag = 'scoped memory for tpu_custom_call.1']
  #allocation4 [shape = 'f32[1,1]{1,0:T(1,128)S(1)}', space=vmem, size = 0x200, scoped, tag = 'scoped memory for tpu_custom_call.1']
  #allocation5 [shape = 'f32[1,1]{1,0:T(1,128)S(1)}', space=vmem, size = 0x200, scoped, tag = 'scoped memory for tpu_custom_call.1']
  %s0 = inlined_call_operand.smem [shape: u32[66], index: -1, kind: input, shape index: {}]
  %s1 = sld [smem:[%s0]]
  %s2 = scalar_lea.smem %s0, 1
  %s3 = sld [smem:[%s2]]
  %s4 = scalar_lea.smem %s0, 2
  %s5 = sld [smem:[%s4]]
  %s6 = scalar_lea.smem %s0, 3
  %s7 = sld [smem:[%s6]]
  %s8 = scalar_lea.smem %s0, 4
  %s9 = sld [smem:[%s8]]
  %s10 = scalar_lea.smem %s0, 5
  %s11 = sld [smem:[%s10]]
  %s12 = scalar_lea.smem %s0, 6
  %s13 = sld [smem:[%s12]]
  %s14 = scalar_lea.smem %s0, 7
  %s15 = sld [smem:[%s14]]
  %s16 = scalar_lea.smem %s0, 8
  %s17 = sld [smem:[%s16]]
  %s18 = scalar_lea.smem %s0, 9
  %s19 = sld [smem:[%s18]]
  %s20 = scalar_lea.smem %s0, 10
  %s21 = sld [smem:[%s20]]
  %s22 = scalar_lea.smem %s0, 11
  %s23 = sld [smem:[%s22]]
  %s24 = scalar_lea.smem %s0, 12
  %s25 = sld [smem:[%s24]]
  %s26 = scalar_lea.smem %s0, 13
  %s27 = sld [smem:[%s26]]
  %s28 = scalar_lea.smem %s0, 14
  %s29 = sld [smem:[%s28]]
  %s30 = scalar_lea.smem %s0, 15
  %s31 = sld [smem:[%s30]]
  %s32 = scalar_lea.smem %s0, 16
  %s33 = sld [smem:[%s32]]
  %s34 = scalar_lea.smem %s0, 17
  %s35 = sld [smem:[%s34]]
  %s36 = scalar_lea.smem %s0, 18
  %s37 = sld [smem:[%s36]]
  %s38 = scalar_lea.smem %s0, 19
  %s39 = sld [smem:[%s38]]
  %s40 = scalar_lea.smem %s0, 20
  %s41 = sld [smem:[%s40]]
  %s42 = scalar_lea.smem %s0, 21
  %s43 = sld [smem:[%s42]]
  %s44 = scalar_lea.smem %s0, 22
  %s45 = sld [smem:[%s44]]
  %s46 = scalar_lea.smem %s0, 23
  %s47 = sld [smem:[%s46]]
  %s48 = scalar_lea.smem %s0, 24
  %s49 = sld [smem:[%s48]]
  %s50 = scalar_lea.smem %s0, 25
  %s51 = sld [smem:[%s50]]
  %s52 = scalar_lea.smem %s0, 26
  %s53 = sld [smem:[%s52]]
  %s54 = scalar_lea.smem %s0, 27
  %s55 = sld [smem:[%s54]]
  %s56 = scalar_lea.smem %s0, 28
  %s57 = sld [smem:[%s56]]
  %s58 = scalar_lea.smem %s0, 29
  %s59 = sld [smem:[%s58]]
  %s60 = scalar_lea.smem %s0, 30
  %s61 = sld [smem:[%s60]]
  %s62 = scalar_lea.smem %s0, 31
  %s63 = sld [smem:[%s62]]
  %s64 = scalar_lea.smem %s0, 32
  %s65 = sld [smem:[%s64]]
  %s66 = scalar_lea.smem %s0, 33
  %s67 = sld [smem:[%s66]]
  %s68 = scalar_lea.smem %s0, 34
  %s69 = sld [smem:[%s68]]
  %s70 = scalar_lea.smem %s0, 35
  %s71 = sld [smem:[%s70]]
  %s72 = scalar_lea.smem %s0, 36
  %s73 = sld [smem:[%s72]]
  %s74 = scalar_lea.smem %s0, 37
  %s75 = sld [smem:[%s74]]
  %s76 = scalar_lea.smem %s0, 38
  %s77 = sld [smem:[%s76]]
  %s78 = scalar_lea.smem %s0, 39
  %s79 = sld [smem:[%s78]]
  %s80 = scalar_lea.smem %s0, 40
  %s81 = sld [smem:[%s80]]
  %s82 = scalar_lea.smem %s0, 41
  %s83 = sld [smem:[%s82]]
  %s84 = scalar_lea.smem %s0, 42
  %s85 = sld [smem:[%s84]]
  %s86 = scalar_lea.smem %s0, 43
  %s87 = sld [smem:[%s86]]
  %s88 = scalar_lea.smem %s0, 44
  %s89 = sld [smem:[%s88]]
  %s90 = scalar_lea.smem %s0, 45
  %s91 = sld [smem:[%s90]]
  %s92 = scalar_lea.smem %s0, 46
  %s93 = sld [smem:[%s92]]
  %s94 = scalar_lea.smem %s0, 47
  %s95 = sld [smem:[%s94]]
  %s96 = scalar_lea.smem %s0, 48
  %s97 = sld [smem:[%s96]]
  %s98 = scalar_lea.smem %s0, 49
  %s99 = sld [smem:[%s98]]
  %s100 = scalar_lea.smem %s0, 50
  %s101 = sld [smem:[%s100]]
  %s102 = scalar_lea.smem %s0, 51
  %s103 = sld [smem:[%s102]]
  %s104 = scalar_lea.smem %s0, 52
  %s105 = sld [smem:[%s104]]
  %s106 = scalar_lea.smem %s0, 53
  %s107 = sld [smem:[%s106]]
  %s108 = scalar_lea.smem %s0, 54
  %s109 = sld [smem:[%s108]]
  %s110 = scalar_lea.smem %s0, 55
  %s111 = sld [smem:[%s110]]
  %s112 = scalar_lea.smem %s0, 56
  %s113 = sld [smem:[%s112]]
  %s114 = scalar_lea.smem %s0, 57
  %s115 = sld [smem:[%s114]]
  %s116 = scalar_lea.smem %s0, 58
  %s117 = sld [smem:[%s116]]
  %s118 = scalar_lea.smem %s0, 59
  %s119 = sld [smem:[%s118]]
  %s120 = scalar_lea.smem %s0, 60
  %s121 = sld [smem:[%s120]]
  %s122 = scalar_lea.smem %s0, 61
  %s123 = sld [smem:[%s122]]
  %s124 = scalar_lea.smem %s0, 62
  %s125 = sld [smem:[%s124]]
  %s126 = scalar_lea.smem %s0, 63
  %s127 = sld [smem:[%s126]]
  %s128 = scalar_lea.smem %s0, 64
  %s129 = sld [smem:[%s128]]
  %s130 = scalar_lea.smem %s0, 65
  %s131 = sld [smem:[%s130]]
  %132 = xla_tuple %s129, %s131
  %s133 = sld [smem:[#allocation0]]
  $region370: #{tpu_custom_call.1} parent=0
    _
  %s135 = ssub.s32 1, %s133
  %s136 = scalar_select 0, %s135, %s133
  %v137 = vstv %s107
  %138 = vst [vmem:[#allocation2] sm:$0x1] %v137
  %v139 = vstv %s109
  %140 = vst [vmem:[#allocation3] sm:$0x1] %v139
  %v141 = vstv %s111
  %142 = vst [vmem:[#allocation4] sm:$0x1] %v141
  %v143 = vstv %s113
  %144 = vst [vmem:[#allocation5] sm:$0x1] %v143
  $region1: #{tpu_custom_call.1} parent=0
    #allocation6 [shape = 'u8[8192]{0}', space=vmem, size = 0x2000, scoped, tag = 'input window, operand 0, single buffered']
    #allocation7 [shape = 's32[1]{0}', space=sflag, size = 0x4, scoped, tag = 'scoped memory for tpu_custom_call.1']
    #allocation8 [shape = 's32[1]{0}', space=sflag, size = 0x4, scoped, tag = 'scoped memory for tpu_custom_call.1']
    #allocation9 [shape = 'u8[8192]{0}', space=vmem, size = 0x2000, scoped, tag = 'input window, operand 1, single buffered']
    #allocation10 [shape = 's32[1]{0}', space=sflag, size = 0x4, scoped, tag = 'scoped memory for tpu_custom_call.1']
    #allocation11 [shape = 'u8[8192]{0}', space=vmem, size = 0x2000, scoped, tag = 'input window, operand 2, single buffered']
    #allocation12 [shape = 'u8[8192]{0}', space=vmem, size = 0x2000, scoped, tag = 'input window, operand 3, single buffered']
    #allocation13 [shape = 's32[1]{0}', space=sflag, size = 0x4, scoped, tag = 'scoped memory for tpu_custom_call.1']
    #allocation14 [shape = 'u8[8192]{0}', space=vmem, size = 0x2000, scoped, tag = 'input window, operand 4, single buffered']
    #allocation15 [shape = 'u8[8192]{0}', space=vmem, size = 0x2000, scoped, tag = 'input window, operand 5, single buffered']
    #allocation16 [shape = 's32[1]{0}', space=sflag, size = 0x4, scoped, tag = 'scoped memory for tpu_custom_call.1']
    #allocation17 [shape = 'u8[8192]{0}', space=vmem, size = 0x2000, scoped, tag = 'input window, operand 6, single buffered']
    #allocation18 [shape = 'u8[512]{0}', space=vmem, size = 0x400, scoped, tag = 'input window, operand 11, single buffered']
    #allocation19 [shape = 's32[1]{0}', space=sflag, size = 0x4, scoped, tag = 'scoped memory for tpu_custom_call.1']
    #allocation20 [shape = 'u8[512]{0}', space=vmem, size = 0x400, scoped, tag = 'input window, operand 13, single buffered']
    #allocation21 [shape = 'u8[8192]{0}', space=vmem, size = 0x2000, scoped, tag = 'input window, operand 14, single buffered']
    #allocation22 [shape = 's32[1]{0}', space=sflag, size = 0x4, scoped, tag = 'scoped memory for tpu_custom_call.1']
    #allocation23 [shape = 'u8[512]{0}', space=vmem, size = 0x400, scoped, tag = 'input window, operand 20, single buffered']
    #allocation24 [shape = 'u8[512]{0}', space=vmem, size = 0x400, scoped, tag = 'input window, operand 22, single buffered']
    #allocation25 [shape = 's32[1]{0}', space=sflag, size = 0x4, scoped, tag = 'scoped memory for tpu_custom_call.1']
    #allocation26 [shape = 'u8[512]{0}', space=vmem, size = 0x400, scoped, tag = 'input window, operand 27, single buffered']
    #allocation27 [shape = 'u8[512]{0}', space=vmem, size = 0x400, scoped, tag = 'input window, operand 29, single buffered']
    #allocation28 [shape = 's32[1]{0}', space=sflag, size = 0x4, scoped, tag = 'scoped memory for tpu_custom_call.1']
    #allocation29 [shape = 'u8[512]{0}', space=vmem, size = 0x400, scoped, tag = 'input window, operand 31, single buffered']
    #allocation30 [shape = 'u8[512]{0}', space=vmem, size = 0x400, scoped, tag = 'input window, operand 34, single buffered']
    #allocation31 [shape = 's32[1]{0}', space=sflag, size = 0x4, scoped, tag = 'scoped memory for tpu_custom_call.1']
    #allocation32 [shape = 'u8[512]{0}', space=vmem, size = 0x400, scoped, tag = 'input window, operand 36, single buffered']
    #allocation33 [shape = 'u8[512]{0}', space=vmem, size = 0x400, scoped, tag = 'input window, operand 38, single buffered']
    #allocation34 [shape = 's32[1]{0}', space=sflag, size = 0x4, scoped, tag = 'scoped memory for tpu_custom_call.1']
    #allocation35 [shape = 'u8[512]{0}', space=vmem, size = 0x400, scoped, tag = 'input window, operand 40, single buffered']
    #allocation36 [shape = 'u8[512]{0}', space=vmem, size = 0x400, scoped, tag = 'input window, operand 43, single buffered']
    #allocation37 [shape = 's32[1]{0}', space=sflag, size = 0x4, scoped, tag = 'scoped memory for tpu_custom_call.1']
    #allocation38 [shape = 'u8[512]{0}', space=vmem, size = 0x400, scoped, tag = 'input window, operand 45, single buffered']
    #allocation39 [shape = 'u8[512]{0}', space=vmem, size = 0x400, scoped, tag = 'input window, operand 47, single buffered']
    #allocation40 [shape = 's32[1]{0}', space=sflag, size = 0x4, scoped, tag = 'scoped memory for tpu_custom_call.1']
    #allocation41 [shape = 'u8[512]{0}', space=vmem, size = 0x400, scoped, tag = 'input window, operand 50, single buffered']
    #allocation42 [shape = 'u8[512]{0}', space=vmem, size = 0x400, scoped, tag = 'input window, operand 52, single buffered']
    #allocation43 [shape = 's32[1]{0}', space=sflag, size = 0x4, scoped, tag = 'scoped memory for tpu_custom_call.1']
    #allocation44 [shape = 'u8[8192]{0}', space=vmem, size = 0x2000, scoped, tag = 'output window, operand 0, single buffered']
    #allocation45 [shape = 'u8[8192]{0}', space=vmem, size = 0x2000, scoped, tag = 'output window, operand 1, single buffered']
    #allocation46 [shape = 's32[1]{0}', space=sflag, size = 0x4, scoped, tag = 'scoped memory for tpu_custom_call.1']
    %145 = vsyncpa [#allocation7], 0
    %146 = vsyncpa [#allocation10], 0
    %147 = vsyncpa [#allocation13], 0
    %148 = vsyncpa [#allocation16], 0
    %149 = vsyncpa [#allocation19], 0
    %150 = vsyncpa [#allocation22], 0
    %151 = vsyncpa [#allocation25], 0
    %152 = vsyncpa [#allocation28], 0
    %153 = vsyncpa [#allocation31], 0
    %154 = vsyncpa [#allocation34], 0
    %155 = vsyncpa [#allocation37], 0
    %156 = vsyncpa [#allocation40], 0
    %157 = vsyncpa [#allocation43], 0
    %158 = vsyncpa [#allocation8], 0
    %159 = vsyncpa [#allocation46], 0
    // Predicated region
    $region2: #{tpu_custom_call.1} parent=1 // pred_check
      _
    $region3: #{tpu_custom_call.1} parent=1 // pred_check_branch
      %161 = sbr.rel (0) target = $region5
    $region4: #{tpu_custom_call.1} parent=1 // pred_region
      %s163 = ssub.s32 256, 256
      %164 = vsyncadd [#allocation7], %s163
      %s165 = sshll.u32 [#allocation6], 4
      %s166 = int_to_ptr.vmem [resolvable:$true] %s165
      %171 = dma.hbm_to_vmem [thread:$0]  %s1, 256, %s166, [#allocation7], 128, 128, 8
    $region5: #{tpu_custom_call.1} parent=1 // pred_fallthru
      _
    // Predicated region
    $region6: #{tpu_custom_call.1} parent=1 // pred_check
      _
    $region7: #{tpu_custom_call.1} parent=1 // pred_check_branch
      %173 = sbr.rel (0) target = $region9
    $region8: #{tpu_custom_call.1} parent=1 // pred_region
      %s175 = ssub.s32 256, 256
      %176 = vsyncadd [#allocation10], %s175
      %s177 = sshll.u32 [#allocation9], 4
      %s178 = int_to_ptr.vmem [resolvable:$true] %s177
      %183 = dma.hbm_to_vmem [thread:$0]  %s3, 256, %s178, [#allocation10], 128, 128, 8
    $region9: #{tpu_custom_call.1} parent=1 // pred_fallthru
      _
    // Predicated region
    $region10: #{tpu_custom_call.1} parent=1 // pred_check
      _
    $region11: #{tpu_custom_call.1} parent=1 // pred_check_branch
      %185 = sbr.rel (0) target = $region13
    $region12: #{tpu_custom_call.1} parent=1 // pred_region
      %s187 = ssub.s32 256, 256
      %188 = vsyncadd [#allocation10], %s187
      %s189 = sshll.u32 [#allocation11], 4
      %s190 = int_to_ptr.vmem [resolvable:$true] %s189
      %195 = dma.hbm_to_vmem [thread:$0]  %s5, 256, %s190, [#allocation10], 128, 128, 8
    $region13: #{tpu_custom_call.1} parent=1 // pred_fallthru
      _
    // Predicated region
    $region14: #{tpu_custom_call.1} parent=1 // pred_check
      _
    $region15: #{tpu_custom_call.1} parent=1 // pred_check_branch
      %197 = sbr.rel (0) target = $region17
    $region16: #{tpu_custom_call.1} parent=1 // pred_region
      %s199 = ssub.s32 256, 256
      %200 = vsyncadd [#allocation13], %s199
      %s201 = sshll.u32 [#allocation12], 4
      %s202 = int_to_ptr.vmem [resolvable:$true] %s201
      %207 = dma.hbm_to_vmem [thread:$0]  %s7, 256, %s202, [#allocation13], 128, 128, 8
    $region17: #{tpu_custom_call.1} parent=1 // pred_fallthru
      _
    // Predicated region
    $region18: #{tpu_custom_call.1} parent=1 // pred_check
      _
    $region19: #{tpu_custom_call.1} parent=1 // pred_check_branch
      %209 = sbr.rel (0) target = $region21
    $region20: #{tpu_custom_call.1} parent=1 // pred_region
      %s211 = ssub.s32 256, 256
      %212 = vsyncadd [#allocation13], %s211
      %s213 = sshll.u32 [#allocation14], 4
      %s214 = int_to_ptr.vmem [resolvable:$true] %s213
      %219 = dma.hbm_to_vmem [thread:$0]  %s9, 256, %s214, [#allocation13], 128, 128, 8
    $region21: #{tpu_custom_call.1} parent=1 // pred_fallthru
      _
    // Predicated region
    $region22: #{tpu_custom_call.1} parent=1 // pred_check
      _
    $region23: #{tpu_custom_call.1} parent=1 // pred_check_branch
      %221 = sbr.rel (0) target = $region25
    $region24: #{tpu_custom_call.1} parent=1 // pred_region
      %s223 = ssub.s32 256, 256
      %224 = vsyncadd [#allocation16], %s223
      %s225 = sshll.u32 [#allocation15], 4
      %s226 = int_to_ptr.vmem [resolvable:$true] %s225
      %231 = dma.hbm_to_vmem [thread:$0]  %s11, 256, %s226, [#allocation16], 128, 128, 8
    $region25: #{tpu_custom_call.1} parent=1 // pred_fallthru
      _
    // Predicated region
    $region26: #{tpu_custom_call.1} parent=1 // pred_check
      _
    $region27: #{tpu_custom_call.1} parent=1 // pred_check_branch
      %233 = sbr.rel (0) target = $region29
    $region28: #{tpu_custom_call.1} parent=1 // pred_region
      %s235 = ssub.s32 256, 256
      %236 = vsyncadd [#allocation16], %s235
      %s237 = sshll.u32 [#allocation17], 4
      %s238 = int_to_ptr.vmem [resolvable:$true] %s237
      %243 = dma.hbm_to_vmem [thread:$0]  %s13, 256, %s238, [#allocation16], 128, 128, 8
    $region29: #{tpu_custom_call.1} parent=1 // pred_fallthru
      _
    // Predicated region
    $region30: #{tpu_custom_call.1} parent=1 // pred_check
      _
    $region31: #{tpu_custom_call.1} parent=1 // pred_check_branch
      %245 = sbr.rel (0) target = $region33
    $region32: #{tpu_custom_call.1} parent=1 // pred_region
      _
    $region33: #{tpu_custom_call.1} parent=1 // pred_fallthru
      _
    // Predicated region
    $region34: #{tpu_custom_call.1} parent=1 // pred_check
      _
    $region35: #{tpu_custom_call.1} parent=1 // pred_check_branch
      %247 = sbr.rel (0) target = $region37
    $region36: #{tpu_custom_call.1} parent=1 // pred_region
      _
    $region37: #{tpu_custom_call.1} parent=1 // pred_fallthru
      _
    // Predicated region
    $region38: #{tpu_custom_call.1} parent=1 // pred_check
      _
    $region39: #{tpu_custom_call.1} parent=1 // pred_check_branch
      %249 = sbr.rel (0) target = $region41
    $region40: #{tpu_custom_call.1} parent=1 // pred_region
      _
    $region41: #{tpu_custom_call.1} parent=1 // pred_fallthru
      _
    // Predicated region
    $region42: #{tpu_custom_call.1} parent=1 // pred_check
      _
    $region43: #{tpu_custom_call.1} parent=1 // pred_check_branch
      %251 = sbr.rel (0) target = $region45
    $region44: #{tpu_custom_call.1} parent=1 // pred_region
      _
    $region45: #{tpu_custom_call.1} parent=1 // pred_fallthru
      _
    // Predicated region
    $region46: #{tpu_custom_call.1} parent=1 // pred_check
      _
    $region47: #{tpu_custom_call.1} parent=1 // pred_check_branch
      %253 = sbr.rel (0) target = $region49
    $region48: #{tpu_custom_call.1} parent=1 // pred_region
      %s255 = ssub.s32 16, 16
      %256 = vsyncadd [#allocation19], %s255
      %s258 = sshll.u32 [#allocation18], 4
      %s259 = int_to_ptr.vmem [resolvable:$true] %s258
      %261 = dma.hbm_to_vmem [thread:$0]  %s23, 16, %s259, [#allocation19]
    $region49: #{tpu_custom_call.1} parent=1 // pred_fallthru
      _
    // Predicated region
    $region50: #{tpu_custom_call.1} parent=1 // pred_check
      _
    $region51: #{tpu_custom_call.1} parent=1 // pred_check_branch
      %263 = sbr.rel (0) target = $region53
    $region52: #{tpu_custom_call.1} parent=1 // pred_region
      _
    $region53: #{tpu_custom_call.1} parent=1 // pred_fallthru
      _
    // Predicated region
    $region54: #{tpu_custom_call.1} parent=1 // pred_check
      _
    $region55: #{tpu_custom_call.1} parent=1 // pred_check_branch
      %265 = sbr.rel (0) target = $region57
    $region56: #{tpu_custom_call.1} parent=1 // pred_region
      %s267 = ssub.s32 16, 16
      %268 = vsyncadd [#allocation19], %s267
      %s270 = sshll.u32 [#allocation20], 4
      %s271 = int_to_ptr.vmem [resolvable:$true] %s270
      %273 = dma.hbm_to_vmem [thread:$0]  %s27, 16, %s271, [#allocation19]
    $region57: #{tpu_custom_call.1} parent=1 // pred_fallthru
      _
    // Predicated region
    $region58: #{tpu_custom_call.1} parent=1 // pred_check
      _
    $region59: #{tpu_custom_call.1} parent=1 // pred_check_branch
      %275 = sbr.rel (0) target = $region61
    $region60: #{tpu_custom_call.1} parent=1 // pred_region
      %s277 = ssub.s32 256, 256
      %278 = vsyncadd [#allocation22], %s277
      %s279 = sshll.u32 [#allocation21], 4
      %s280 = int_to_ptr.vmem [resolvable:$true] %s279
      %285 = dma.hbm_to_vmem [thread:$0]  %s29, 256, %s280, [#allocation22], 128, 128, 8
    $region61: #{tpu_custom_call.1} parent=1 // pred_fallthru
      _
    // Predicated region
    $region62: #{tpu_custom_call.1} parent=1 // pred_check
      _
    $region63: #{tpu_custom_call.1} parent=1 // pred_check_branch
      %287 = sbr.rel (0) target = $region65
    $region64: #{tpu_custom_call.1} parent=1 // pred_region
      _
    $region65: #{tpu_custom_call.1} parent=1 // pred_fallthru
      _
    // Predicated region
    $region66: #{tpu_custom_call.1} parent=1 // pred_check
      _
    $region67: #{tpu_custom_call.1} parent=1 // pred_check_branch
      %289 = sbr.rel (0) target = $region69
    $region68: #{tpu_custom_call.1} parent=1 // pred_region
      _
    $region69: #{tpu_custom_call.1} parent=1 // pred_fallthru
      _
    // Predicated region
    $region70: #{tpu_custom_call.1} parent=1 // pred_check
      _
    $region71: #{tpu_custom_call.1} parent=1 // pred_check_branch
      %291 = sbr.rel (0) target = $region73
    $region72: #{tpu_custom_call.1} parent=1 // pred_region
      _
    $region73: #{tpu_custom_call.1} parent=1 // pred_fallthru
      _
    // Predicated region
    $region74: #{tpu_custom_call.1} parent=1 // pred_check
      _
    $region75: #{tpu_custom_call.1} parent=1 // pred_check_branch
      %293 = sbr.rel (0) target = $region77
    $region76: #{tpu_custom_call.1} parent=1 // pred_region
      _
    $region77: #{tpu_custom_call.1} parent=1 // pred_fallthru
      _
    // Predicated region
    $region78: #{tpu_custom_call.1} parent=1 // pred_check
      _
    $region79: #{tpu_custom_call.1} parent=1 // pred_check_branch
      %295 = sbr.rel (0) target = $region81
    $region80: #{tpu_custom_call.1} parent=1 // pred_region
      _
    $region81: #{tpu_custom_call.1} parent=1 // pred_fallthru
      _
    // Predicated region
    $region82: #{tpu_custom_call.1} parent=1 // pred_check
      _
    $region83: #{tpu_custom_call.1} parent=1 // pred_check_branch
      %297 = sbr.rel (0) target = $region85
    $region84: #{tpu_custom_call.1} parent=1 // pred_region
      %s299 = ssub.s32 16, 16
      %300 = vsyncadd [#allocation22], %s299
      %s302 = sshll.u32 [#allocation23], 4
      %s303 = int_to_ptr.vmem [resolvable:$true] %s302
      %305 = dma.hbm_to_vmem [thread:$0]  %s41, 16, %s303, [#allocation22]
    $region85: #{tpu_custom_call.1} parent=1 // pred_fallthru
      _
    // Predicated region
    $region86: #{tpu_custom_call.1} parent=1 // pred_check
      _
    $region87: #{tpu_custom_call.1} parent=1 // pred_check_branch
      %307 = sbr.rel (0) target = $region89
    $region88: #{tpu_custom_call.1} parent=1 // pred_region
      _
    $region89: #{tpu_custom_call.1} parent=1 // pred_fallthru
      _
    // Predicated region
    $region90: #{tpu_custom_call.1} parent=1 // pred_check
      _
    $region91: #{tpu_custom_call.1} parent=1 // pred_check_branch
      %309 = sbr.rel (0) target = $region93
    $region92: #{tpu_custom_call.1} parent=1 // pred_region
      %s311 = ssub.s32 16, 16
      %312 = vsyncadd [#allocation25], %s311
      %s314 = sshll.u32 [#allocation24], 4
      %s315 = int_to_ptr.vmem [resolvable:$true] %s314
      %317 = dma.hbm_to_vmem [thread:$0]  %s45, 16, %s315, [#allocation25]
    $region93: #{tpu_custom_call.1} parent=1 // pred_fallthru
      _
    // Predicated region
    $region94: #{tpu_custom_call.1} parent=1 // pred_check
      _
    $region95: #{tpu_custom_call.1} parent=1 // pred_check_branch
      %319 = sbr.rel (0) target = $region97
    $region96: #{tpu_custom_call.1} parent=1 // pred_region
      _
    $region97: #{tpu_custom_call.1} parent=1 // pred_fallthru
      _
    // Predicated region
    $region98: #{tpu_custom_call.1} parent=1 // pred_check
      _
    $region99: #{tpu_custom_call.1} parent=1 // pred_check_branch
      %321 = sbr.rel (0) target = $region101
    $region100: #{tpu_custom_call.1} parent=1 // pred_region
      _
    $region101: #{tpu_custom_call.1} parent=1 // pred_fallthru
      _
    // Predicated region
    $region102: #{tpu_custom_call.1} parent=1 // pred_check
      _
    $region103: #{tpu_custom_call.1} parent=1 // pred_check_branch
      %323 = sbr.rel (0) target = $region105
    $region104: #{tpu_custom_call.1} parent=1 // pred_region
      _
    $region105: #{tpu_custom_call.1} parent=1 // pred_fallthru
      _
    // Predicated region
    $region106: #{tpu_custom_call.1} parent=1 // pred_check
      _
    $region107: #{tpu_custom_call.1} parent=1 // pred_check_branch
      %325 = sbr.rel (0) target = $region109
    $region108: #{tpu_custom_call.1} parent=1 // pred_region
      _
    $region109: #{tpu_custom_call.1} parent=1 // pred_fallthru
      _
    // Predicated region
    $region110: #{tpu_custom_call.1} parent=1 // pred_check
      _
    $region111: #{tpu_custom_call.1} parent=1 // pred_check_branch
      %327 = sbr.rel (0) target = $region113
    $region112: #{tpu_custom_call.1} parent=1 // pred_region
      %s329 = ssub.s32 16, 16
      %330 = vsyncadd [#allocation25], %s329
      %s332 = sshll.u32 [#allocation26], 4
      %s333 = int_to_ptr.vmem [resolvable:$true] %s332
      %335 = dma.hbm_to_vmem [thread:$0]  %s55, 16, %s333, [#allocation25]
    $region113: #{tpu_custom_call.1} parent=1 // pred_fallthru
      _
    // Predicated region
    $region114: #{tpu_custom_call.1} parent=1 // pred_check
      _
    $region115: #{tpu_custom_call.1} parent=1 // pred_check_branch
      %337 = sbr.rel (0) target = $region117
    $region116: #{tpu_custom_call.1} parent=1 // pred_region
      _
    $region117: #{tpu_custom_call.1} parent=1 // pred_fallthru
      _
    // Predicated region
    $region118: #{tpu_custom_call.1} parent=1 // pred_check
      _
    $region119: #{tpu_custom_call.1} parent=1 // pred_check_branch
      %339 = sbr.rel (0) target = $region121
    $region120: #{tpu_custom_call.1} parent=1 // pred_region
      %s341 = ssub.s32 16, 16
      %342 = vsyncadd [#allocation28], %s341
      %s344 = sshll.u32 [#allocation27], 4
      %s345 = int_to_ptr.vmem [resolvable:$true] %s344
      %347 = dma.hbm_to_vmem [thread:$0]  %s59, 16, %s345, [#allocation28]
    $region121: #{tpu_custom_call.1} parent=1 // pred_fallthru
      _
    // Predicated region
    $region122: #{tpu_custom_call.1} parent=1 // pred_check
      _
    $region123: #{tpu_custom_call.1} parent=1 // pred_check_branch
      %349 = sbr.rel (0) target = $region125
    $region124: #{tpu_custom_call.1} parent=1 // pred_region
      _
    $region125: #{tpu_custom_call.1} parent=1 // pred_fallthru
      _
    // Predicated region
    $region126: #{tpu_custom_call.1} parent=1 // pred_check
      _
    $region127: #{tpu_custom_call.1} parent=1 // pred_check_branch
      %351 = sbr.rel (0) target = $region129
    $region128: #{tpu_custom_call.1} parent=1 // pred_region
      %s353 = ssub.s32 16, 16
      %354 = vsyncadd [#allocation28], %s353
      %s356 = sshll.u32 [#allocation29], 4
      %s357 = int_to_ptr.vmem [resolvable:$true] %s356
      %359 = dma.hbm_to_vmem [thread:$0]  %s63, 16, %s357, [#allocation28]
    $region129: #{tpu_custom_call.1} parent=1 // pred_fallthru
      _
    // Predicated region
    $region130: #{tpu_custom_call.1} parent=1 // pred_check
      _
    $region131: #{tpu_custom_call.1} parent=1 // pred_check_branch
      %361 = sbr.rel (0) target = $region133
    $region132: #{tpu_custom_call.1} parent=1 // pred_region
      _
    $region133: #{tpu_custom_call.1} parent=1 // pred_fallthru
      _
    // Predicated region
    $region134: #{tpu_custom_call.1} parent=1 // pred_check
      _
    $region135: #{tpu_custom_call.1} parent=1 // pred_check_branch
      %363 = sbr.rel (0) target = $region137
    $region136: #{tpu_custom_call.1} parent=1 // pred_region
      _
    $region137: #{tpu_custom_call.1} parent=1 // pred_fallthru
      _
    // Predicated region
    $region138: #{tpu_custom_call.1} parent=1 // pred_check
      _
    $region139: #{tpu_custom_call.1} parent=1 // pred_check_branch
      %365 = sbr.rel (0) target = $region141
    $region140: #{tpu_custom_call.1} parent=1 // pred_region
      %s367 = ssub.s32 16, 16
      %368 = vsyncadd [#allocation31], %s367
      %s370 = sshll.u32 [#allocation30], 4
      %s371 = int_to_ptr.vmem [resolvable:$true] %s370
      %373 = dma.hbm_to_vmem [thread:$0]  %s69, 16, %s371, [#allocation31]
    $region141: #{tpu_custom_call.1} parent=1 // pred_fallthru
      _
    // Predicated region
    $region142: #{tpu_custom_call.1} parent=1 // pred_check
      _
    $region143: #{tpu_custom_call.1} parent=1 // pred_check_branch
      %375 = sbr.rel (0) target = $region145
    $region144: #{tpu_custom_call.1} parent=1 // pred_region
      _
    $region145: #{tpu_custom_call.1} parent=1 // pred_fallthru
      _
    // Predicated region
    $region146: #{tpu_custom_call.1} parent=1 // pred_check
      _
    $region147: #{tpu_custom_call.1} parent=1 // pred_check_branch
      %377 = sbr.rel (0) target = $region149
    $region148: #{tpu_custom_call.1} parent=1 // pred_region
      %s379 = ssub.s32 16, 16
      %380 = vsyncadd [#allocation31], %s379
      %s382 = sshll.u32 [#allocation32], 4
      %s383 = int_to_ptr.vmem [resolvable:$true] %s382
      %385 = dma.hbm_to_vmem [thread:$0]  %s73, 16, %s383, [#allocation31]
    $region149: #{tpu_custom_call.1} parent=1 // pred_fallthru
      _
    // Predicated region
    $region150: #{tpu_custom_call.1} parent=1 // pred_check
      _
    $region151: #{tpu_custom_call.1} parent=1 // pred_check_branch
      %387 = sbr.rel (0) target = $region153
    $region152: #{tpu_custom_call.1} parent=1 // pred_region
      _
    $region153: #{tpu_custom_call.1} parent=1 // pred_fallthru
      _
    // Predicated region
    $region154: #{tpu_custom_call.1} parent=1 // pred_check
      _
    $region155: #{tpu_custom_call.1} parent=1 // pred_check_branch
      %389 = sbr.rel (0) target = $region157
    $region156: #{tpu_custom_call.1} parent=1 // pred_region
      %s391 = ssub.s32 16, 16
      %392 = vsyncadd [#allocation34], %s391
      %s394 = sshll.u32 [#allocation33], 4
      %s395 = int_to_ptr.vmem [resolvable:$true] %s394
      %397 = dma.hbm_to_vmem [thread:$0]  %s77, 16, %s395, [#allocation34]
    $region157: #{tpu_custom_call.1} parent=1 // pred_fallthru
      _
    // Predicated region
    $region158: #{tpu_custom_call.1} parent=1 // pred_check
      _
    $region159: #{tpu_custom_call.1} parent=1 // pred_check_branch
      %399 = sbr.rel (0) target = $region161
    $region160: #{tpu_custom_call.1} parent=1 // pred_region
      _
    $region161: #{tpu_custom_call.1} parent=1 // pred_fallthru
      _
    // Predicated region
    $region162: #{tpu_custom_call.1} parent=1 // pred_check
      _
    $region163: #{tpu_custom_call.1} parent=1 // pred_check_branch
      %401 = sbr.rel (0) target = $region165
    $region164: #{tpu_custom_call.1} parent=1 // pred_region
      %s403 = ssub.s32 16, 16
      %404 = vsyncadd [#allocation34], %s403
      %s406 = sshll.u32 [#allocation35], 4
      %s407 = int_to_ptr.vmem [resolvable:$true] %s406
      %409 = dma.hbm_to_vmem [thread:$0]  %s81, 16, %s407, [#allocation34]
    $region165: #{tpu_custom_call.1} parent=1 // pred_fallthru
      _
    // Predicated region
    $region166: #{tpu_custom_call.1} parent=1 // pred_check
      _
    $region167: #{tpu_custom_call.1} parent=1 // pred_check_branch
      %411 = sbr.rel (0) target = $region169
    $region168: #{tpu_custom_call.1} parent=1 // pred_region
      _
    $region169: #{tpu_custom_call.1} parent=1 // pred_fallthru
      _
    // Predicated region
    $region170: #{tpu_custom_call.1} parent=1 // pred_check
      _
    $region171: #{tpu_custom_call.1} parent=1 // pred_check_branch
      %413 = sbr.rel (0) target = $region173
    $region172: #{tpu_custom_call.1} parent=1 // pred_region
      _
    $region173: #{tpu_custom_call.1} parent=1 // pred_fallthru
      _
    // Predicated region
    $region174: #{tpu_custom_call.1} parent=1 // pred_check
      _
    $region175: #{tpu_custom_call.1} parent=1 // pred_check_branch
      %415 = sbr.rel (0) target = $region177
    $region176: #{tpu_custom_call.1} parent=1 // pred_region
      %s417 = ssub.s32 16, 16
      %418 = vsyncadd [#allocation37], %s417
      %s420 = sshll.u32 [#allocation36], 4
      %s421 = int_to_ptr.vmem [resolvable:$true] %s420
      %423 = dma.hbm_to_vmem [thread:$0]  %s87, 16, %s421, [#allocation37]
    $region177: #{tpu_custom_call.1} parent=1 // pred_fallthru
      _
    // Predicated region
    $region178: #{tpu_custom_call.1} parent=1 // pred_check
      _
    $region179: #{tpu_custom_call.1} parent=1 // pred_check_branch
      %425 = sbr.rel (0) target = $region181
    $region180: #{tpu_custom_call.1} parent=1 // pred_region
      _
    $region181: #{tpu_custom_call.1} parent=1 // pred_fallthru
      _
    // Predicated region
    $region182: #{tpu_custom_call.1} parent=1 // pred_check
      _
    $region183: #{tpu_custom_call.1} parent=1 // pred_check_branch
      %427 = sbr.rel (0) target = $region185
    $region184: #{tpu_custom_call.1} parent=1 // pred_region
      %s429 = ssub.s32 16, 16
      %430 = vsyncadd [#allocation37], %s429
      %s432 = sshll.u32 [#allocation38], 4
      %s433 = int_to_ptr.vmem [resolvable:$true] %s432
      %435 = dma.hbm_to_vmem [thread:$0]  %s91, 16, %s433, [#allocation37]
    $region185: #{tpu_custom_call.1} parent=1 // pred_fallthru
      _
    // Predicated region
    $region186: #{tpu_custom_call.1} parent=1 // pred_check
      _
    $region187: #{tpu_custom_call.1} parent=1 // pred_check_branch
      %437 = sbr.rel (0) target = $region189
    $region188: #{tpu_custom_call.1} parent=1 // pred_region
      _
    $region189: #{tpu_custom_call.1} parent=1 // pred_fallthru
      _
    // Predicated region
    $region190: #{tpu_custom_call.1} parent=1 // pred_check
      _
    $region191: #{tpu_custom_call.1} parent=1 // pred_check_branch
      %439 = sbr.rel (0) target = $region193
    $region192: #{tpu_custom_call.1} parent=1 // pred_region
      %s441 = ssub.s32 16, 16
      %442 = vsyncadd [#allocation40], %s441
      %s444 = sshll.u32 [#allocation39], 4
      %s445 = int_to_ptr.vmem [resolvable:$true] %s444
      %447 = dma.hbm_to_vmem [thread:$0]  %s95, 16, %s445, [#allocation40]
    $region193: #{tpu_custom_call.1} parent=1 // pred_fallthru
      _
    // Predicated region
    $region194: #{tpu_custom_call.1} parent=1 // pred_check
      _
    $region195: #{tpu_custom_call.1} parent=1 // pred_check_branch
      %449 = sbr.rel (0) target = $region197
    $region196: #{tpu_custom_call.1} parent=1 // pred_region
      _
    $region197: #{tpu_custom_call.1} parent=1 // pred_fallthru
      _
    // Predicated region
    $region198: #{tpu_custom_call.1} parent=1 // pred_check
      _
    $region199: #{tpu_custom_call.1} parent=1 // pred_check_branch
      %451 = sbr.rel (0) target = $region201
    $region200: #{tpu_custom_call.1} parent=1 // pred_region
      _
    $region201: #{tpu_custom_call.1} parent=1 // pred_fallthru
      _
    // Predicated region
    $region202: #{tpu_custom_call.1} parent=1 // pred_check
      _
    $region203: #{tpu_custom_call.1} parent=1 // pred_check_branch
      %453 = sbr.rel (0) target = $region205
    $region204: #{tpu_custom_call.1} parent=1 // pred_region
      %s455 = ssub.s32 16, 16
      %456 = vsyncadd [#allocation40], %s455
      %s458 = sshll.u32 [#allocation41], 4
      %s459 = int_to_ptr.vmem [resolvable:$true] %s458
      %461 = dma.hbm_to_vmem [thread:$0]  %s101, 16, %s459, [#allocation40]
    $region205: #{tpu_custom_call.1} parent=1 // pred_fallthru
      _
    // Predicated region
    $region206: #{tpu_custom_call.1} parent=1 // pred_check
      _
    $region207: #{tpu_custom_call.1} parent=1 // pred_check_branch
      %463 = sbr.rel (0) target = $region209
    $region208: #{tpu_custom_call.1} parent=1 // pred_region
      _
    $region209: #{tpu_custom_call.1} parent=1 // pred_fallthru
      _
    // Predicated region
    $region210: #{tpu_custom_call.1} parent=1 // pred_check
      _
    $region211: #{tpu_custom_call.1} parent=1 // pred_check_branch
      %465 = sbr.rel (0) target = $region213
    $region212: #{tpu_custom_call.1} parent=1 // pred_region
      %s467 = ssub.s32 16, 16
      %468 = vsyncadd [#allocation43], %s467
      %s470 = sshll.u32 [#allocation42], 4
      %s471 = int_to_ptr.vmem [resolvable:$true] %s470
      %473 = dma.hbm_to_vmem [thread:$0]  %s105, 16, %s471, [#allocation43]
    $region213: #{tpu_custom_call.1} parent=1 // pred_fallthru
      _
    // Predicated region
    $region214: #{tpu_custom_call.1} parent=1 // pred_check
      _
    $region215: #{tpu_custom_call.1} parent=1 // pred_check_branch
      %475 = sbr.rel (0) target = $region217
    $region216: #{tpu_custom_call.1} parent=1 // pred_region
      _
    $region217: #{tpu_custom_call.1} parent=1 // pred_fallthru
      _
    // Predicated region
    $region218: #{tpu_custom_call.1} parent=1 // pred_check
      _
    $region219: #{tpu_custom_call.1} parent=1 // pred_check_branch
      %477 = sbr.rel (0) target = $region221
    $region220: #{tpu_custom_call.1} parent=1 // pred_region
      _
    $region221: #{tpu_custom_call.1} parent=1 // pred_fallthru
      _
    // Predicated region
    $region222: #{tpu_custom_call.1} parent=1 // pred_check
      _
    $region223: #{tpu_custom_call.1} parent=1 // pred_check_branch
      %479 = sbr.rel (0) target = $region225
    $region224: #{tpu_custom_call.1} parent=1 // pred_region
      _
    $region225: #{tpu_custom_call.1} parent=1 // pred_fallthru
      _
    // Predicated region
    $region226: #{tpu_custom_call.1} parent=1 // pred_check
      _
    $region227: #{tpu_custom_call.1} parent=1 // pred_check_branch
      %481 = sbr.rel (0) target = $region229
    $region228: #{tpu_custom_call.1} parent=1 // pred_region
      _
    $region229: #{tpu_custom_call.1} parent=1 // pred_fallthru
      _
    // Predicated region
    $region230: #{tpu_custom_call.1} parent=1 // pred_check
      _
    $region231: #{tpu_custom_call.1} parent=1 // pred_check_branch
      %483 = sbr.rel (0) target = $region233
    $region232: #{tpu_custom_call.1} parent=1 // pred_region
      _
    $region233: #{tpu_custom_call.1} parent=1 // pred_fallthru
      _
    // Predicated region
    $region234: #{tpu_custom_call.1} parent=1 // pred_check
      _
    $region235: #{tpu_custom_call.1} parent=1 // pred_check_branch
      %485 = sbr.rel (0) target = $region237
    $region236: #{tpu_custom_call.1} parent=1 // pred_region
      _
    $region237: #{tpu_custom_call.1} parent=1 // pred_fallthru
      _
    // Predicated region
    $region238: #{tpu_custom_call.1} parent=1 // pred_check
      _
    $region239: #{tpu_custom_call.1} parent=1 // pred_check_branch
      %487 = sbr.rel (0) target = $region241
    $region240: #{tpu_custom_call.1} parent=1 // pred_region
      _
    $region241: #{tpu_custom_call.1} parent=1 // pred_fallthru
      _
    // Predicated region
    $region242: #{tpu_custom_call.1} parent=1 // pred_check
      _
    $region243: #{tpu_custom_call.1} parent=1 // pred_check_branch
      %489 = sbr.rel (0) target = $region245
    $region244: #{tpu_custom_call.1} parent=1 // pred_region
      _
    $region245: #{tpu_custom_call.1} parent=1 // pred_fallthru
      _
    // Predicated region
    $region246: #{tpu_custom_call.1} parent=1 // pred_check
      _
    $region247: #{tpu_custom_call.1} parent=1 // pred_check_branch
      %491 = sbr.rel (0) target = $region249
    $region248: #{tpu_custom_call.1} parent=1 // pred_region
      _
    $region249: #{tpu_custom_call.1} parent=1 // pred_fallthru
      _
    // Predicated region
    $region250: #{tpu_custom_call.1} parent=1 // pred_check
      _
    $region251: #{tpu_custom_call.1} parent=1 // pred_check_branch
      %493 = sbr.rel (0) target = $region253
    $region252: #{tpu_custom_call.1} parent=1 // pred_region
      _
    $region253: #{tpu_custom_call.1} parent=1 // pred_fallthru
      _
    // Predicated region
    $region254: #{tpu_custom_call.1} parent=1 // pred_check
      _
    $region255: #{tpu_custom_call.1} parent=1 // pred_check_branch
      %495 = sbr.rel (0) target = $region257
    $region256: #{tpu_custom_call.1} parent=1 // pred_region
      _
    $region257: #{tpu_custom_call.1} parent=1 // pred_fallthru
      _
    // Predicated region
    $region258: #{tpu_custom_call.1} parent=1 // pred_check
      _
    $region259: #{tpu_custom_call.1} parent=1 // pred_check_branch
      %497 = sbr.rel (0) target = $region261
    $region260: #{tpu_custom_call.1} parent=1 // pred_region
      %498 = dma.done [#allocation7], 256
    $region261: #{tpu_custom_call.1} parent=1 // pred_fallthru
      _
    // Predicated region
    $region262: #{tpu_custom_call.1} parent=1 // pred_check
      _
    $region263: #{tpu_custom_call.1} parent=1 // pred_check_branch
      %500 = sbr.rel (0) target = $region265
    $region264: #{tpu_custom_call.1} parent=1 // pred_region
      %501 = dma.done [#allocation10], 256
    $region265: #{tpu_custom_call.1} parent=1 // pred_fallthru
      _
    // Predicated region
    $region266: #{tpu_custom_call.1} parent=1 // pred_check
      _
    $region267: #{tpu_custom_call.1} parent=1 // pred_check_branch
      %503 = sbr.rel (0) target = $region269
    $region268: #{tpu_custom_call.1} parent=1 // pred_region
      %504 = dma.done [#allocation10], 256
    $region269: #{tpu_custom_call.1} parent=1 // pred_fallthru
      _
    // Predicated region
    $region270: #{tpu_custom_call.1} parent=1 // pred_check
      _
    $region271: #{tpu_custom_call.1} parent=1 // pred_check_branch
      %506 = sbr.rel (0) target = $region273
    $region272: #{tpu_custom_call.1} parent=1 // pred_region
      %507 = dma.done [#allocation13], 256
    $region273: #{tpu_custom_call.1} parent=1 // pred_fallthru
      _
    // Predicated region
    $region274: #{tpu_custom_call.1} parent=1 // pred_check
      _
    $region275: #{tpu_custom_call.1} parent=1 // pred_check_branch
      %509 = sbr.rel (0) target = $region277
    $region276: #{tpu_custom_call.1} parent=1 // pred_region
      %510 = dma.done [#allocation13], 256
    $region277: #{tpu_custom_call.1} parent=1 // pred_fallthru
      _
    // Predicated region
    $region278: #{tpu_custom_call.1} parent=1 // pred_check
      _
    $region279: #{tpu_custom_call.1} parent=1 // pred_check_branch
      %512 = sbr.rel (0) target = $region281
    $region280: #{tpu_custom_call.1} parent=1 // pred_region
      %513 = dma.done [#allocation16], 256
    $region281: #{tpu_custom_call.1} parent=1 // pred_fallthru
      _
    // Predicated region
    $region282: #{tpu_custom_call.1} parent=1 // pred_check
      _
    $region283: #{tpu_custom_call.1} parent=1 // pred_check_branch
      %515 = sbr.rel (0) target = $region285
    $region284: #{tpu_custom_call.1} parent=1 // pred_region
      %516 = dma.done [#allocation16], 256
    $region285: #{tpu_custom_call.1} parent=1 // pred_fallthru
      _
    // Predicated region
    $region286: #{tpu_custom_call.1} parent=1 // pred_check
      _
    $region287: #{tpu_custom_call.1} parent=1 // pred_check_branch
      %518 = sbr.rel (0) target = $region289
    $region288: #{tpu_custom_call.1} parent=1 // pred_region
      %519 = dma.done [#allocation19], 16
    $region289: #{tpu_custom_call.1} parent=1 // pred_fallthru
      _
    // Predicated region
    $region290: #{tpu_custom_call.1} parent=1 // pred_check
      _
    $region291: #{tpu_custom_call.1} parent=1 // pred_check_branch
      %521 = sbr.rel (0) target = $region293
    $region292: #{tpu_custom_call.1} parent=1 // pred_region
      %522 = dma.done [#allocation19], 16
    $region293: #{tpu_custom_call.1} parent=1 // pred_fallthru
      _
    // Predicated region
    $region294: #{tpu_custom_call.1} parent=1 // pred_check
      _
    $region295: #{tpu_custom_call.1} parent=1 // pred_check_branch
      %524 = sbr.rel (0) target = $region297
    $region296: #{tpu_custom_call.1} parent=1 // pred_region
      %525 = dma.done [#allocation22], 256
    $region297: #{tpu_custom_call.1} parent=1 // pred_fallthru
      _
    // Predicated region
    $region298: #{tpu_custom_call.1} parent=1 // pred_check
      _
    $region299: #{tpu_custom_call.1} parent=1 // pred_check_branch
      %527 = sbr.rel (0) target = $region301
    $region300: #{tpu_custom_call.1} parent=1 // pred_region
      %528 = dma.done [#allocation22], 16
    $region301: #{tpu_custom_call.1} parent=1 // pred_fallthru
      _
    // Predicated region
    $region302: #{tpu_custom_call.1} parent=1 // pred_check
      _
    $region303: #{tpu_custom_call.1} parent=1 // pred_check_branch
      %530 = sbr.rel (0) target = $region305
    $region304: #{tpu_custom_call.1} parent=1 // pred_region
      %531 = dma.done [#allocation25], 16
    $region305: #{tpu_custom_call.1} parent=1 // pred_fallthru
      _
    // Predicated region
    $region306: #{tpu_custom_call.1} parent=1 // pred_check
      _
    $region307: #{tpu_custom_call.1} parent=1 // pred_check_branch
      %533 = sbr.rel (0) target = $region309
    $region308: #{tpu_custom_call.1} parent=1 // pred_region
      %534 = dma.done [#allocation25], 16
    $region309: #{tpu_custom_call.1} parent=1 // pred_fallthru
      _
    // Predicated region
    $region310: #{tpu_custom_call.1} parent=1 // pred_check
      _
    $region311: #{tpu_custom_call.1} parent=1 // pred_check_branch
      %536 = sbr.rel (0) target = $region313
    $region312: #{tpu_custom_call.1} parent=1 // pred_region
      %537 = dma.done [#allocation28], 16
    $region313: #{tpu_custom_call.1} parent=1 // pred_fallthru
      _
    // Predicated region
    $region314: #{tpu_custom_call.1} parent=1 // pred_check
      _
    $region315: #{tpu_custom_call.1} parent=1 // pred_check_branch
      %539 = sbr.rel (0) target = $region317
    $region316: #{tpu_custom_call.1} parent=1 // pred_region
      %540 = dma.done [#allocation28], 16
    $region317: #{tpu_custom_call.1} parent=1 // pred_fallthru
      _
    // Predicated region
    $region318: #{tpu_custom_call.1} parent=1 // pred_check
      _
    $region319: #{tpu_custom_call.1} parent=1 // pred_check_branch
      %542 = sbr.rel (0) target = $region321
    $region320: #{tpu_custom_call.1} parent=1 // pred_region
      %543 = dma.done [#allocation31], 16
    $region321: #{tpu_custom_call.1} parent=1 // pred_fallthru
      _
    // Predicated region
    $region322: #{tpu_custom_call.1} parent=1 // pred_check
      _
    $region323: #{tpu_custom_call.1} parent=1 // pred_check_branch
      %545 = sbr.rel (0) target = $region325
    $region324: #{tpu_custom_call.1} parent=1 // pred_region
      %546 = dma.done [#allocation31], 16
    $region325: #{tpu_custom_call.1} parent=1 // pred_fallthru
      _
    // Predicated region
    $region326: #{tpu_custom_call.1} parent=1 // pred_check
      _
    $region327: #{tpu_custom_call.1} parent=1 // pred_check_branch
      %548 = sbr.rel (0) target = $region329
    $region328: #{tpu_custom_call.1} parent=1 // pred_region
      %549 = dma.done [#allocation34], 16
    $region329: #{tpu_custom_call.1} parent=1 // pred_fallthru
      _
    // Predicated region
    $region330: #{tpu_custom_call.1} parent=1 // pred_check
      _
    $region331: #{tpu_custom_call.1} parent=1 // pred_check_branch
      %551 = sbr.rel (0) target = $region333
    $region332: #{tpu_custom_call.1} parent=1 // pred_region
      %552 = dma.done [#allocation34], 16
    $region333: #{tpu_custom_call.1} parent=1 // pred_fallthru
      _
    // Predicated region
    $region334: #{tpu_custom_call.1} parent=1 // pred_check
      _
    $region335: #{tpu_custom_call.1} parent=1 // pred_check_branch
      %554 = sbr.rel (0) target = $region337
    $region336: #{tpu_custom_call.1} parent=1 // pred_region
      %555 = dma.done [#allocation37], 16
    $region337: #{tpu_custom_call.1} parent=1 // pred_fallthru
      _
    // Predicated region
    $region338: #{tpu_custom_call.1} parent=1 // pred_check
      _
    $region339: #{tpu_custom_call.1} parent=1 // pred_check_branch
      %557 = sbr.rel (0) target = $region341
    $region340: #{tpu_custom_call.1} parent=1 // pred_region
      %558 = dma.done [#allocation37], 16
    $region341: #{tpu_custom_call.1} parent=1 // pred_fallthru
      _
    // Predicated region
    $region342: #{tpu_custom_call.1} parent=1 // pred_check
      _
    $region343: #{tpu_custom_call.1} parent=1 // pred_check_branch
      %560 = sbr.rel (0) target = $region345
    $region344: #{tpu_custom_call.1} parent=1 // pred_region
      %561 = dma.done [#allocation40], 16
    $region345: #{tpu_custom_call.1} parent=1 // pred_fallthru
      _
    // Predicated region
    $region346: #{tpu_custom_call.1} parent=1 // pred_check
      _
    $region347: #{tpu_custom_call.1} parent=1 // pred_check_branch
      %563 = sbr.rel (0) target = $region349
    $region348: #{tpu_custom_call.1} parent=1 // pred_region
      %564 = dma.done [#allocation40], 16
    $region349: #{tpu_custom_call.1} parent=1 // pred_fallthru
      _
    // Predicated region
    $region350: #{tpu_custom_call.1} parent=1 // pred_check
      _
    $region351: #{tpu_custom_call.1} parent=1 // pred_check_branch
      %566 = sbr.rel (0) target = $region353
    $region352: #{tpu_custom_call.1} parent=1 // pred_region
      %567 = dma.done [#allocation43], 16
    $region353: #{tpu_custom_call.1} parent=1 // pred_fallthru
      _
    %v568 = vld [vmem:[%s127] sm:$0xff]
    %v569 = vld [vmem:[%s127 + $0x8] sm:$0xf]
    %v570 = vld [vmem:[%s125] sm:$0xff]
    %v571 = vld [vmem:[%s125 + $0x8] sm:$0x7]
    %v572 = vld [vmem:[#allocation14] sm:$0xff]
    %v573 = vld [vmem:[#allocation14 + $0x8] sm:$0x7]
    %v574 = vld [vmem:[#allocation15] sm:$0xff]
    %v575 = vld [vmem:[#allocation15 + $0x8] sm:$0x7]
    %v576 = vld [vmem:[#allocation6] sm:$0xff]
    %v577 = vld [vmem:[#allocation6 + $0x8] sm:$0x7]
    %v578 = vld [vmem:[#allocation9] sm:$0xff]
    %v579 = vld [vmem:[#allocation9 + $0x8] sm:$0x7]
    %v580 = vld [vmem:[#allocation17] sm:$0xff]
    %v581 = vld [vmem:[#allocation17 + $0x8] sm:$0x7]
    %v582 = vld [vmem:[%s15] sm:$0xff]
    %v583 = vld [vmem:[%s15 + $0x8] sm:$0x7]
    %v584 = vld [vmem:[%s17] sm:$0xff]
    %v585 = vld [vmem:[%s17 + $0x8] sm:$0x7]
    %v586 = vld [vmem:[#allocation11] sm:$0xff]
    %v587 = vld [vmem:[#allocation11 + $0x8] sm:$0xf]
    %v588 = vld [vmem:[#allocation12] sm:$0xff]
    %v589 = vld [vmem:[#allocation12 + $0x8] sm:$0xf]
    %v590 = vld [vmem:[#allocation4] sm:$0x1]
    %v591 = vadd.f32 %v590, 1.0
    %v592 = vld [vmem:[#allocation5] sm:$0x1]
    %v593 = vadd.f32 %v592, 1.0
    %v594 = vld [vmem:[#allocation2] sm:$0x1]
    %v595 = vadd.f32 %v594, 1.0
    %v596 = vld [vmem:[#allocation3] sm:$0x1]
    %v597 = vadd.f32 %v596, 1.0
    %vm598 = vcmask 97280
    %v600 = vsel %vm598, %v572, 0
    %v603 = vsel %vm598, %v573, 0
    %vm605 = vcmask 1043456
    %v607 = vsel %vm605, %v569, 0
    %609 = vmatprep.subr.mxu0 0.0
    %610 = vmatpush1.msra.mxu0 %v568
    %611 = vmatprep.subr.mxu0 0.0
    %612 = vmatpush1.msra.mxu0 %v607
    %613 = vmatprep.subr.mxu0 0.0
    %614 = vmatpush1.msra.mxu0 0.0
    %615 = vmatprep.subr.mxu0 0.0
    %616 = vmatpush1.msra.mxu0 0.0
    %617 = vmatprep.subr.mxu0 0.0
    %618 = vmatpush1.msra.mxu0 0.0
    %619 = vmatprep.subr.mxu0 0.0
    %620 = vmatpush1.msra.mxu0 0.0
    %621 = vmatprep.subr.mxu0 0.0
    %622 = vmatpush1.msra.mxu0 0.0
    %623 = vmatprep.subr.mxu0 0.0
    %624 = vmatpush1.msra.mxu0 0.0
    %625 = vmatprep.subr.mxu0 0.0
    %626 = vmatpush1.msra.mxu0 0.0
    %627 = vmatprep.subr.mxu0 0.0
    %628 = vmatpush1.msra.mxu0 0.0
    %629 = vmatprep.subr.mxu0 0.0
    %630 = vmatpush1.msra.mxu0 0.0
    %631 = vmatprep.subr.mxu0 0.0
    %632 = vmatpush1.msra.mxu0 0.0
    %633 = vmatprep.subr.mxu0 0.0
    %634 = vmatpush1.msra.mxu0 0.0
    %635 = vmatprep.subr.mxu0 0.0
    %636 = vmatpush1.msra.mxu0 0.0
    %637 = vmatprep.subr.mxu0 0.0
    %638 = vmatpush1.msra.mxu0 0.0
    %639 = vmatprep.subr.mxu0 0.0
    %640 = vmatpush1.msra.mxu0 0.0
    %641 = vmatprep.subr.mxu0 0.0
    %642 = vmatpush1.msra.mxu0 0.0
    %643 = vmatprep.subr.mxu0 0.0
    %644 = vmatpush1.msra.mxu0 0.0
    %645 = vmatprep.subr.mxu0 0.0
    %646 = vmatpush1.msra.mxu0 0.0
    %647 = vmatprep.subr.mxu0 0.0
    %648 = vmatpush1.msra.mxu0 0.0
    %649 = vmatprep.subr.mxu0 0.0
    %650 = vmatpush1.msra.mxu0 0.0
    %651 = vmatprep.subr.mxu0 0.0
    %652 = vmatpush1.msra.mxu0 0.0
    %653 = vmatprep.subr.mxu0 0.0
    %654 = vmatpush1.msra.mxu0 0.0
    %655 = vmatprep.subr.mxu0 0.0
    %656 = vmatpush1.msra.mxu0 0.0
    %657 = vmatprep.subr.mxu0 0.0
    %658 = vmatpush1.msra.mxu0 0.0
    %659 = vmatprep.subr.mxu0 0.0
    %660 = vmatpush1.msra.mxu0 0.0
    %661 = vmatprep.subr.mxu0 0.0
    %662 = vmatpush1.msra.mxu0 0.0
    %663 = vmatprep.subr.mxu0 0.0
    %664 = vmatpush1.msra.mxu0 0.0
    %665 = vmatprep.subr.mxu0 0.0
    %666 = vmatpush1.msra.mxu0 0.0
    %667 = vmatprep.subr.mxu0 0.0
    %668 = vmatpush1.msra.mxu0 0.0
    %669 = vmatprep.subr.mxu0 0.0
    %670 = vmatpush1.msra.mxu0 0.0
    %671 = vmatprep.subr.mxu0 0.0
    %672 = vmatpush1.msra.mxu0 0.0
    %673 = vmatprep.mubr.f32.mxu0 0.0
    %674 = vmatmul.mubr.f32.gmra.mrb[0].mxu0 %v600
    %v675 = vpop.f32.mrb[0].mxu0
    %v676 = vadd.f32 0.0, %v675
    %v677 = vpop.f32.mrb[0].mxu0
    %678 = vmatprep.mubr.f32.mxu0 0.0
    %679 = vmatmul.mubr.f32.gmra.mrb[0].mxu0 %v603
    %v680 = vpop.f32.mrb[0].mxu0
    %v681 = vadd.f32 0.0, %v680
    %v682 = vpop.f32.mrb[0].mxu0
    %683 = vdwg.mxu0
    %v685 = vsel %vm598, %v574, 0
    %v688 = vsel %vm598, %v575, 0
    %690 = vmatprep.subr.mxu0 0.0
    %691 = vmatpush1.msra.mxu0 %v568
    %692 = vmatprep.subr.mxu0 0.0
    %693 = vmatpush1.msra.mxu0 %v607
    %694 = vmatprep.subr.mxu0 0.0
    %695 = vmatpush1.msra.mxu0 0.0
    %696 = vmatprep.subr.mxu0 0.0
    %697 = vmatpush1.msra.mxu0 0.0
    %698 = vmatprep.subr.mxu0 0.0
    %699 = vmatpush1.msra.mxu0 0.0
    %700 = vmatprep.subr.mxu0 0.0
    %701 = vmatpush1.msra.mxu0 0.0
    %702 = vmatprep.subr.mxu0 0.0
    %703 = vmatpush1.msra.mxu0 0.0
    %704 = vmatprep.subr.mxu0 0.0
    %705 = vmatpush1.msra.mxu0 0.0
    %706 = vmatprep.subr.mxu0 0.0
    %707 = vmatpush1.msra.mxu0 0.0
    %708 = vmatprep.subr.mxu0 0.0
    %709 = vmatpush1.msra.mxu0 0.0
    %710 = vmatprep.subr.mxu0 0.0
    %711 = vmatpush1.msra.mxu0 0.0
    %712 = vmatprep.subr.mxu0 0.0
    %713 = vmatpush1.msra.mxu0 0.0
    %714 = vmatprep.subr.mxu0 0.0
    %715 = vmatpush1.msra.mxu0 0.0
    %716 = vmatprep.subr.mxu0 0.0
    %717 = vmatpush1.msra.mxu0 0.0
    %718 = vmatprep.subr.mxu0 0.0
    %719 = vmatpush1.msra.mxu0 0.0
    %720 = vmatprep.subr.mxu0 0.0
    %721 = vmatpush1.msra.mxu0 0.0
    %722 = vmatprep.subr.mxu0 0.0
    %723 = vmatpush1.msra.mxu0 0.0
    %724 = vmatprep.subr.mxu0 0.0
    %725 = vmatpush1.msra.mxu0 0.0
    %726 = vmatprep.subr.mxu0 0.0
    %727 = vmatpush1.msra.mxu0 0.0
    %728 = vmatprep.subr.mxu0 0.0
    %729 = vmatpush1.msra.mxu0 0.0
    %730 = vmatprep.subr.mxu0 0.0
    %731 = vmatpush1.msra.mxu0 0.0
    %732 = vmatprep.subr.mxu0 0.0
    %733 = vmatpush1.msra.mxu0 0.0
    %734 = vmatprep.subr.mxu0 0.0
    %735 = vmatpush1.msra.mxu0 0.0
    %736 = vmatprep.subr.mxu0 0.0
    %737 = vmatpush1.msra.mxu0 0.0
    %738 = vmatprep.subr.mxu0 0.0
    %739 = vmatpush1.msra.mxu0 0.0
    %740 = vmatprep.subr.mxu0 0.0
    %741 = vmatpush1.msra.mxu0 0.0
    %742 = vmatprep.subr.mxu0 0.0
    %743 = vmatpush1.msra.mxu0 0.0
    %744 = vmatprep.subr.mxu0 0.0
    %745 = vmatpush1.msra.mxu0 0.0
    %746 = vmatprep.subr.mxu0 0.0
    %747 = vmatpush1.msra.mxu0 0.0
    %748 = vmatprep.subr.mxu0 0.0
    %749 = vmatpush1.msra.mxu0 0.0
    %750 = vmatprep.subr.mxu0 0.0
    %751 = vmatpush1.msra.mxu0 0.0
    %752 = vmatprep.subr.mxu0 0.0
    %753 = vmatpush1.msra.mxu0 0.0
    %754 = vmatprep.mubr.f32.mxu0 0.0
    %755 = vmatmul.mubr.f32.gmra.mrb[0].mxu0 %v685
    %v756 = vpop.f32.mrb[0].mxu0
    %v757 = vadd.f32 0.0, %v756
    %v758 = vpop.f32.mrb[0].mxu0
    %759 = vmatprep.mubr.f32.mxu0 0.0
    %760 = vmatmul.mubr.f32.gmra.mrb[0].mxu0 %v688
    %v761 = vpop.f32.mrb[0].mxu0
    %v762 = vadd.f32 0.0, %v761
    %v763 = vpop.f32.mrb[0].mxu0
    %764 = vdwg.mxu0
    %vm765 = vcmask 89088
    %v767 = vsel %vm765, %v576, 0
    %v770 = vsel %vm765, %v577, 0
    %vm772 = vcmask 1042432
    %v774 = vsel %vm772, %v762, 0
    %776 = vmatprep.subr.mxu0 0.0
    %777 = vmatpush1.msra.mxu0 %v757
    %778 = vmatprep.subr.mxu0 0.0
    %779 = vmatpush1.msra.mxu0 %v774
    %780 = vmatprep.subr.mxu0 0.0
    %781 = vmatpush1.msra.mxu0 0.0
    %782 = vmatprep.subr.mxu0 0.0
    %783 = vmatpush1.msra.mxu0 0.0
    %784 = vmatprep.subr.mxu0 0.0
    %785 = vmatpush1.msra.mxu0 0.0
    %786 = vmatprep.subr.mxu0 0.0
    %787 = vmatpush1.msra.mxu0 0.0
    %788 = vmatprep.subr.mxu0 0.0
    %789 = vmatpush1.msra.mxu0 0.0
    %790 = vmatprep.subr.mxu0 0.0
    %791 = vmatpush1.msra.mxu0 0.0
    %792 = vmatprep.subr.mxu0 0.0
    %793 = vmatpush1.msra.mxu0 0.0
    %794 = vmatprep.subr.mxu0 0.0
    %795 = vmatpush1.msra.mxu0 0.0
    %796 = vmatprep.subr.mxu0 0.0
    %797 = vmatpush1.msra.mxu0 0.0
    %798 = vmatprep.subr.mxu0 0.0
    %799 = vmatpush1.msra.mxu0 0.0
    %800 = vmatprep.subr.mxu0 0.0
    %801 = vmatpush1.msra.mxu0 0.0
    %802 = vmatprep.subr.mxu0 0.0
    %803 = vmatpush1.msra.mxu0 0.0
    %804 = vmatprep.subr.mxu0 0.0
    %805 = vmatpush1.msra.mxu0 0.0
    %806 = vmatprep.subr.mxu0 0.0
    %807 = vmatpush1.msra.mxu0 0.0
    %808 = vmatprep.subr.mxu0 0.0
    %809 = vmatpush1.msra.mxu0 0.0
    %810 = vmatprep.subr.mxu0 0.0
    %811 = vmatpush1.msra.mxu0 0.0
    %812 = vmatprep.subr.mxu0 0.0
    %813 = vmatpush1.msra.mxu0 0.0
    %814 = vmatprep.subr.mxu0 0.0
    %815 = vmatpush1.msra.mxu0 0.0
    %816 = vmatprep.subr.mxu0 0.0
    %817 = vmatpush1.msra.mxu0 0.0
    %818 = vmatprep.subr.mxu0 0.0
    %819 = vmatpush1.msra.mxu0 0.0
    %820 = vmatprep.subr.mxu0 0.0
    %821 = vmatpush1.msra.mxu0 0.0
    %822 = vmatprep.subr.mxu0 0.0
    %823 = vmatpush1.msra.mxu0 0.0
    %824 = vmatprep.subr.mxu0 0.0
    %825 = vmatpush1.msra.mxu0 0.0
    %826 = vmatprep.subr.mxu0 0.0
    %827 = vmatpush1.msra.mxu0 0.0
    %828 = vmatprep.subr.mxu0 0.0
    %829 = vmatpush1.msra.mxu0 0.0
    %830 = vmatprep.subr.mxu0 0.0
    %831 = vmatpush1.msra.mxu0 0.0
    %832 = vmatprep.subr.mxu0 0.0
    %833 = vmatpush1.msra.mxu0 0.0
    %834 = vmatprep.subr.mxu0 0.0
    %835 = vmatpush1.msra.mxu0 0.0
    %836 = vmatprep.subr.mxu0 0.0
    %837 = vmatpush1.msra.mxu0 0.0
    %838 = vmatprep.subr.mxu0 0.0
    %839 = vmatpush1.msra.mxu0 0.0
    %840 = vmatprep.mubr.f32.mxu0 0.0
    %841 = vmatmul.mubr.f32.gmra.mrb[0].mxu0 %v767
    %v842 = vpop.f32.mrb[0].mxu0
    %v843 = vadd.f32 0.0, %v842
    %v844 = vpop.f32.mrb[0].mxu0
    %845 = vmatprep.mubr.f32.mxu0 0.0
    %846 = vmatmul.mubr.f32.gmra.mrb[0].mxu0 %v770
    %v847 = vpop.f32.mrb[0].mxu0
    %v848 = vadd.f32 0.0, %v847
    %v849 = vpop.f32.mrb[0].mxu0
    %850 = vdwg.mxu0
    %v852 = vsel %vm765, %v578, 0
    %v855 = vsel %vm765, %v579, 0
    %857 = vmatprep.subr.mxu0 0.0
    %858 = vmatpush1.msra.mxu0 %v757
    %859 = vmatprep.subr.mxu0 0.0
    %860 = vmatpush1.msra.mxu0 %v774
    %861 = vmatprep.subr.mxu0 0.0
    %862 = vmatpush1.msra.mxu0 0.0
    %863 = vmatprep.subr.mxu0 0.0
    %864 = vmatpush1.msra.mxu0 0.0
    %865 = vmatprep.subr.mxu0 0.0
    %866 = vmatpush1.msra.mxu0 0.0
    %867 = vmatprep.subr.mxu0 0.0
    %868 = vmatpush1.msra.mxu0 0.0
    %869 = vmatprep.subr.mxu0 0.0
    %870 = vmatpush1.msra.mxu0 0.0
    %871 = vmatprep.subr.mxu0 0.0
    %872 = vmatpush1.msra.mxu0 0.0
    %873 = vmatprep.subr.mxu0 0.0
    %874 = vmatpush1.msra.mxu0 0.0
    %875 = vmatprep.subr.mxu0 0.0
    %876 = vmatpush1.msra.mxu0 0.0
    %877 = vmatprep.subr.mxu0 0.0
    %878 = vmatpush1.msra.mxu0 0.0
    %879 = vmatprep.subr.mxu0 0.0
    %880 = vmatpush1.msra.mxu0 0.0
    %881 = vmatprep.subr.mxu0 0.0
    %882 = vmatpush1.msra.mxu0 0.0
    %883 = vmatprep.subr.mxu0 0.0
    %884 = vmatpush1.msra.mxu0 0.0
    %885 = vmatprep.subr.mxu0 0.0
    %886 = vmatpush1.msra.mxu0 0.0
    %887 = vmatprep.subr.mxu0 0.0
    %888 = vmatpush1.msra.mxu0 0.0
    %889 = vmatprep.subr.mxu0 0.0
    %890 = vmatpush1.msra.mxu0 0.0
    %891 = vmatprep.subr.mxu0 0.0
    %892 = vmatpush1.msra.mxu0 0.0
    %893 = vmatprep.subr.mxu0 0.0
    %894 = vmatpush1.msra.mxu0 0.0
    %895 = vmatprep.subr.mxu0 0.0
    %896 = vmatpush1.msra.mxu0 0.0
    %897 = vmatprep.subr.mxu0 0.0
    %898 = vmatpush1.msra.mxu0 0.0
    %899 = vmatprep.subr.mxu0 0.0
    %900 = vmatpush1.msra.mxu0 0.0
    %901 = vmatprep.subr.mxu0 0.0
    %902 = vmatpush1.msra.mxu0 0.0
    %903 = vmatprep.subr.mxu0 0.0
    %904 = vmatpush1.msra.mxu0 0.0
    %905 = vmatprep.subr.mxu0 0.0
    %906 = vmatpush1.msra.mxu0 0.0
    %907 = vmatprep.subr.mxu0 0.0
    %908 = vmatpush1.msra.mxu0 0.0
    %909 = vmatprep.subr.mxu0 0.0
    %910 = vmatpush1.msra.mxu0 0.0
    %911 = vmatprep.subr.mxu0 0.0
    %912 = vmatpush1.msra.mxu0 0.0
    %913 = vmatprep.subr.mxu0 0.0
    %914 = vmatpush1.msra.mxu0 0.0
    %915 = vmatprep.subr.mxu0 0.0
    %916 = vmatpush1.msra.mxu0 0.0
    %917 = vmatprep.subr.mxu0 0.0
    %918 = vmatpush1.msra.mxu0 0.0
    %919 = vmatprep.subr.mxu0 0.0
    %920 = vmatpush1.msra.mxu0 0.0
    %921 = vmatprep.mubr.f32.mxu0 0.0
    %922 = vmatmul.mubr.f32.gmra.mrb[0].mxu0 %v852
    %v923 = vpop.f32.mrb[0].mxu0
    %v924 = vadd.f32 0.0, %v923
    %v925 = vpop.f32.mrb[0].mxu0
    %926 = vmatprep.mubr.f32.mxu0 0.0
    %927 = vmatmul.mubr.f32.gmra.mrb[0].mxu0 %v855
    %v928 = vpop.f32.mrb[0].mxu0
    %v929 = vadd.f32 0.0, %v928
    %v930 = vpop.f32.mrb[0].mxu0
    %931 = vdwg.mxu0
    %v933 = vsel %vm772, %v681, 0
    %935 = vmatprep.subr.mxu0 0.0
    %936 = vmatpush1.msra.mxu0 %v676
    %937 = vmatprep.subr.mxu0 0.0
    %938 = vmatpush1.msra.mxu0 %v933
    %939 = vmatprep.subr.mxu0 0.0
    %940 = vmatpush1.msra.mxu0 0.0
    %941 = vmatprep.subr.mxu0 0.0
    %942 = vmatpush1.msra.mxu0 0.0
    %943 = vmatprep.subr.mxu0 0.0
    %944 = vmatpush1.msra.mxu0 0.0
    %945 = vmatprep.subr.mxu0 0.0
    %946 = vmatpush1.msra.mxu0 0.0
    %947 = vmatprep.subr.mxu0 0.0
    %948 = vmatpush1.msra.mxu0 0.0
    %949 = vmatprep.subr.mxu0 0.0
    %950 = vmatpush1.msra.mxu0 0.0
    %951 = vmatprep.subr.mxu0 0.0
    %952 = vmatpush1.msra.mxu0 0.0
    %953 = vmatprep.subr.mxu0 0.0
    %954 = vmatpush1.msra.mxu0 0.0
    %955 = vmatprep.subr.mxu0 0.0
    %956 = vmatpush1.msra.mxu0 0.0
    %957 = vmatprep.subr.mxu0 0.0
    %958 = vmatpush1.msra.mxu0 0.0
    %959 = vmatprep.subr.mxu0 0.0
    %960 = vmatpush1.msra.mxu0 0.0
    %961 = vmatprep.subr.mxu0 0.0
    %962 = vmatpush1.msra.mxu0 0.0
    %963 = vmatprep.subr.mxu0 0.0
    %964 = vmatpush1.msra.mxu0 0.0
    %965 = vmatprep.subr.mxu0 0.0
    %966 = vmatpush1.msra.mxu0 0.0
    %967 = vmatprep.subr.mxu0 0.0
    %968 = vmatpush1.msra.mxu0 0.0
    %969 = vmatprep.subr.mxu0 0.0
    %970 = vmatpush1.msra.mxu0 0.0
    %971 = vmatprep.subr.mxu0 0.0
    %972 = vmatpush1.msra.mxu0 0.0
    %973 = vmatprep.subr.mxu0 0.0
    %974 = vmatpush1.msra.mxu0 0.0
    %975 = vmatprep.subr.mxu0 0.0
    %976 = vmatpush1.msra.mxu0 0.0
    %977 = vmatprep.subr.mxu0 0.0
    %978 = vmatpush1.msra.mxu0 0.0
    %979 = vmatprep.subr.mxu0 0.0
    %980 = vmatpush1.msra.mxu0 0.0
    %981 = vmatprep.subr.mxu0 0.0
    %982 = vmatpush1.msra.mxu0 0.0
    %983 = vmatprep.subr.mxu0 0.0
    %984 = vmatpush1.msra.mxu0 0.0
    %985 = vmatprep.subr.mxu0 0.0
    %986 = vmatpush1.msra.mxu0 0.0
    %987 = vmatprep.subr.mxu0 0.0
    %988 = vmatpush1.msra.mxu0 0.0
    %989 = vmatprep.subr.mxu0 0.0
    %990 = vmatpush1.msra.mxu0 0.0
    %991 = vmatprep.subr.mxu0 0.0
    %992 = vmatpush1.msra.mxu0 0.0
    %993 = vmatprep.subr.mxu0 0.0
    %994 = vmatpush1.msra.mxu0 0.0
    %995 = vmatprep.subr.mxu0 0.0
    %996 = vmatpush1.msra.mxu0 0.0
    %997 = vmatprep.subr.mxu0 0.0
    %998 = vmatpush1.msra.mxu0 0.0
    %999 = vmatprep.mubr.f32.mxu0 0.0
    %1000 = vmatmul.mubr.f32.gmra.mrb[0].mxu0 %v767
    %v1001 = vpop.f32.mrb[0].mxu0
    %v1002 = vadd.f32 0.0, %v1001
    %v1003 = vpop.f32.mrb[0].mxu0
    %1004 = vmatprep.mubr.f32.mxu0 0.0
    %1005 = vmatmul.mubr.f32.gmra.mrb[0].mxu0 %v770
    %v1006 = vpop.f32.mrb[0].mxu0
    %v1007 = vadd.f32 0.0, %v1006
    %v1008 = vpop.f32.mrb[0].mxu0
    %1009 = vdwg.mxu0
    %1010 = vmatprep.subr.mxu0 0.0
    %1011 = vmatpush1.msra.mxu0 %v676
    %1012 = vmatprep.subr.mxu0 0.0
    %1013 = vmatpush1.msra.mxu0 %v933
    %1014 = vmatprep.subr.mxu0 0.0
    %1015 = vmatpush1.msra.mxu0 0.0
    %1016 = vmatprep.subr.mxu0 0.0
    %1017 = vmatpush1.msra.mxu0 0.0
    %1018 = vmatprep.subr.mxu0 0.0
    %1019 = vmatpush1.msra.mxu0 0.0
    %1020 = vmatprep.subr.mxu0 0.0
    %1021 = vmatpush1.msra.mxu0 0.0
    %1022 = vmatprep.subr.mxu0 0.0
    %1023 = vmatpush1.msra.mxu0 0.0
    %1024 = vmatprep.subr.mxu0 0.0
    %1025 = vmatpush1.msra.mxu0 0.0
    %1026 = vmatprep.subr.mxu0 0.0
    %1027 = vmatpush1.msra.mxu0 0.0
    %1028 = vmatprep.subr.mxu0 0.0
    %1029 = vmatpush1.msra.mxu0 0.0
    %1030 = vmatprep.subr.mxu0 0.0
    %1031 = vmatpush1.msra.mxu0 0.0
    %1032 = vmatprep.subr.mxu0 0.0
    %1033 = vmatpush1.msra.mxu0 0.0
    %1034 = vmatprep.subr.mxu0 0.0
    %1035 = vmatpush1.msra.mxu0 0.0
    %1036 = vmatprep.subr.mxu0 0.0
    %1037 = vmatpush1.msra.mxu0 0.0
    %1038 = vmatprep.subr.mxu0 0.0
    %1039 = vmatpush1.msra.mxu0 0.0
    %1040 = vmatprep.subr.mxu0 0.0
    %1041 = vmatpush1.msra.mxu0 0.0
    %1042 = vmatprep.subr.mxu0 0.0
    %1043 = vmatpush1.msra.mxu0 0.0
    %1044 = vmatprep.subr.mxu0 0.0
    %1045 = vmatpush1.msra.mxu0 0.0
    %1046 = vmatprep.subr.mxu0 0.0
    %1047 = vmatpush1.msra.mxu0 0.0
    %1048 = vmatprep.subr.mxu0 0.0
    %1049 = vmatpush1.msra.mxu0 0.0
    %1050 = vmatprep.subr.mxu0 0.0
    %1051 = vmatpush1.msra.mxu0 0.0
    %1052 = vmatprep.subr.mxu0 0.0
    %1053 = vmatpush1.msra.mxu0 0.0
    %1054 = vmatprep.subr.mxu0 0.0
    %1055 = vmatpush1.msra.mxu0 0.0
    %1056 = vmatprep.subr.mxu0 0.0
    %1057 = vmatpush1.msra.mxu0 0.0
    %1058 = vmatprep.subr.mxu0 0.0
    %1059 = vmatpush1.msra.mxu0 0.0
    %1060 = vmatprep.subr.mxu0 0.0
    %1061 = vmatpush1.msra.mxu0 0.0
    %1062 = vmatprep.subr.mxu0 0.0
    %1063 = vmatpush1.msra.mxu0 0.0
    %1064 = vmatprep.subr.mxu0 0.0
    %1065 = vmatpush1.msra.mxu0 0.0
    %1066 = vmatprep.subr.mxu0 0.0
    %1067 = vmatpush1.msra.mxu0 0.0
    %1068 = vmatprep.subr.mxu0 0.0
    %1069 = vmatpush1.msra.mxu0 0.0
    %1070 = vmatprep.subr.mxu0 0.0
    %1071 = vmatpush1.msra.mxu0 0.0
    %1072 = vmatprep.subr.mxu0 0.0
    %1073 = vmatpush1.msra.mxu0 0.0
    %1074 = vmatprep.mubr.f32.mxu0 0.0
    %1075 = vmatmul.mubr.f32.gmra.mrb[0].mxu0 %v852
    %v1076 = vpop.f32.mrb[0].mxu0
    %v1077 = vadd.f32 0.0, %v1076
    %v1078 = vpop.f32.mrb[0].mxu0
    %1079 = vmatprep.mubr.f32.mxu0 0.0
    %1080 = vmatmul.mubr.f32.gmra.mrb[0].mxu0 %v855
    %v1081 = vpop.f32.mrb[0].mxu0
    %v1082 = vadd.f32 0.0, %v1081
    %v1083 = vpop.f32.mrb[0].mxu0
    %1084 = vdwg.mxu0
    %v1085 = vld [vmem:[%s47] sm:$0xff]
    %v1086 = vld [vmem:[%s47 + $0x8] sm:$0xff]
    %v1087 = vld [vmem:[%s47 + $0x10] sm:$0xff]
    %v1088 = vld [vmem:[%s47 + $0x18] sm:$0xff]
    %v1089 = vld [vmem:[%s49] sm:$0xff]
    %v1090 = vld [vmem:[%s49 + $0x8] sm:$0xff]
    %v1091 = vld [vmem:[%s49 + $0x10] sm:$0xff]
    %v1092 = vld [vmem:[%s49 + $0x18] sm:$0xff]
    %vm1093 = vcmask 261120
    %v1095 = vsel %vm1093, %v924, 0
    %v1098 = vsel %vm1093, %v929, 0
    %1100 = vmatprep.subr.mxu0 0.0
    %1101 = vmatpush1.msra.mxu0 %v1089
    %1102 = vmatprep.subr.mxu0 0.0
    %1103 = vmatpush1.msra.mxu0 %v1090
    %1104 = vmatprep.subr.mxu0 0.0
    %1105 = vmatpush1.msra.mxu0 %v1091
    %1106 = vmatprep.subr.mxu0 0.0
    %1107 = vmatpush1.msra.mxu0 %v1092
    %1108 = vmatprep.subr.mxu0 0.0
    %1109 = vmatpush1.msra.mxu0 0.0
    %1110 = vmatprep.subr.mxu0 0.0
    %1111 = vmatpush1.msra.mxu0 0.0
    %1112 = vmatprep.subr.mxu0 0.0
    %1113 = vmatpush1.msra.mxu0 0.0
    %1114 = vmatprep.subr.mxu0 0.0
    %1115 = vmatpush1.msra.mxu0 0.0
    %1116 = vmatprep.subr.mxu0 0.0
    %1117 = vmatpush1.msra.mxu0 0.0
    %1118 = vmatprep.subr.mxu0 0.0
    %1119 = vmatpush1.msra.mxu0 0.0
    %1120 = vmatprep.subr.mxu0 0.0
    %1121 = vmatpush1.msra.mxu0 0.0
    %1122 = vmatprep.subr.mxu0 0.0
    %1123 = vmatpush1.msra.mxu0 0.0
    %1124 = vmatprep.subr.mxu0 0.0
    %1125 = vmatpush1.msra.mxu0 0.0
    %1126 = vmatprep.subr.mxu0 0.0
    %1127 = vmatpush1.msra.mxu0 0.0
    %1128 = vmatprep.subr.mxu0 0.0
    %1129 = vmatpush1.msra.mxu0 0.0
    %1130 = vmatprep.subr.mxu0 0.0
    %1131 = vmatpush1.msra.mxu0 0.0
    %1132 = vmatprep.subr.mxu0 0.0
    %1133 = vmatpush1.msra.mxu0 0.0
    %1134 = vmatprep.subr.mxu0 0.0
    %1135 = vmatpush1.msra.mxu0 0.0
    %1136 = vmatprep.subr.mxu0 0.0
    %1137 = vmatpush1.msra.mxu0 0.0
    %1138 = vmatprep.subr.mxu0 0.0
    %1139 = vmatpush1.msra.mxu0 0.0
    %1140 = vmatprep.subr.mxu0 0.0
    %1141 = vmatpush1.msra.mxu0 0.0
    %1142 = vmatprep.subr.mxu0 0.0
    %1143 = vmatpush1.msra.mxu0 0.0
    %1144 = vmatprep.subr.mxu0 0.0
    %1145 = vmatpush1.msra.mxu0 0.0
    %1146 = vmatprep.subr.mxu0 0.0
    %1147 = vmatpush1.msra.mxu0 0.0
    %1148 = vmatprep.subr.mxu0 0.0
    %1149 = vmatpush1.msra.mxu0 0.0
    %1150 = vmatprep.subr.mxu0 0.0
    %1151 = vmatpush1.msra.mxu0 0.0
    %1152 = vmatprep.subr.mxu0 0.0
    %1153 = vmatpush1.msra.mxu0 0.0
    %1154 = vmatprep.subr.mxu0 0.0
    %1155 = vmatpush1.msra.mxu0 0.0
    %1156 = vmatprep.subr.mxu0 0.0
    %1157 = vmatpush1.msra.mxu0 0.0
    %1158 = vmatprep.subr.mxu0 0.0
    %1159 = vmatpush1.msra.mxu0 0.0
    %1160 = vmatprep.subr.mxu0 0.0
    %1161 = vmatpush1.msra.mxu0 0.0
    %1162 = vmatprep.subr.mxu0 0.0
    %1163 = vmatpush1.msra.mxu0 0.0
    %1164 = vmatprep.mubr.f32.mxu0 0.0
    %1165 = vmatmul.mubr.f32.gmra.mrb[0].mxu0 %v1095
    %v1166 = vpop.f32.mrb[0].mxu0
    %v1167 = vadd.f32 0.0, %v1166
    %v1168 = vpop.f32.mrb[0].mxu0
    %1169 = vmatprep.mubr.f32.mxu0 0.0
    %1170 = vmatmul.mubr.f32.gmra.mrb[0].mxu0 %v1098
    %v1171 = vpop.f32.mrb[0].mxu0
    %v1172 = vadd.f32 0.0, %v1171
    %v1173 = vpop.f32.mrb[0].mxu0
    %1174 = vdwg.mxu0
    %v1176 = vsel %vm1093, %v843, 0
    %v1179 = vsel %vm1093, %v848, 0
    %1181 = vmatprep.subr.mxu0 0.0
    %1182 = vmatpush1.msra.mxu0 %v1085
    %1183 = vmatprep.subr.mxu0 0.0
    %1184 = vmatpush1.msra.mxu0 %v1086
    %1185 = vmatprep.subr.mxu0 0.0
    %1186 = vmatpush1.msra.mxu0 %v1087
    %1187 = vmatprep.subr.mxu0 0.0
    %1188 = vmatpush1.msra.mxu0 %v1088
    %1189 = vmatprep.subr.mxu0 0.0
    %1190 = vmatpush1.msra.mxu0 0.0
    %1191 = vmatprep.subr.mxu0 0.0
    %1192 = vmatpush1.msra.mxu0 0.0
    %1193 = vmatprep.subr.mxu0 0.0
    %1194 = vmatpush1.msra.mxu0 0.0
    %1195 = vmatprep.subr.mxu0 0.0
    %1196 = vmatpush1.msra.mxu0 0.0
    %1197 = vmatprep.subr.mxu0 0.0
    %1198 = vmatpush1.msra.mxu0 0.0
    %1199 = vmatprep.subr.mxu0 0.0
    %1200 = vmatpush1.msra.mxu0 0.0
    %1201 = vmatprep.subr.mxu0 0.0
    %1202 = vmatpush1.msra.mxu0 0.0
    %1203 = vmatprep.subr.mxu0 0.0
    %1204 = vmatpush1.msra.mxu0 0.0
    %1205 = vmatprep.subr.mxu0 0.0
    %1206 = vmatpush1.msra.mxu0 0.0
    %1207 = vmatprep.subr.mxu0 0.0
    %1208 = vmatpush1.msra.mxu0 0.0
    %1209 = vmatprep.subr.mxu0 0.0
    %1210 = vmatpush1.msra.mxu0 0.0
    %1211 = vmatprep.subr.mxu0 0.0
    %1212 = vmatpush1.msra.mxu0 0.0
    %1213 = vmatprep.subr.mxu0 0.0
    %1214 = vmatpush1.msra.mxu0 0.0
    %1215 = vmatprep.subr.mxu0 0.0
    %1216 = vmatpush1.msra.mxu0 0.0
    %1217 = vmatprep.subr.mxu0 0.0
    %1218 = vmatpush1.msra.mxu0 0.0
    %1219 = vmatprep.subr.mxu0 0.0
    %1220 = vmatpush1.msra.mxu0 0.0
    %1221 = vmatprep.subr.mxu0 0.0
    %1222 = vmatpush1.msra.mxu0 0.0
    %1223 = vmatprep.subr.mxu0 0.0
    %1224 = vmatpush1.msra.mxu0 0.0
    %1225 = vmatprep.subr.mxu0 0.0
    %1226 = vmatpush1.msra.mxu0 0.0
    %1227 = vmatprep.subr.mxu0 0.0
    %1228 = vmatpush1.msra.mxu0 0.0
    %1229 = vmatprep.subr.mxu0 0.0
    %1230 = vmatpush1.msra.mxu0 0.0
    %1231 = vmatprep.subr.mxu0 0.0
    %1232 = vmatpush1.msra.mxu0 0.0
    %1233 = vmatprep.subr.mxu0 0.0
    %1234 = vmatpush1.msra.mxu0 0.0
    %1235 = vmatprep.subr.mxu0 0.0
    %1236 = vmatpush1.msra.mxu0 0.0
    %1237 = vmatprep.subr.mxu0 0.0
    %1238 = vmatpush1.msra.mxu0 0.0
    %1239 = vmatprep.subr.mxu0 0.0
    %1240 = vmatpush1.msra.mxu0 0.0
    %1241 = vmatprep.subr.mxu0 0.0
    %1242 = vmatpush1.msra.mxu0 0.0
    %1243 = vmatprep.subr.mxu0 0.0
    %1244 = vmatpush1.msra.mxu0 0.0
    %1245 = vmatprep.mubr.f32.mxu0 0.0
    %1246 = vmatmul.mubr.f32.gmra.mrb[0].mxu0 %v1176
    %v1247 = vpop.f32.mrb[0].mxu0
    %v1248 = vadd.f32 %v1167, %v1247
    %v1249 = vpop.f32.mrb[0].mxu0
    %1250 = vmatprep.mubr.f32.mxu0 0.0
    %1251 = vmatmul.mubr.f32.gmra.mrb[0].mxu0 %v1179
    %v1252 = vpop.f32.mrb[0].mxu0
    %v1253 = vadd.f32 %v1172, %v1252
    %v1254 = vpop.f32.mrb[0].mxu0
    %1255 = vdwg.mxu0
    %v1256 = vld [vmem:[%s51] sm:$0xff]
    %v1257 = vld [vmem:[%s51 + $0x8] sm:$0xff]
    %v1258 = vld [vmem:[%s51 + $0x10] sm:$0xff]
    %v1259 = vld [vmem:[%s51 + $0x18] sm:$0xff]
    %v1261 = vsel %vm1093, %v1002, 0
    %v1264 = vsel %vm1093, %v1007, 0
    %1266 = vmatprep.subr.mxu0 0.0
    %1267 = vmatpush1.msra.mxu0 %v1256
    %1268 = vmatprep.subr.mxu0 0.0
    %1269 = vmatpush1.msra.mxu0 %v1257
    %1270 = vmatprep.subr.mxu0 0.0
    %1271 = vmatpush1.msra.mxu0 %v1258
    %1272 = vmatprep.subr.mxu0 0.0
    %1273 = vmatpush1.msra.mxu0 %v1259
    %1274 = vmatprep.subr.mxu0 0.0
    %1275 = vmatpush1.msra.mxu0 0.0
    %1276 = vmatprep.subr.mxu0 0.0
    %1277 = vmatpush1.msra.mxu0 0.0
    %1278 = vmatprep.subr.mxu0 0.0
    %1279 = vmatpush1.msra.mxu0 0.0
    %1280 = vmatprep.subr.mxu0 0.0
    %1281 = vmatpush1.msra.mxu0 0.0
    %1282 = vmatprep.subr.mxu0 0.0
    %1283 = vmatpush1.msra.mxu0 0.0
    %1284 = vmatprep.subr.mxu0 0.0
    %1285 = vmatpush1.msra.mxu0 0.0
    %1286 = vmatprep.subr.mxu0 0.0
    %1287 = vmatpush1.msra.mxu0 0.0
    %1288 = vmatprep.subr.mxu0 0.0
    %1289 = vmatpush1.msra.mxu0 0.0
    %1290 = vmatprep.subr.mxu0 0.0
    %1291 = vmatpush1.msra.mxu0 0.0
    %1292 = vmatprep.subr.mxu0 0.0
    %1293 = vmatpush1.msra.mxu0 0.0
    %1294 = vmatprep.subr.mxu0 0.0
    %1295 = vmatpush1.msra.mxu0 0.0
    %1296 = vmatprep.subr.mxu0 0.0
    %1297 = vmatpush1.msra.mxu0 0.0
    %1298 = vmatprep.subr.mxu0 0.0
    %1299 = vmatpush1.msra.mxu0 0.0
    %1300 = vmatprep.subr.mxu0 0.0
    %1301 = vmatpush1.msra.mxu0 0.0
    %1302 = vmatprep.subr.mxu0 0.0
    %1303 = vmatpush1.msra.mxu0 0.0
    %1304 = vmatprep.subr.mxu0 0.0
    %1305 = vmatpush1.msra.mxu0 0.0
    %1306 = vmatprep.subr.mxu0 0.0
    %1307 = vmatpush1.msra.mxu0 0.0
    %1308 = vmatprep.subr.mxu0 0.0
    %1309 = vmatpush1.msra.mxu0 0.0
    %1310 = vmatprep.subr.mxu0 0.0
    %1311 = vmatpush1.msra.mxu0 0.0
    %1312 = vmatprep.subr.mxu0 0.0
    %1313 = vmatpush1.msra.mxu0 0.0
    %1314 = vmatprep.subr.mxu0 0.0
    %1315 = vmatpush1.msra.mxu0 0.0
    %1316 = vmatprep.subr.mxu0 0.0
    %1317 = vmatpush1.msra.mxu0 0.0
    %1318 = vmatprep.subr.mxu0 0.0
    %1319 = vmatpush1.msra.mxu0 0.0
    %1320 = vmatprep.subr.mxu0 0.0
    %1321 = vmatpush1.msra.mxu0 0.0
    %1322 = vmatprep.subr.mxu0 0.0
    %1323 = vmatpush1.msra.mxu0 0.0
    %1324 = vmatprep.subr.mxu0 0.0
    %1325 = vmatpush1.msra.mxu0 0.0
    %1326 = vmatprep.subr.mxu0 0.0
    %1327 = vmatpush1.msra.mxu0 0.0
    %1328 = vmatprep.subr.mxu0 0.0
    %1329 = vmatpush1.msra.mxu0 0.0
    %1330 = vmatprep.mubr.f32.mxu0 0.0
    %1331 = vmatmul.mubr.f32.gmra.mrb[0].mxu0 %v1261
    %v1332 = vpop.f32.mrb[0].mxu0
    %v1333 = vadd.f32 0.0, %v1332
    %v1334 = vpop.f32.mrb[0].mxu0
    %1335 = vmatprep.mubr.f32.mxu0 0.0
    %1336 = vmatmul.mubr.f32.gmra.mrb[0].mxu0 %v1264
    %v1337 = vpop.f32.mrb[0].mxu0
    %v1338 = vadd.f32 0.0, %v1337
    %v1339 = vpop.f32.mrb[0].mxu0
    %1340 = vdwg.mxu0
    %v1341 = vadd.f32 %v1248, %v1333
    %v1342 = vadd.f32 %v1253, %v1338
    %v1343 = vld [vmem:[%s53] sm:$0xff]
    %v1344 = vld [vmem:[%s53 + $0x8] sm:$0xff]
    %v1345 = vld [vmem:[%s53 + $0x10] sm:$0xff]
    %v1346 = vld [vmem:[%s53 + $0x18] sm:$0xff]
    %v1348 = vsel %vm1093, %v1077, 0
    %v1351 = vsel %vm1093, %v1082, 0
    %1353 = vmatprep.subr.mxu0 0.0
    %1354 = vmatpush1.msra.mxu0 %v1343
    %1355 = vmatprep.subr.mxu0 0.0
    %1356 = vmatpush1.msra.mxu0 %v1344
    %1357 = vmatprep.subr.mxu0 0.0
    %1358 = vmatpush1.msra.mxu0 %v1345
    %1359 = vmatprep.subr.mxu0 0.0
    %1360 = vmatpush1.msra.mxu0 %v1346
    %1361 = vmatprep.subr.mxu0 0.0
    %1362 = vmatpush1.msra.mxu0 0.0
    %1363 = vmatprep.subr.mxu0 0.0
    %1364 = vmatpush1.msra.mxu0 0.0
    %1365 = vmatprep.subr.mxu0 0.0
    %1366 = vmatpush1.msra.mxu0 0.0
    %1367 = vmatprep.subr.mxu0 0.0
    %1368 = vmatpush1.msra.mxu0 0.0
    %1369 = vmatprep.subr.mxu0 0.0
    %1370 = vmatpush1.msra.mxu0 0.0
    %1371 = vmatprep.subr.mxu0 0.0
    %1372 = vmatpush1.msra.mxu0 0.0
    %1373 = vmatprep.subr.mxu0 0.0
    %1374 = vmatpush1.msra.mxu0 0.0
    %1375 = vmatprep.subr.mxu0 0.0
    %1376 = vmatpush1.msra.mxu0 0.0
    %1377 = vmatprep.subr.mxu0 0.0
    %1378 = vmatpush1.msra.mxu0 0.0
    %1379 = vmatprep.subr.mxu0 0.0
    %1380 = vmatpush1.msra.mxu0 0.0
    %1381 = vmatprep.subr.mxu0 0.0
    %1382 = vmatpush1.msra.mxu0 0.0
    %1383 = vmatprep.subr.mxu0 0.0
    %1384 = vmatpush1.msra.mxu0 0.0
    %1385 = vmatprep.subr.mxu0 0.0
    %1386 = vmatpush1.msra.mxu0 0.0
    %1387 = vmatprep.subr.mxu0 0.0
    %1388 = vmatpush1.msra.mxu0 0.0
    %1389 = vmatprep.subr.mxu0 0.0
    %1390 = vmatpush1.msra.mxu0 0.0
    %1391 = vmatprep.subr.mxu0 0.0
    %1392 = vmatpush1.msra.mxu0 0.0
    %1393 = vmatprep.subr.mxu0 0.0
    %1394 = vmatpush1.msra.mxu0 0.0
    %1395 = vmatprep.subr.mxu0 0.0
    %1396 = vmatpush1.msra.mxu0 0.0
    %1397 = vmatprep.subr.mxu0 0.0
    %1398 = vmatpush1.msra.mxu0 0.0
    %1399 = vmatprep.subr.mxu0 0.0
    %1400 = vmatpush1.msra.mxu0 0.0
    %1401 = vmatprep.subr.mxu0 0.0
    %1402 = vmatpush1.msra.mxu0 0.0
    %1403 = vmatprep.subr.mxu0 0.0
    %1404 = vmatpush1.msra.mxu0 0.0
    %1405 = vmatprep.subr.mxu0 0.0
    %1406 = vmatpush1.msra.mxu0 0.0
    %1407 = vmatprep.subr.mxu0 0.0
    %1408 = vmatpush1.msra.mxu0 0.0
    %1409 = vmatprep.subr.mxu0 0.0
    %1410 = vmatpush1.msra.mxu0 0.0
    %1411 = vmatprep.subr.mxu0 0.0
    %1412 = vmatpush1.msra.mxu0 0.0
    %1413 = vmatprep.subr.mxu0 0.0
    %1414 = vmatpush1.msra.mxu0 0.0
    %1415 = vmatprep.subr.mxu0 0.0
    %1416 = vmatpush1.msra.mxu0 0.0
    %1417 = vmatprep.mubr.f32.mxu0 0.0
    %1418 = vmatmul.mubr.f32.gmra.mrb[0].mxu0 %v1348
    %v1419 = vpop.f32.mrb[0].mxu0
    %v1420 = vadd.f32 0.0, %v1419
    %v1421 = vpop.f32.mrb[0].mxu0
    %1422 = vmatprep.mubr.f32.mxu0 0.0
    %1423 = vmatmul.mubr.f32.gmra.mrb[0].mxu0 %v1351
    %v1424 = vpop.f32.mrb[0].mxu0
    %v1425 = vadd.f32 0.0, %v1424
    %v1426 = vpop.f32.mrb[0].mxu0
    %1427 = vdwg.mxu0
    %v1428 = vadd.f32 %v1341, %v1420
    %v1429 = vadd.f32 %v1342, %v1425
    %v1430 = vld [vmem:[#allocation26] sm:$0x1]
    %v1432 = vlaneseq
    %v1433 = vshrl.u32 %v1432, 7
    %v1434 = vsub.s32 0, %v1433
    %v1435 = vrot.slane %v1430, %v1434
    %v1437 = vadd.f32 %v1428, %v1435
    %v1438 = vadd.f32 %v1429, %v1435
    %v1439 = vmax.f32 %v1437, 0.0
    %v1440 = vmax.f32 %v1438, 0.0
    %v1441 = vld [vmem:[%s57] sm:$0xff]
    %v1442 = vld [vmem:[%s57 + $0x8] sm:$0xff]
    %v1443 = vld [vmem:[%s57 + $0x10] sm:$0xff]
    %v1444 = vld [vmem:[%s57 + $0x18] sm:$0xff]
    %v1445 = vld [vmem:[#allocation27] sm:$0x1]
    %v1447 = vlaneseq
    %v1448 = vshrl.u32 %v1447, 7
    %v1449 = vsub.s32 0, %v1448
    %v1450 = vrot.slane %v1445, %v1449
    %v1453 = vsel %vm1093, %v1439, 0
    %v1456 = vsel %vm1093, %v1440, 0
    %1458 = vmatprep.subr.mxu0 0.0
    %1459 = vmatpush1.msra.mxu0 %v1441
    %1460 = vmatprep.subr.mxu0 0.0
    %1461 = vmatpush1.msra.mxu0 %v1442
    %1462 = vmatprep.subr.mxu0 0.0
    %1463 = vmatpush1.msra.mxu0 %v1443
    %1464 = vmatprep.subr.mxu0 0.0
    %1465 = vmatpush1.msra.mxu0 %v1444
    %1466 = vmatprep.subr.mxu0 0.0
    %1467 = vmatpush1.msra.mxu0 0.0
    %1468 = vmatprep.subr.mxu0 0.0
    %1469 = vmatpush1.msra.mxu0 0.0
    %1470 = vmatprep.subr.mxu0 0.0
    %1471 = vmatpush1.msra.mxu0 0.0
    %1472 = vmatprep.subr.mxu0 0.0
    %1473 = vmatpush1.msra.mxu0 0.0
    %1474 = vmatprep.subr.mxu0 0.0
    %1475 = vmatpush1.msra.mxu0 0.0
    %1476 = vmatprep.subr.mxu0 0.0
    %1477 = vmatpush1.msra.mxu0 0.0
    %1478 = vmatprep.subr.mxu0 0.0
    %1479 = vmatpush1.msra.mxu0 0.0
    %1480 = vmatprep.subr.mxu0 0.0
    %1481 = vmatpush1.msra.mxu0 0.0
    %1482 = vmatprep.subr.mxu0 0.0
    %1483 = vmatpush1.msra.mxu0 0.0
    %1484 = vmatprep.subr.mxu0 0.0
    %1485 = vmatpush1.msra.mxu0 0.0
    %1486 = vmatprep.subr.mxu0 0.0
    %1487 = vmatpush1.msra.mxu0 0.0
    %1488 = vmatprep.subr.mxu0 0.0
    %1489 = vmatpush1.msra.mxu0 0.0
    %1490 = vmatprep.subr.mxu0 0.0
    %1491 = vmatpush1.msra.mxu0 0.0
    %1492 = vmatprep.subr.mxu0 0.0
    %1493 = vmatpush1.msra.mxu0 0.0
    %1494 = vmatprep.subr.mxu0 0.0
    %1495 = vmatpush1.msra.mxu0 0.0
    %1496 = vmatprep.subr.mxu0 0.0
    %1497 = vmatpush1.msra.mxu0 0.0
    %1498 = vmatprep.subr.mxu0 0.0
    %1499 = vmatpush1.msra.mxu0 0.0
    %1500 = vmatprep.subr.mxu0 0.0
    %1501 = vmatpush1.msra.mxu0 0.0
    %1502 = vmatprep.subr.mxu0 0.0
    %1503 = vmatpush1.msra.mxu0 0.0
    %1504 = vmatprep.subr.mxu0 0.0
    %1505 = vmatpush1.msra.mxu0 0.0
    %1506 = vmatprep.subr.mxu0 0.0
    %1507 = vmatpush1.msra.mxu0 0.0
    %1508 = vmatprep.subr.mxu0 0.0
    %1509 = vmatpush1.msra.mxu0 0.0
    %1510 = vmatprep.subr.mxu0 0.0
    %1511 = vmatpush1.msra.mxu0 0.0
    %1512 = vmatprep.subr.mxu0 0.0
    %1513 = vmatpush1.msra.mxu0 0.0
    %1514 = vmatprep.subr.mxu0 0.0
    %1515 = vmatpush1.msra.mxu0 0.0
    %1516 = vmatprep.subr.mxu0 0.0
    %1517 = vmatpush1.msra.mxu0 0.0
    %1518 = vmatprep.subr.mxu0 0.0
    %1519 = vmatpush1.msra.mxu0 0.0
    %1520 = vmatprep.subr.mxu0 0.0
    %1521 = vmatpush1.msra.mxu0 0.0
    %1522 = vmatprep.mubr.f32.mxu0 0.0
    %1523 = vmatmul.mubr.f32.gmra.mrb[0].mxu0 %v1453
    %v1524 = vpop.f32.mrb[0].mxu0
    %v1525 = vadd.f32 %v1450, %v1524
    %v1526 = vpop.f32.mrb[0].mxu0
    %1527 = vmatprep.mubr.f32.mxu0 0.0
    %1528 = vmatmul.mubr.f32.gmra.mrb[0].mxu0 %v1456
    %v1529 = vpop.f32.mrb[0].mxu0
    %v1530 = vadd.f32 %v1450, %v1529
    %v1531 = vpop.f32.mrb[0].mxu0
    %1532 = vdwg.mxu0
    %v1533 = vmax.f32 %v1525, 0.0
    %v1534 = vmax.f32 %v1530, 0.0
    %v1535 = vld [vmem:[%s61] sm:$0xff]
    %v1536 = vld [vmem:[%s61 + $0x8] sm:$0xff]
    %v1537 = vld [vmem:[%s61 + $0x10] sm:$0xff]
    %v1538 = vld [vmem:[%s61 + $0x18] sm:$0xff]
    %v1539 = vld [vmem:[#allocation29] sm:$0x1]
    %v1541 = vlaneseq
    %v1542 = vshrl.u32 %v1541, 7
    %v1543 = vsub.s32 0, %v1542
    %v1544 = vrot.slane %v1539, %v1543
    %v1547 = vsel %vm1093, %v1533, 0
    %v1550 = vsel %vm1093, %v1534, 0
    %1552 = vmatprep.subr.mxu0 0.0
    %1553 = vmatpush1.msra.mxu0 %v1535
    %1554 = vmatprep.subr.mxu0 0.0
    %1555 = vmatpush1.msra.mxu0 %v1536
    %1556 = vmatprep.subr.mxu0 0.0
    %1557 = vmatpush1.msra.mxu0 %v1537
    %1558 = vmatprep.subr.mxu0 0.0
    %1559 = vmatpush1.msra.mxu0 %v1538
    %1560 = vmatprep.subr.mxu0 0.0
    %1561 = vmatpush1.msra.mxu0 0.0
    %1562 = vmatprep.subr.mxu0 0.0
    %1563 = vmatpush1.msra.mxu0 0.0
    %1564 = vmatprep.subr.mxu0 0.0
    %1565 = vmatpush1.msra.mxu0 0.0
    %1566 = vmatprep.subr.mxu0 0.0
    %1567 = vmatpush1.msra.mxu0 0.0
    %1568 = vmatprep.subr.mxu0 0.0
    %1569 = vmatpush1.msra.mxu0 0.0
    %1570 = vmatprep.subr.mxu0 0.0
    %1571 = vmatpush1.msra.mxu0 0.0
    %1572 = vmatprep.subr.mxu0 0.0
    %1573 = vmatpush1.msra.mxu0 0.0
    %1574 = vmatprep.subr.mxu0 0.0
    %1575 = vmatpush1.msra.mxu0 0.0
    %1576 = vmatprep.subr.mxu0 0.0
    %1577 = vmatpush1.msra.mxu0 0.0
    %1578 = vmatprep.subr.mxu0 0.0
    %1579 = vmatpush1.msra.mxu0 0.0
    %1580 = vmatprep.subr.mxu0 0.0
    %1581 = vmatpush1.msra.mxu0 0.0
    %1582 = vmatprep.subr.mxu0 0.0
    %1583 = vmatpush1.msra.mxu0 0.0
    %1584 = vmatprep.subr.mxu0 0.0
    %1585 = vmatpush1.msra.mxu0 0.0
    %1586 = vmatprep.subr.mxu0 0.0
    %1587 = vmatpush1.msra.mxu0 0.0
    %1588 = vmatprep.subr.mxu0 0.0
    %1589 = vmatpush1.msra.mxu0 0.0
    %1590 = vmatprep.subr.mxu0 0.0
    %1591 = vmatpush1.msra.mxu0 0.0
    %1592 = vmatprep.subr.mxu0 0.0
    %1593 = vmatpush1.msra.mxu0 0.0
    %1594 = vmatprep.subr.mxu0 0.0
    %1595 = vmatpush1.msra.mxu0 0.0
    %1596 = vmatprep.subr.mxu0 0.0
    %1597 = vmatpush1.msra.mxu0 0.0
    %1598 = vmatprep.subr.mxu0 0.0
    %1599 = vmatpush1.msra.mxu0 0.0
    %1600 = vmatprep.subr.mxu0 0.0
    %1601 = vmatpush1.msra.mxu0 0.0
    %1602 = vmatprep.subr.mxu0 0.0
    %1603 = vmatpush1.msra.mxu0 0.0
    %1604 = vmatprep.subr.mxu0 0.0
    %1605 = vmatpush1.msra.mxu0 0.0
    %1606 = vmatprep.subr.mxu0 0.0
    %1607 = vmatpush1.msra.mxu0 0.0
    %1608 = vmatprep.subr.mxu0 0.0
    %1609 = vmatpush1.msra.mxu0 0.0
    %1610 = vmatprep.subr.mxu0 0.0
    %1611 = vmatpush1.msra.mxu0 0.0
    %1612 = vmatprep.subr.mxu0 0.0
    %1613 = vmatpush1.msra.mxu0 0.0
    %1614 = vmatprep.subr.mxu0 0.0
    %1615 = vmatpush1.msra.mxu0 0.0
    %1616 = vmatprep.mubr.f32.mxu0 0.0
    %1617 = vmatmul.mubr.f32.gmra.mrb[0].mxu0 %v1547
    %v1618 = vpop.f32.mrb[0].mxu0
    %v1619 = vadd.f32 %v1544, %v1618
    %v1620 = vpop.f32.mrb[0].mxu0
    %1621 = vmatprep.mubr.f32.mxu0 0.0
    %1622 = vmatmul.mubr.f32.gmra.mrb[0].mxu0 %v1550
    %v1623 = vpop.f32.mrb[0].mxu0
    %v1624 = vadd.f32 %v1544, %v1623
    %v1625 = vpop.f32.mrb[0].mxu0
    %1626 = vdwg.mxu0
    %v1627 = vmax.f32 %v1619, 0.0
    %v1628 = vmax.f32 %v1624, 0.0
    %v1630 = vsel %vm772, %v571, 0
    %1632 = vmatprep.subr.mxu0 0.0
    %1633 = vmatpush1.msra.mxu0 %v570
    %1634 = vmatprep.subr.mxu0 0.0
    %1635 = vmatpush1.msra.mxu0 %v1630
    %1636 = vmatprep.subr.mxu0 0.0
    %1637 = vmatpush1.msra.mxu0 0.0
    %1638 = vmatprep.subr.mxu0 0.0
    %1639 = vmatpush1.msra.mxu0 0.0
    %1640 = vmatprep.subr.mxu0 0.0
    %1641 = vmatpush1.msra.mxu0 0.0
    %1642 = vmatprep.subr.mxu0 0.0
    %1643 = vmatpush1.msra.mxu0 0.0
    %1644 = vmatprep.subr.mxu0 0.0
    %1645 = vmatpush1.msra.mxu0 0.0
    %1646 = vmatprep.subr.mxu0 0.0
    %1647 = vmatpush1.msra.mxu0 0.0
    %1648 = vmatprep.subr.mxu0 0.0
    %1649 = vmatpush1.msra.mxu0 0.0
    %1650 = vmatprep.subr.mxu0 0.0
    %1651 = vmatpush1.msra.mxu0 0.0
    %1652 = vmatprep.subr.mxu0 0.0
    %1653 = vmatpush1.msra.mxu0 0.0
    %1654 = vmatprep.subr.mxu0 0.0
    %1655 = vmatpush1.msra.mxu0 0.0
    %1656 = vmatprep.subr.mxu0 0.0
    %1657 = vmatpush1.msra.mxu0 0.0
    %1658 = vmatprep.subr.mxu0 0.0
    %1659 = vmatpush1.msra.mxu0 0.0
    %1660 = vmatprep.subr.mxu0 0.0
    %1661 = vmatpush1.msra.mxu0 0.0
    %1662 = vmatprep.subr.mxu0 0.0
    %1663 = vmatpush1.msra.mxu0 0.0
    %1664 = vmatprep.subr.mxu0 0.0
    %1665 = vmatpush1.msra.mxu0 0.0
    %1666 = vmatprep.subr.mxu0 0.0
    %1667 = vmatpush1.msra.mxu0 0.0
    %1668 = vmatprep.subr.mxu0 0.0
    %1669 = vmatpush1.msra.mxu0 0.0
    %1670 = vmatprep.subr.mxu0 0.0
    %1671 = vmatpush1.msra.mxu0 0.0
    %1672 = vmatprep.subr.mxu0 0.0
    %1673 = vmatpush1.msra.mxu0 0.0
    %1674 = vmatprep.subr.mxu0 0.0
    %1675 = vmatpush1.msra.mxu0 0.0
    %1676 = vmatprep.subr.mxu0 0.0
    %1677 = vmatpush1.msra.mxu0 0.0
    %1678 = vmatprep.subr.mxu0 0.0
    %1679 = vmatpush1.msra.mxu0 0.0
    %1680 = vmatprep.subr.mxu0 0.0
    %1681 = vmatpush1.msra.mxu0 0.0
    %1682 = vmatprep.subr.mxu0 0.0
    %1683 = vmatpush1.msra.mxu0 0.0
    %1684 = vmatprep.subr.mxu0 0.0
    %1685 = vmatpush1.msra.mxu0 0.0
    %1686 = vmatprep.subr.mxu0 0.0
    %1687 = vmatpush1.msra.mxu0 0.0
    %1688 = vmatprep.subr.mxu0 0.0
    %1689 = vmatpush1.msra.mxu0 0.0
    %1690 = vmatprep.subr.mxu0 0.0
    %1691 = vmatpush1.msra.mxu0 0.0
    %1692 = vmatprep.subr.mxu0 0.0
    %1693 = vmatpush1.msra.mxu0 0.0
    %1694 = vmatprep.subr.mxu0 0.0
    %1695 = vmatpush1.msra.mxu0 0.0
    %1696 = vmatprep.mubr.f32.mxu0 0.0
    %1697 = vmatmul.mubr.f32.gmra.mrb[0].mxu0 %v767
    %v1698 = vpop.f32.mrb[0].mxu0
    %v1699 = vadd.f32 0.0, %v1698
    %v1700 = vpop.f32.mrb[0].mxu0
    %1701 = vmatprep.mubr.f32.mxu0 0.0
    %1702 = vmatmul.mubr.f32.gmra.mrb[0].mxu0 %v770
    %v1703 = vpop.f32.mrb[0].mxu0
    %v1704 = vadd.f32 0.0, %v1703
    %v1705 = vpop.f32.mrb[0].mxu0
    %1706 = vdwg.mxu0
    %1707 = vmatprep.subr.mxu0 0.0
    %1708 = vmatpush1.msra.mxu0 %v570
    %1709 = vmatprep.subr.mxu0 0.0
    %1710 = vmatpush1.msra.mxu0 %v1630
    %1711 = vmatprep.subr.mxu0 0.0
    %1712 = vmatpush1.msra.mxu0 0.0
    %1713 = vmatprep.subr.mxu0 0.0
    %1714 = vmatpush1.msra.mxu0 0.0
    %1715 = vmatprep.subr.mxu0 0.0
    %1716 = vmatpush1.msra.mxu0 0.0
    %1717 = vmatprep.subr.mxu0 0.0
    %1718 = vmatpush1.msra.mxu0 0.0
    %1719 = vmatprep.subr.mxu0 0.0
    %1720 = vmatpush1.msra.mxu0 0.0
    %1721 = vmatprep.subr.mxu0 0.0
    %1722 = vmatpush1.msra.mxu0 0.0
    %1723 = vmatprep.subr.mxu0 0.0
    %1724 = vmatpush1.msra.mxu0 0.0
    %1725 = vmatprep.subr.mxu0 0.0
    %1726 = vmatpush1.msra.mxu0 0.0
    %1727 = vmatprep.subr.mxu0 0.0
    %1728 = vmatpush1.msra.mxu0 0.0
    %1729 = vmatprep.subr.mxu0 0.0
    %1730 = vmatpush1.msra.mxu0 0.0
    %1731 = vmatprep.subr.mxu0 0.0
    %1732 = vmatpush1.msra.mxu0 0.0
    %1733 = vmatprep.subr.mxu0 0.0
    %1734 = vmatpush1.msra.mxu0 0.0
    %1735 = vmatprep.subr.mxu0 0.0
    %1736 = vmatpush1.msra.mxu0 0.0
    %1737 = vmatprep.subr.mxu0 0.0
    %1738 = vmatpush1.msra.mxu0 0.0
    %1739 = vmatprep.subr.mxu0 0.0
    %1740 = vmatpush1.msra.mxu0 0.0
    %1741 = vmatprep.subr.mxu0 0.0
    %1742 = vmatpush1.msra.mxu0 0.0
    %1743 = vmatprep.subr.mxu0 0.0
    %1744 = vmatpush1.msra.mxu0 0.0
    %1745 = vmatprep.subr.mxu0 0.0
    %1746 = vmatpush1.msra.mxu0 0.0
    %1747 = vmatprep.subr.mxu0 0.0
    %1748 = vmatpush1.msra.mxu0 0.0
    %1749 = vmatprep.subr.mxu0 0.0
    %1750 = vmatpush1.msra.mxu0 0.0
    %1751 = vmatprep.subr.mxu0 0.0
    %1752 = vmatpush1.msra.mxu0 0.0
    %1753 = vmatprep.subr.mxu0 0.0
    %1754 = vmatpush1.msra.mxu0 0.0
    %1755 = vmatprep.subr.mxu0 0.0
    %1756 = vmatpush1.msra.mxu0 0.0
    %1757 = vmatprep.subr.mxu0 0.0
    %1758 = vmatpush1.msra.mxu0 0.0
    %1759 = vmatprep.subr.mxu0 0.0
    %1760 = vmatpush1.msra.mxu0 0.0
    %1761 = vmatprep.subr.mxu0 0.0
    %1762 = vmatpush1.msra.mxu0 0.0
    %1763 = vmatprep.subr.mxu0 0.0
    %1764 = vmatpush1.msra.mxu0 0.0
    %1765 = vmatprep.subr.mxu0 0.0
    %1766 = vmatpush1.msra.mxu0 0.0
    %1767 = vmatprep.subr.mxu0 0.0
    %1768 = vmatpush1.msra.mxu0 0.0
    %1769 = vmatprep.subr.mxu0 0.0
    %1770 = vmatpush1.msra.mxu0 0.0
    %1771 = vmatprep.mubr.f32.mxu0 0.0
    %1772 = vmatmul.mubr.f32.gmra.mrb[0].mxu0 %v852
    %v1773 = vpop.f32.mrb[0].mxu0
    %v1774 = vadd.f32 0.0, %v1773
    %v1775 = vpop.f32.mrb[0].mxu0
    %1776 = vmatprep.mubr.f32.mxu0 0.0
    %1777 = vmatmul.mubr.f32.gmra.mrb[0].mxu0 %v855
    %v1778 = vpop.f32.mrb[0].mxu0
    %v1779 = vadd.f32 0.0, %v1778
    %v1780 = vpop.f32.mrb[0].mxu0
    %1781 = vdwg.mxu0
    %1784 = vrot.lane.b32.xlu0 %v1774, 32
    %v1785 = vpop.permute.xlu0 %1784
    %1786 = vrot.lane.b32.xlu0 %v1779, 32
    %v1787 = vpop.permute.xlu0 %1786
    %v1790 = vsel %vm1093, %v1699, %v1785
    %v1791 = vsel %vm1093, %v1704, %v1787
    %v1793 = vsel %vm765, %v580, 0
    %v1796 = vsel %vm765, %v581, 0
    %1798 = vmatprep.subr.mxu0 0.0
    %1799 = vmatpush1.msra.mxu0 %v676
    %1800 = vmatprep.subr.mxu0 0.0
    %1801 = vmatpush1.msra.mxu0 %v933
    %1802 = vmatprep.subr.mxu0 0.0
    %1803 = vmatpush1.msra.mxu0 0.0
    %1804 = vmatprep.subr.mxu0 0.0
    %1805 = vmatpush1.msra.mxu0 0.0
    %1806 = vmatprep.subr.mxu0 0.0
    %1807 = vmatpush1.msra.mxu0 0.0
    %1808 = vmatprep.subr.mxu0 0.0
    %1809 = vmatpush1.msra.mxu0 0.0
    %1810 = vmatprep.subr.mxu0 0.0
    %1811 = vmatpush1.msra.mxu0 0.0
    %1812 = vmatprep.subr.mxu0 0.0
    %1813 = vmatpush1.msra.mxu0 0.0
    %1814 = vmatprep.subr.mxu0 0.0
    %1815 = vmatpush1.msra.mxu0 0.0
    %1816 = vmatprep.subr.mxu0 0.0
    %1817 = vmatpush1.msra.mxu0 0.0
    %1818 = vmatprep.subr.mxu0 0.0
    %1819 = vmatpush1.msra.mxu0 0.0
    %1820 = vmatprep.subr.mxu0 0.0
    %1821 = vmatpush1.msra.mxu0 0.0
    %1822 = vmatprep.subr.mxu0 0.0
    %1823 = vmatpush1.msra.mxu0 0.0
    %1824 = vmatprep.subr.mxu0 0.0
    %1825 = vmatpush1.msra.mxu0 0.0
    %1826 = vmatprep.subr.mxu0 0.0
    %1827 = vmatpush1.msra.mxu0 0.0
    %1828 = vmatprep.subr.mxu0 0.0
    %1829 = vmatpush1.msra.mxu0 0.0
    %1830 = vmatprep.subr.mxu0 0.0
    %1831 = vmatpush1.msra.mxu0 0.0
    %1832 = vmatprep.subr.mxu0 0.0
    %1833 = vmatpush1.msra.mxu0 0.0
    %1834 = vmatprep.subr.mxu0 0.0
    %1835 = vmatpush1.msra.mxu0 0.0
    %1836 = vmatprep.subr.mxu0 0.0
    %1837 = vmatpush1.msra.mxu0 0.0
    %1838 = vmatprep.subr.mxu0 0.0
    %1839 = vmatpush1.msra.mxu0 0.0
    %1840 = vmatprep.subr.mxu0 0.0
    %1841 = vmatpush1.msra.mxu0 0.0
    %1842 = vmatprep.subr.mxu0 0.0
    %1843 = vmatpush1.msra.mxu0 0.0
    %1844 = vmatprep.subr.mxu0 0.0
    %1845 = vmatpush1.msra.mxu0 0.0
    %1846 = vmatprep.subr.mxu0 0.0
    %1847 = vmatpush1.msra.mxu0 0.0
    %1848 = vmatprep.subr.mxu0 0.0
    %1849 = vmatpush1.msra.mxu0 0.0
    %1850 = vmatprep.subr.mxu0 0.0
    %1851 = vmatpush1.msra.mxu0 0.0
    %1852 = vmatprep.subr.mxu0 0.0
    %1853 = vmatpush1.msra.mxu0 0.0
    %1854 = vmatprep.subr.mxu0 0.0
    %1855 = vmatpush1.msra.mxu0 0.0
    %1856 = vmatprep.subr.mxu0 0.0
    %1857 = vmatpush1.msra.mxu0 0.0
    %1858 = vmatprep.subr.mxu0 0.0
    %1859 = vmatpush1.msra.mxu0 0.0
    %1860 = vmatprep.subr.mxu0 0.0
    %1861 = vmatpush1.msra.mxu0 0.0
    %1862 = vmatprep.mubr.f32.mxu0 0.0
    %1863 = vmatmul.mubr.f32.gmra.mrb[0].mxu0 %v1793
    %v1864 = vpop.f32.mrb[0].mxu0
    %v1865 = vadd.f32 0.0, %v1864
    %v1866 = vpop.f32.mrb[0].mxu0
    %1867 = vmatprep.mubr.f32.mxu0 0.0
    %1868 = vmatmul.mubr.f32.gmra.mrb[0].mxu0 %v1796
    %v1869 = vpop.f32.mrb[0].mxu0
    %v1870 = vadd.f32 0.0, %v1869
    %v1871 = vpop.f32.mrb[0].mxu0
    %1872 = vdwg.mxu0
    %v1873 = vld [vmem:[%s31] sm:$0xff]
    %v1874 = vld [vmem:[%s31 + $0x8] sm:$0xff]
    %v1875 = vld [vmem:[%s31 + $0x10] sm:$0xff]
    %v1876 = vld [vmem:[%s31 + $0x18] sm:$0xff]
    %v1877 = vld [vmem:[%s35] sm:$0xff]
    %v1878 = vld [vmem:[%s35 + $0x8] sm:$0xff]
    %v1879 = vld [vmem:[%s35 + $0x10] sm:$0xff]
    %v1880 = vld [vmem:[%s35 + $0x18] sm:$0xff]
    %v1882 = vsel %vm1093, %v1865, 0
    %v1885 = vsel %vm1093, %v1870, 0
    %1887 = vmatprep.subr.mxu0 0.0
    %1888 = vmatpush1.msra.mxu0 %v1877
    %1889 = vmatprep.subr.mxu0 0.0
    %1890 = vmatpush1.msra.mxu0 %v1878
    %1891 = vmatprep.subr.mxu0 0.0
    %1892 = vmatpush1.msra.mxu0 %v1879
    %1893 = vmatprep.subr.mxu0 0.0
    %1894 = vmatpush1.msra.mxu0 %v1880
    %1895 = vmatprep.subr.mxu0 0.0
    %1896 = vmatpush1.msra.mxu0 0.0
    %1897 = vmatprep.subr.mxu0 0.0
    %1898 = vmatpush1.msra.mxu0 0.0
    %1899 = vmatprep.subr.mxu0 0.0
    %1900 = vmatpush1.msra.mxu0 0.0
    %1901 = vmatprep.subr.mxu0 0.0
    %1902 = vmatpush1.msra.mxu0 0.0
    %1903 = vmatprep.subr.mxu0 0.0
    %1904 = vmatpush1.msra.mxu0 0.0
    %1905 = vmatprep.subr.mxu0 0.0
    %1906 = vmatpush1.msra.mxu0 0.0
    %1907 = vmatprep.subr.mxu0 0.0
    %1908 = vmatpush1.msra.mxu0 0.0
    %1909 = vmatprep.subr.mxu0 0.0
    %1910 = vmatpush1.msra.mxu0 0.0
    %1911 = vmatprep.subr.mxu0 0.0
    %1912 = vmatpush1.msra.mxu0 0.0
    %1913 = vmatprep.subr.mxu0 0.0
    %1914 = vmatpush1.msra.mxu0 0.0
    %1915 = vmatprep.subr.mxu0 0.0
    %1916 = vmatpush1.msra.mxu0 0.0
    %1917 = vmatprep.subr.mxu0 0.0
    %1918 = vmatpush1.msra.mxu0 0.0
    %1919 = vmatprep.subr.mxu0 0.0
    %1920 = vmatpush1.msra.mxu0 0.0
    %1921 = vmatprep.subr.mxu0 0.0
    %1922 = vmatpush1.msra.mxu0 0.0
    %1923 = vmatprep.subr.mxu0 0.0
    %1924 = vmatpush1.msra.mxu0 0.0
    %1925 = vmatprep.subr.mxu0 0.0
    %1926 = vmatpush1.msra.mxu0 0.0
    %1927 = vmatprep.subr.mxu0 0.0
    %1928 = vmatpush1.msra.mxu0 0.0
    %1929 = vmatprep.subr.mxu0 0.0
    %1930 = vmatpush1.msra.mxu0 0.0
    %1931 = vmatprep.subr.mxu0 0.0
    %1932 = vmatpush1.msra.mxu0 0.0
    %1933 = vmatprep.subr.mxu0 0.0
    %1934 = vmatpush1.msra.mxu0 0.0
    %1935 = vmatprep.subr.mxu0 0.0
    %1936 = vmatpush1.msra.mxu0 0.0
    %1937 = vmatprep.subr.mxu0 0.0
    %1938 = vmatpush1.msra.mxu0 0.0
    %1939 = vmatprep.subr.mxu0 0.0
    %1940 = vmatpush1.msra.mxu0 0.0
    %1941 = vmatprep.subr.mxu0 0.0
    %1942 = vmatpush1.msra.mxu0 0.0
    %1943 = vmatprep.subr.mxu0 0.0
    %1944 = vmatpush1.msra.mxu0 0.0
    %1945 = vmatprep.subr.mxu0 0.0
    %1946 = vmatpush1.msra.mxu0 0.0
    %1947 = vmatprep.subr.mxu0 0.0
    %1948 = vmatpush1.msra.mxu0 0.0
    %1949 = vmatprep.subr.mxu0 0.0
    %1950 = vmatpush1.msra.mxu0 0.0
    %1951 = vmatprep.mubr.f32.mxu0 0.0
    %1952 = vmatmul.mubr.f32.gmra.mrb[0].mxu0 %v1882
    %v1953 = vpop.f32.mrb[0].mxu0
    %v1954 = vadd.f32 0.0, %v1953
    %v1955 = vpop.f32.mrb[0].mxu0
    %1956 = vmatprep.mubr.f32.mxu0 0.0
    %1957 = vmatmul.mubr.f32.gmra.mrb[0].mxu0 %v1885
    %v1958 = vpop.f32.mrb[0].mxu0
    %v1959 = vadd.f32 0.0, %v1958
    %v1960 = vpop.f32.mrb[0].mxu0
    %1961 = vdwg.mxu0
    %v1963 = vsel %vm1093, %v676, 0
    %v1965 = vsel %vm1093, %v681, 0
    %1967 = vmatprep.subr.mxu0 0.0
    %1968 = vmatpush1.msra.mxu0 %v1873
    %1969 = vmatprep.subr.mxu0 0.0
    %1970 = vmatpush1.msra.mxu0 %v1874
    %1971 = vmatprep.subr.mxu0 0.0
    %1972 = vmatpush1.msra.mxu0 %v1875
    %1973 = vmatprep.subr.mxu0 0.0
    %1974 = vmatpush1.msra.mxu0 %v1876
    %1975 = vmatprep.subr.mxu0 0.0
    %1976 = vmatpush1.msra.mxu0 0.0
    %1977 = vmatprep.subr.mxu0 0.0
    %1978 = vmatpush1.msra.mxu0 0.0
    %1979 = vmatprep.subr.mxu0 0.0
    %1980 = vmatpush1.msra.mxu0 0.0
    %1981 = vmatprep.subr.mxu0 0.0
    %1982 = vmatpush1.msra.mxu0 0.0
    %1983 = vmatprep.subr.mxu0 0.0
    %1984 = vmatpush1.msra.mxu0 0.0
    %1985 = vmatprep.subr.mxu0 0.0
    %1986 = vmatpush1.msra.mxu0 0.0
    %1987 = vmatprep.subr.mxu0 0.0
    %1988 = vmatpush1.msra.mxu0 0.0
    %1989 = vmatprep.subr.mxu0 0.0
    %1990 = vmatpush1.msra.mxu0 0.0
    %1991 = vmatprep.subr.mxu0 0.0
    %1992 = vmatpush1.msra.mxu0 0.0
    %1993 = vmatprep.subr.mxu0 0.0
    %1994 = vmatpush1.msra.mxu0 0.0
    %1995 = vmatprep.subr.mxu0 0.0
    %1996 = vmatpush1.msra.mxu0 0.0
    %1997 = vmatprep.subr.mxu0 0.0
    %1998 = vmatpush1.msra.mxu0 0.0
    %1999 = vmatprep.subr.mxu0 0.0
    %2000 = vmatpush1.msra.mxu0 0.0
    %2001 = vmatprep.subr.mxu0 0.0
    %2002 = vmatpush1.msra.mxu0 0.0
    %2003 = vmatprep.subr.mxu0 0.0
    %2004 = vmatpush1.msra.mxu0 0.0
    %2005 = vmatprep.subr.mxu0 0.0
    %2006 = vmatpush1.msra.mxu0 0.0
    %2007 = vmatprep.subr.mxu0 0.0
    %2008 = vmatpush1.msra.mxu0 0.0
    %2009 = vmatprep.subr.mxu0 0.0
    %2010 = vmatpush1.msra.mxu0 0.0
    %2011 = vmatprep.subr.mxu0 0.0
    %2012 = vmatpush1.msra.mxu0 0.0
    %2013 = vmatprep.subr.mxu0 0.0
    %2014 = vmatpush1.msra.mxu0 0.0
    %2015 = vmatprep.subr.mxu0 0.0
    %2016 = vmatpush1.msra.mxu0 0.0
    %2017 = vmatprep.subr.mxu0 0.0
    %2018 = vmatpush1.msra.mxu0 0.0
    %2019 = vmatprep.subr.mxu0 0.0
    %2020 = vmatpush1.msra.mxu0 0.0
    %2021 = vmatprep.subr.mxu0 0.0
    %2022 = vmatpush1.msra.mxu0 0.0
    %2023 = vmatprep.subr.mxu0 0.0
    %2024 = vmatpush1.msra.mxu0 0.0
    %2025 = vmatprep.subr.mxu0 0.0
    %2026 = vmatpush1.msra.mxu0 0.0
    %2027 = vmatprep.subr.mxu0 0.0
    %2028 = vmatpush1.msra.mxu0 0.0
    %2029 = vmatprep.subr.mxu0 0.0
    %2030 = vmatpush1.msra.mxu0 0.0
    %2031 = vmatprep.mubr.f32.mxu0 0.0
    %2032 = vmatmul.mubr.f32.gmra.mrb[0].mxu0 %v1963
    %v2033 = vpop.f32.mrb[0].mxu0
    %v2034 = vadd.f32 %v1954, %v2033
    %v2035 = vpop.f32.mrb[0].mxu0
    %2036 = vmatprep.mubr.f32.mxu0 0.0
    %2037 = vmatmul.mubr.f32.gmra.mrb[0].mxu0 %v1965
    %v2038 = vpop.f32.mrb[0].mxu0
    %v2039 = vadd.f32 %v1959, %v2038
    %v2040 = vpop.f32.mrb[0].mxu0
    %2041 = vdwg.mxu0
    %v2042 = vld [vmem:[%s33] sm:$0xff]
    %v2043 = vld [vmem:[%s33 + $0x8] sm:$0xff]
    %v2044 = vld [vmem:[%s33 + $0x10] sm:$0xff]
    %v2045 = vld [vmem:[%s33 + $0x18] sm:$0xff]
    %v2046 = vld [vmem:[%s37] sm:$0xff]
    %v2047 = vld [vmem:[%s37 + $0x8] sm:$0xff]
    %v2048 = vld [vmem:[%s37 + $0x10] sm:$0xff]
    %v2049 = vld [vmem:[%s37 + $0x18] sm:$0xff]
    %2050 = vmatprep.subr.mxu0 0.0
    %2051 = vmatpush1.msra.mxu0 %v2046
    %2052 = vmatprep.subr.mxu0 0.0
    %2053 = vmatpush1.msra.mxu0 %v2047
    %2054 = vmatprep.subr.mxu0 0.0
    %2055 = vmatpush1.msra.mxu0 %v2048
    %2056 = vmatprep.subr.mxu0 0.0
    %2057 = vmatpush1.msra.mxu0 %v2049
    %2058 = vmatprep.subr.mxu0 0.0
    %2059 = vmatpush1.msra.mxu0 0.0
    %2060 = vmatprep.subr.mxu0 0.0
    %2061 = vmatpush1.msra.mxu0 0.0
    %2062 = vmatprep.subr.mxu0 0.0
    %2063 = vmatpush1.msra.mxu0 0.0
    %2064 = vmatprep.subr.mxu0 0.0
    %2065 = vmatpush1.msra.mxu0 0.0
    %2066 = vmatprep.subr.mxu0 0.0
    %2067 = vmatpush1.msra.mxu0 0.0
    %2068 = vmatprep.subr.mxu0 0.0
    %2069 = vmatpush1.msra.mxu0 0.0
    %2070 = vmatprep.subr.mxu0 0.0
    %2071 = vmatpush1.msra.mxu0 0.0
    %2072 = vmatprep.subr.mxu0 0.0
    %2073 = vmatpush1.msra.mxu0 0.0
    %2074 = vmatprep.subr.mxu0 0.0
    %2075 = vmatpush1.msra.mxu0 0.0
    %2076 = vmatprep.subr.mxu0 0.0
    %2077 = vmatpush1.msra.mxu0 0.0
    %2078 = vmatprep.subr.mxu0 0.0
    %2079 = vmatpush1.msra.mxu0 0.0
    %2080 = vmatprep.subr.mxu0 0.0
    %2081 = vmatpush1.msra.mxu0 0.0
    %2082 = vmatprep.subr.mxu0 0.0
    %2083 = vmatpush1.msra.mxu0 0.0
    %2084 = vmatprep.subr.mxu0 0.0
    %2085 = vmatpush1.msra.mxu0 0.0
    %2086 = vmatprep.subr.mxu0 0.0
    %2087 = vmatpush1.msra.mxu0 0.0
    %2088 = vmatprep.subr.mxu0 0.0
    %2089 = vmatpush1.msra.mxu0 0.0
    %2090 = vmatprep.subr.mxu0 0.0
    %2091 = vmatpush1.msra.mxu0 0.0
    %2092 = vmatprep.subr.mxu0 0.0
    %2093 = vmatpush1.msra.mxu0 0.0
    %2094 = vmatprep.subr.mxu0 0.0
    %2095 = vmatpush1.msra.mxu0 0.0
    %2096 = vmatprep.subr.mxu0 0.0
    %2097 = vmatpush1.msra.mxu0 0.0
    %2098 = vmatprep.subr.mxu0 0.0
    %2099 = vmatpush1.msra.mxu0 0.0
    %2100 = vmatprep.subr.mxu0 0.0
    %2101 = vmatpush1.msra.mxu0 0.0
    %2102 = vmatprep.subr.mxu0 0.0
    %2103 = vmatpush1.msra.mxu0 0.0
    %2104 = vmatprep.subr.mxu0 0.0
    %2105 = vmatpush1.msra.mxu0 0.0
    %2106 = vmatprep.subr.mxu0 0.0
    %2107 = vmatpush1.msra.mxu0 0.0
    %2108 = vmatprep.subr.mxu0 0.0
    %2109 = vmatpush1.msra.mxu0 0.0
    %2110 = vmatprep.subr.mxu0 0.0
    %2111 = vmatpush1.msra.mxu0 0.0
    %2112 = vmatprep.subr.mxu0 0.0
    %2113 = vmatpush1.msra.mxu0 0.0
    %2114 = vmatprep.mubr.f32.mxu0 0.0
    %2115 = vmatmul.mubr.f32.gmra.mrb[0].mxu0 %v1882
    %v2116 = vpop.f32.mrb[0].mxu0
    %v2117 = vadd.f32 0.0, %v2116
    %v2118 = vpop.f32.mrb[0].mxu0
    %2119 = vmatprep.mubr.f32.mxu0 0.0
    %2120 = vmatmul.mubr.f32.gmra.mrb[0].mxu0 %v1885
    %v2121 = vpop.f32.mrb[0].mxu0
    %v2122 = vadd.f32 0.0, %v2121
    %v2123 = vpop.f32.mrb[0].mxu0
    %2124 = vdwg.mxu0
    %2125 = vmatprep.subr.mxu0 0.0
    %2126 = vmatpush1.msra.mxu0 %v2042
    %2127 = vmatprep.subr.mxu0 0.0
    %2128 = vmatpush1.msra.mxu0 %v2043
    %2129 = vmatprep.subr.mxu0 0.0
    %2130 = vmatpush1.msra.mxu0 %v2044
    %2131 = vmatprep.subr.mxu0 0.0
    %2132 = vmatpush1.msra.mxu0 %v2045
    %2133 = vmatprep.subr.mxu0 0.0
    %2134 = vmatpush1.msra.mxu0 0.0
    %2135 = vmatprep.subr.mxu0 0.0
    %2136 = vmatpush1.msra.mxu0 0.0
    %2137 = vmatprep.subr.mxu0 0.0
    %2138 = vmatpush1.msra.mxu0 0.0
    %2139 = vmatprep.subr.mxu0 0.0
    %2140 = vmatpush1.msra.mxu0 0.0
    %2141 = vmatprep.subr.mxu0 0.0
    %2142 = vmatpush1.msra.mxu0 0.0
    %2143 = vmatprep.subr.mxu0 0.0
    %2144 = vmatpush1.msra.mxu0 0.0
    %2145 = vmatprep.subr.mxu0 0.0
    %2146 = vmatpush1.msra.mxu0 0.0
    %2147 = vmatprep.subr.mxu0 0.0
    %2148 = vmatpush1.msra.mxu0 0.0
    %2149 = vmatprep.subr.mxu0 0.0
    %2150 = vmatpush1.msra.mxu0 0.0
    %2151 = vmatprep.subr.mxu0 0.0
    %2152 = vmatpush1.msra.mxu0 0.0
    %2153 = vmatprep.subr.mxu0 0.0
    %2154 = vmatpush1.msra.mxu0 0.0
    %2155 = vmatprep.subr.mxu0 0.0
    %2156 = vmatpush1.msra.mxu0 0.0
    %2157 = vmatprep.subr.mxu0 0.0
    %2158 = vmatpush1.msra.mxu0 0.0
    %2159 = vmatprep.subr.mxu0 0.0
    %2160 = vmatpush1.msra.mxu0 0.0
    %2161 = vmatprep.subr.mxu0 0.0
    %2162 = vmatpush1.msra.mxu0 0.0
    %2163 = vmatprep.subr.mxu0 0.0
    %2164 = vmatpush1.msra.mxu0 0.0
    %2165 = vmatprep.subr.mxu0 0.0
    %2166 = vmatpush1.msra.mxu0 0.0
    %2167 = vmatprep.subr.mxu0 0.0
    %2168 = vmatpush1.msra.mxu0 0.0
    %2169 = vmatprep.subr.mxu0 0.0
    %2170 = vmatpush1.msra.mxu0 0.0
    %2171 = vmatprep.subr.mxu0 0.0
    %2172 = vmatpush1.msra.mxu0 0.0
    %2173 = vmatprep.subr.mxu0 0.0
    %2174 = vmatpush1.msra.mxu0 0.0
    %2175 = vmatprep.subr.mxu0 0.0
    %2176 = vmatpush1.msra.mxu0 0.0
    %2177 = vmatprep.subr.mxu0 0.0
    %2178 = vmatpush1.msra.mxu0 0.0
    %2179 = vmatprep.subr.mxu0 0.0
    %2180 = vmatpush1.msra.mxu0 0.0
    %2181 = vmatprep.subr.mxu0 0.0
    %2182 = vmatpush1.msra.mxu0 0.0
    %2183 = vmatprep.subr.mxu0 0.0
    %2184 = vmatpush1.msra.mxu0 0.0
    %2185 = vmatprep.subr.mxu0 0.0
    %2186 = vmatpush1.msra.mxu0 0.0
    %2187 = vmatprep.subr.mxu0 0.0
    %2188 = vmatpush1.msra.mxu0 0.0
    %2189 = vmatprep.mubr.f32.mxu0 0.0
    %2190 = vmatmul.mubr.f32.gmra.mrb[0].mxu0 %v1963
    %v2191 = vpop.f32.mrb[0].mxu0
    %v2192 = vadd.f32 %v2117, %v2191
    %v2193 = vpop.f32.mrb[0].mxu0
    %2194 = vmatprep.mubr.f32.mxu0 0.0
    %2195 = vmatmul.mubr.f32.gmra.mrb[0].mxu0 %v1965
    %v2196 = vpop.f32.mrb[0].mxu0
    %v2197 = vadd.f32 %v2122, %v2196
    %v2198 = vpop.f32.mrb[0].mxu0
    %2199 = vdwg.mxu0
    %2201 = vset.pattern.permute.xlu0 0
    %2202 = vperm.xlu0 %2201, %v582
    %v2203 = vpop.permute.xlu0 %2202
    %2206 = vset.pattern.permute.xlu0 0
    %2207 = vperm.xlu0 %2206, %v583
    %v2208 = vpop.permute.xlu0 %2207
    %v2210 = vmul.f32 %v2203, %v2034
    %v2211 = vmul.f32 %v2208, %v2039
    %2213 = vset.pattern.permute.xlu0 0
    %2214 = vperm.xlu0 %2213, %v584
    %v2215 = vpop.permute.xlu0 %2214
    %2218 = vset.pattern.permute.xlu0 0
    %2219 = vperm.xlu0 %2218, %v585
    %v2220 = vpop.permute.xlu0 %2219
    %v2222 = vmul.f32 %v2215, %v2192
    %v2223 = vmul.f32 %v2220, %v2197
    %v2224 = vadd.f32 %v2210, %v2222
    %v2225 = vadd.f32 %v2211, %v2223
    %v2226 = vld [vmem:[#allocation21] sm:$0xff]
    %v2227 = vld [vmem:[#allocation21 + $0x8] sm:$0x7]
    %v2228 = vadd.f32 %v2224, %v2226
    %v2229 = vadd.f32 %v2225, %v2227
    %2230 = vmatprep.subr.mxu0 0.0
    %2231 = vmatpush1.msra.mxu0 %v757
    %2232 = vmatprep.subr.mxu0 0.0
    %2233 = vmatpush1.msra.mxu0 %v774
    %2234 = vmatprep.subr.mxu0 0.0
    %2235 = vmatpush1.msra.mxu0 0.0
    %2236 = vmatprep.subr.mxu0 0.0
    %2237 = vmatpush1.msra.mxu0 0.0
    %2238 = vmatprep.subr.mxu0 0.0
    %2239 = vmatpush1.msra.mxu0 0.0
    %2240 = vmatprep.subr.mxu0 0.0
    %2241 = vmatpush1.msra.mxu0 0.0
    %2242 = vmatprep.subr.mxu0 0.0
    %2243 = vmatpush1.msra.mxu0 0.0
    %2244 = vmatprep.subr.mxu0 0.0
    %2245 = vmatpush1.msra.mxu0 0.0
    %2246 = vmatprep.subr.mxu0 0.0
    %2247 = vmatpush1.msra.mxu0 0.0
    %2248 = vmatprep.subr.mxu0 0.0
    %2249 = vmatpush1.msra.mxu0 0.0
    %2250 = vmatprep.subr.mxu0 0.0
    %2251 = vmatpush1.msra.mxu0 0.0
    %2252 = vmatprep.subr.mxu0 0.0
    %2253 = vmatpush1.msra.mxu0 0.0
    %2254 = vmatprep.subr.mxu0 0.0
    %2255 = vmatpush1.msra.mxu0 0.0
    %2256 = vmatprep.subr.mxu0 0.0
    %2257 = vmatpush1.msra.mxu0 0.0
    %2258 = vmatprep.subr.mxu0 0.0
    %2259 = vmatpush1.msra.mxu0 0.0
    %2260 = vmatprep.subr.mxu0 0.0
    %2261 = vmatpush1.msra.mxu0 0.0
    %2262 = vmatprep.subr.mxu0 0.0
    %2263 = vmatpush1.msra.mxu0 0.0
    %2264 = vmatprep.subr.mxu0 0.0
    %2265 = vmatpush1.msra.mxu0 0.0
    %2266 = vmatprep.subr.mxu0 0.0
    %2267 = vmatpush1.msra.mxu0 0.0
    %2268 = vmatprep.subr.mxu0 0.0
    %2269 = vmatpush1.msra.mxu0 0.0
    %2270 = vmatprep.subr.mxu0 0.0
    %2271 = vmatpush1.msra.mxu0 0.0
    %2272 = vmatprep.subr.mxu0 0.0
    %2273 = vmatpush1.msra.mxu0 0.0
    %2274 = vmatprep.subr.mxu0 0.0
    %2275 = vmatpush1.msra.mxu0 0.0
    %2276 = vmatprep.subr.mxu0 0.0
    %2277 = vmatpush1.msra.mxu0 0.0
    %2278 = vmatprep.subr.mxu0 0.0
    %2279 = vmatpush1.msra.mxu0 0.0
    %2280 = vmatprep.subr.mxu0 0.0
    %2281 = vmatpush1.msra.mxu0 0.0
    %2282 = vmatprep.subr.mxu0 0.0
    %2283 = vmatpush1.msra.mxu0 0.0
    %2284 = vmatprep.subr.mxu0 0.0
    %2285 = vmatpush1.msra.mxu0 0.0
    %2286 = vmatprep.subr.mxu0 0.0
    %2287 = vmatpush1.msra.mxu0 0.0
    %2288 = vmatprep.subr.mxu0 0.0
    %2289 = vmatpush1.msra.mxu0 0.0
    %2290 = vmatprep.subr.mxu0 0.0
    %2291 = vmatpush1.msra.mxu0 0.0
    %2292 = vmatprep.subr.mxu0 0.0
    %2293 = vmatpush1.msra.mxu0 0.0
    %2294 = vmatprep.mubr.f32.mxu0 0.0
    %2295 = vmatmul.mubr.f32.gmra.mrb[0].mxu0 %v1793
    %v2296 = vpop.f32.mrb[0].mxu0
    %v2297 = vadd.f32 0.0, %v2296
    %v2298 = vpop.f32.mrb[0].mxu0
    %2299 = vmatprep.mubr.f32.mxu0 0.0
    %2300 = vmatmul.mubr.f32.gmra.mrb[0].mxu0 %v1796
    %v2301 = vpop.f32.mrb[0].mxu0
    %v2302 = vadd.f32 0.0, %v2301
    %v2303 = vpop.f32.mrb[0].mxu0
    %2304 = vdwg.mxu0
    %v2306 = vsel %vm1093, %v2297, 0
    %v2309 = vsel %vm1093, %v2302, 0
    %2311 = vmatprep.subr.mxu0 0.0
    %2312 = vmatpush1.msra.mxu0 %v1877
    %2313 = vmatprep.subr.mxu0 0.0
    %2314 = vmatpush1.msra.mxu0 %v1878
    %2315 = vmatprep.subr.mxu0 0.0
    %2316 = vmatpush1.msra.mxu0 %v1879
    %2317 = vmatprep.subr.mxu0 0.0
    %2318 = vmatpush1.msra.mxu0 %v1880
    %2319 = vmatprep.subr.mxu0 0.0
    %2320 = vmatpush1.msra.mxu0 0.0
    %2321 = vmatprep.subr.mxu0 0.0
    %2322 = vmatpush1.msra.mxu0 0.0
    %2323 = vmatprep.subr.mxu0 0.0
    %2324 = vmatpush1.msra.mxu0 0.0
    %2325 = vmatprep.subr.mxu0 0.0
    %2326 = vmatpush1.msra.mxu0 0.0
    %2327 = vmatprep.subr.mxu0 0.0
    %2328 = vmatpush1.msra.mxu0 0.0
    %2329 = vmatprep.subr.mxu0 0.0
    %2330 = vmatpush1.msra.mxu0 0.0
    %2331 = vmatprep.subr.mxu0 0.0
    %2332 = vmatpush1.msra.mxu0 0.0
    %2333 = vmatprep.subr.mxu0 0.0
    %2334 = vmatpush1.msra.mxu0 0.0
    %2335 = vmatprep.subr.mxu0 0.0
    %2336 = vmatpush1.msra.mxu0 0.0
    %2337 = vmatprep.subr.mxu0 0.0
    %2338 = vmatpush1.msra.mxu0 0.0
    %2339 = vmatprep.subr.mxu0 0.0
    %2340 = vmatpush1.msra.mxu0 0.0
    %2341 = vmatprep.subr.mxu0 0.0
    %2342 = vmatpush1.msra.mxu0 0.0
    %2343 = vmatprep.subr.mxu0 0.0
    %2344 = vmatpush1.msra.mxu0 0.0
    %2345 = vmatprep.subr.mxu0 0.0
    %2346 = vmatpush1.msra.mxu0 0.0
    %2347 = vmatprep.subr.mxu0 0.0
    %2348 = vmatpush1.msra.mxu0 0.0
    %2349 = vmatprep.subr.mxu0 0.0
    %2350 = vmatpush1.msra.mxu0 0.0
    %2351 = vmatprep.subr.mxu0 0.0
    %2352 = vmatpush1.msra.mxu0 0.0
    %2353 = vmatprep.subr.mxu0 0.0
    %2354 = vmatpush1.msra.mxu0 0.0
    %2355 = vmatprep.subr.mxu0 0.0
    %2356 = vmatpush1.msra.mxu0 0.0
    %2357 = vmatprep.subr.mxu0 0.0
    %2358 = vmatpush1.msra.mxu0 0.0
    %2359 = vmatprep.subr.mxu0 0.0
    %2360 = vmatpush1.msra.mxu0 0.0
    %2361 = vmatprep.subr.mxu0 0.0
    %2362 = vmatpush1.msra.mxu0 0.0
    %2363 = vmatprep.subr.mxu0 0.0
    %2364 = vmatpush1.msra.mxu0 0.0
    %2365 = vmatprep.subr.mxu0 0.0
    %2366 = vmatpush1.msra.mxu0 0.0
    %2367 = vmatprep.subr.mxu0 0.0
    %2368 = vmatpush1.msra.mxu0 0.0
    %2369 = vmatprep.subr.mxu0 0.0
    %2370 = vmatpush1.msra.mxu0 0.0
    %2371 = vmatprep.subr.mxu0 0.0
    %2372 = vmatpush1.msra.mxu0 0.0
    %2373 = vmatprep.subr.mxu0 0.0
    %2374 = vmatpush1.msra.mxu0 0.0
    %2375 = vmatprep.mubr.f32.mxu0 0.0
    %2376 = vmatmul.mubr.f32.gmra.mrb[0].mxu0 %v2306
    %v2377 = vpop.f32.mrb[0].mxu0
    %v2378 = vadd.f32 0.0, %v2377
    %v2379 = vpop.f32.mrb[0].mxu0
    %2380 = vmatprep.mubr.f32.mxu0 0.0
    %2381 = vmatmul.mubr.f32.gmra.mrb[0].mxu0 %v2309
    %v2382 = vpop.f32.mrb[0].mxu0
    %v2383 = vadd.f32 0.0, %v2382
    %v2384 = vpop.f32.mrb[0].mxu0
    %2385 = vdwg.mxu0
    %v2387 = vsel %vm1093, %v757, 0
    %v2389 = vsel %vm1093, %v762, 0
    %2391 = vmatprep.subr.mxu0 0.0
    %2392 = vmatpush1.msra.mxu0 %v1873
    %2393 = vmatprep.subr.mxu0 0.0
    %2394 = vmatpush1.msra.mxu0 %v1874
    %2395 = vmatprep.subr.mxu0 0.0
    %2396 = vmatpush1.msra.mxu0 %v1875
    %2397 = vmatprep.subr.mxu0 0.0
    %2398 = vmatpush1.msra.mxu0 %v1876
    %2399 = vmatprep.subr.mxu0 0.0
    %2400 = vmatpush1.msra.mxu0 0.0
    %2401 = vmatprep.subr.mxu0 0.0
    %2402 = vmatpush1.msra.mxu0 0.0
    %2403 = vmatprep.subr.mxu0 0.0
    %2404 = vmatpush1.msra.mxu0 0.0
    %2405 = vmatprep.subr.mxu0 0.0
    %2406 = vmatpush1.msra.mxu0 0.0
    %2407 = vmatprep.subr.mxu0 0.0
    %2408 = vmatpush1.msra.mxu0 0.0
    %2409 = vmatprep.subr.mxu0 0.0
    %2410 = vmatpush1.msra.mxu0 0.0
    %2411 = vmatprep.subr.mxu0 0.0
    %2412 = vmatpush1.msra.mxu0 0.0
    %2413 = vmatprep.subr.mxu0 0.0
    %2414 = vmatpush1.msra.mxu0 0.0
    %2415 = vmatprep.subr.mxu0 0.0
    %2416 = vmatpush1.msra.mxu0 0.0
    %2417 = vmatprep.subr.mxu0 0.0
    %2418 = vmatpush1.msra.mxu0 0.0
    %2419 = vmatprep.subr.mxu0 0.0
    %2420 = vmatpush1.msra.mxu0 0.0
    %2421 = vmatprep.subr.mxu0 0.0
    %2422 = vmatpush1.msra.mxu0 0.0
    %2423 = vmatprep.subr.mxu0 0.0
    %2424 = vmatpush1.msra.mxu0 0.0
    %2425 = vmatprep.subr.mxu0 0.0
    %2426 = vmatpush1.msra.mxu0 0.0
    %2427 = vmatprep.subr.mxu0 0.0
    %2428 = vmatpush1.msra.mxu0 0.0
    %2429 = vmatprep.subr.mxu0 0.0
    %2430 = vmatpush1.msra.mxu0 0.0
    %2431 = vmatprep.subr.mxu0 0.0
    %2432 = vmatpush1.msra.mxu0 0.0
    %2433 = vmatprep.subr.mxu0 0.0
    %2434 = vmatpush1.msra.mxu0 0.0
    %2435 = vmatprep.subr.mxu0 0.0
    %2436 = vmatpush1.msra.mxu0 0.0
    %2437 = vmatprep.subr.mxu0 0.0
    %2438 = vmatpush1.msra.mxu0 0.0
    %2439 = vmatprep.subr.mxu0 0.0
    %2440 = vmatpush1.msra.mxu0 0.0
    %2441 = vmatprep.subr.mxu0 0.0
    %2442 = vmatpush1.msra.mxu0 0.0
    %2443 = vmatprep.subr.mxu0 0.0
    %2444 = vmatpush1.msra.mxu0 0.0
    %2445 = vmatprep.subr.mxu0 0.0
    %2446 = vmatpush1.msra.mxu0 0.0
    %2447 = vmatprep.subr.mxu0 0.0
    %2448 = vmatpush1.msra.mxu0 0.0
    %2449 = vmatprep.subr.mxu0 0.0
    %2450 = vmatpush1.msra.mxu0 0.0
    %2451 = vmatprep.subr.mxu0 0.0
    %2452 = vmatpush1.msra.mxu0 0.0
    %2453 = vmatprep.subr.mxu0 0.0
    %2454 = vmatpush1.msra.mxu0 0.0
    %2455 = vmatprep.mubr.f32.mxu0 0.0
    %2456 = vmatmul.mubr.f32.gmra.mrb[0].mxu0 %v2387
    %v2457 = vpop.f32.mrb[0].mxu0
    %v2458 = vadd.f32 %v2378, %v2457
    %v2459 = vpop.f32.mrb[0].mxu0
    %2460 = vmatprep.mubr.f32.mxu0 0.0
    %2461 = vmatmul.mubr.f32.gmra.mrb[0].mxu0 %v2389
    %v2462 = vpop.f32.mrb[0].mxu0
    %v2463 = vadd.f32 %v2383, %v2462
    %v2464 = vpop.f32.mrb[0].mxu0
    %2465 = vdwg.mxu0
    %2466 = vmatprep.subr.mxu0 0.0
    %2467 = vmatpush1.msra.mxu0 %v2046
    %2468 = vmatprep.subr.mxu0 0.0
    %2469 = vmatpush1.msra.mxu0 %v2047
    %2470 = vmatprep.subr.mxu0 0.0
    %2471 = vmatpush1.msra.mxu0 %v2048
    %2472 = vmatprep.subr.mxu0 0.0
    %2473 = vmatpush1.msra.mxu0 %v2049
    %2474 = vmatprep.subr.mxu0 0.0
    %2475 = vmatpush1.msra.mxu0 0.0
    %2476 = vmatprep.subr.mxu0 0.0
    %2477 = vmatpush1.msra.mxu0 0.0
    %2478 = vmatprep.subr.mxu0 0.0
    %2479 = vmatpush1.msra.mxu0 0.0
    %2480 = vmatprep.subr.mxu0 0.0
    %2481 = vmatpush1.msra.mxu0 0.0
    %2482 = vmatprep.subr.mxu0 0.0
    %2483 = vmatpush1.msra.mxu0 0.0
    %2484 = vmatprep.subr.mxu0 0.0
    %2485 = vmatpush1.msra.mxu0 0.0
    %2486 = vmatprep.subr.mxu0 0.0
    %2487 = vmatpush1.msra.mxu0 0.0
    %2488 = vmatprep.subr.mxu0 0.0
    %2489 = vmatpush1.msra.mxu0 0.0
    %2490 = vmatprep.subr.mxu0 0.0
    %2491 = vmatpush1.msra.mxu0 0.0
    %2492 = vmatprep.subr.mxu0 0.0
    %2493 = vmatpush1.msra.mxu0 0.0
    %2494 = vmatprep.subr.mxu0 0.0
    %2495 = vmatpush1.msra.mxu0 0.0
    %2496 = vmatprep.subr.mxu0 0.0
    %2497 = vmatpush1.msra.mxu0 0.0
    %2498 = vmatprep.subr.mxu0 0.0
    %2499 = vmatpush1.msra.mxu0 0.0
    %2500 = vmatprep.subr.mxu0 0.0
    %2501 = vmatpush1.msra.mxu0 0.0
    %2502 = vmatprep.subr.mxu0 0.0
    %2503 = vmatpush1.msra.mxu0 0.0
    %2504 = vmatprep.subr.mxu0 0.0
    %2505 = vmatpush1.msra.mxu0 0.0
    %2506 = vmatprep.subr.mxu0 0.0
    %2507 = vmatpush1.msra.mxu0 0.0
    %2508 = vmatprep.subr.mxu0 0.0
    %2509 = vmatpush1.msra.mxu0 0.0
    %2510 = vmatprep.subr.mxu0 0.0
    %2511 = vmatpush1.msra.mxu0 0.0
    %2512 = vmatprep.subr.mxu0 0.0
    %2513 = vmatpush1.msra.mxu0 0.0
    %2514 = vmatprep.subr.mxu0 0.0
    %2515 = vmatpush1.msra.mxu0 0.0
    %2516 = vmatprep.subr.mxu0 0.0
    %2517 = vmatpush1.msra.mxu0 0.0
    %2518 = vmatprep.subr.mxu0 0.0
    %2519 = vmatpush1.msra.mxu0 0.0
    %2520 = vmatprep.subr.mxu0 0.0
    %2521 = vmatpush1.msra.mxu0 0.0
    %2522 = vmatprep.subr.mxu0 0.0
    %2523 = vmatpush1.msra.mxu0 0.0
    %2524 = vmatprep.subr.mxu0 0.0
    %2525 = vmatpush1.msra.mxu0 0.0
    %2526 = vmatprep.subr.mxu0 0.0
    %2527 = vmatpush1.msra.mxu0 0.0
    %2528 = vmatprep.subr.mxu0 0.0
    %2529 = vmatpush1.msra.mxu0 0.0
    %2530 = vmatprep.mubr.f32.mxu0 0.0
    %2531 = vmatmul.mubr.f32.gmra.mrb[0].mxu0 %v2306
    %v2532 = vpop.f32.mrb[0].mxu0
    %v2533 = vadd.f32 0.0, %v2532
    %v2534 = vpop.f32.mrb[0].mxu0
    %2535 = vmatprep.mubr.f32.mxu0 0.0
    %2536 = vmatmul.mubr.f32.gmra.mrb[0].mxu0 %v2309
    %v2537 = vpop.f32.mrb[0].mxu0
    %v2538 = vadd.f32 0.0, %v2537
    %v2539 = vpop.f32.mrb[0].mxu0
    %2540 = vdwg.mxu0
    %2541 = vmatprep.subr.mxu0 0.0
    %2542 = vmatpush1.msra.mxu0 %v2042
    %2543 = vmatprep.subr.mxu0 0.0
    %2544 = vmatpush1.msra.mxu0 %v2043
    %2545 = vmatprep.subr.mxu0 0.0
    %2546 = vmatpush1.msra.mxu0 %v2044
    %2547 = vmatprep.subr.mxu0 0.0
    %2548 = vmatpush1.msra.mxu0 %v2045
    %2549 = vmatprep.subr.mxu0 0.0
    %2550 = vmatpush1.msra.mxu0 0.0
    %2551 = vmatprep.subr.mxu0 0.0
    %2552 = vmatpush1.msra.mxu0 0.0
    %2553 = vmatprep.subr.mxu0 0.0
    %2554 = vmatpush1.msra.mxu0 0.0
    %2555 = vmatprep.subr.mxu0 0.0
    %2556 = vmatpush1.msra.mxu0 0.0
    %2557 = vmatprep.subr.mxu0 0.0
    %2558 = vmatpush1.msra.mxu0 0.0
    %2559 = vmatprep.subr.mxu0 0.0
    %2560 = vmatpush1.msra.mxu0 0.0
    %2561 = vmatprep.subr.mxu0 0.0
    %2562 = vmatpush1.msra.mxu0 0.0
    %2563 = vmatprep.subr.mxu0 0.0
    %2564 = vmatpush1.msra.mxu0 0.0
    %2565 = vmatprep.subr.mxu0 0.0
    %2566 = vmatpush1.msra.mxu0 0.0
    %2567 = vmatprep.subr.mxu0 0.0
    %2568 = vmatpush1.msra.mxu0 0.0
    %2569 = vmatprep.subr.mxu0 0.0
    %2570 = vmatpush1.msra.mxu0 0.0
    %2571 = vmatprep.subr.mxu0 0.0
    %2572 = vmatpush1.msra.mxu0 0.0
    %2573 = vmatprep.subr.mxu0 0.0
    %2574 = vmatpush1.msra.mxu0 0.0
    %2575 = vmatprep.subr.mxu0 0.0
    %2576 = vmatpush1.msra.mxu0 0.0
    %2577 = vmatprep.subr.mxu0 0.0
    %2578 = vmatpush1.msra.mxu0 0.0
    %2579 = vmatprep.subr.mxu0 0.0
    %2580 = vmatpush1.msra.mxu0 0.0
    %2581 = vmatprep.subr.mxu0 0.0
    %2582 = vmatpush1.msra.mxu0 0.0
    %2583 = vmatprep.subr.mxu0 0.0
    %2584 = vmatpush1.msra.mxu0 0.0
    %2585 = vmatprep.subr.mxu0 0.0
    %2586 = vmatpush1.msra.mxu0 0.0
    %2587 = vmatprep.subr.mxu0 0.0
    %2588 = vmatpush1.msra.mxu0 0.0
    %2589 = vmatprep.subr.mxu0 0.0
    %2590 = vmatpush1.msra.mxu0 0.0
    %2591 = vmatprep.subr.mxu0 0.0
    %2592 = vmatpush1.msra.mxu0 0.0
    %2593 = vmatprep.subr.mxu0 0.0
    %2594 = vmatpush1.msra.mxu0 0.0
    %2595 = vmatprep.subr.mxu0 0.0
    %2596 = vmatpush1.msra.mxu0 0.0
    %2597 = vmatprep.subr.mxu0 0.0
    %2598 = vmatpush1.msra.mxu0 0.0
    %2599 = vmatprep.subr.mxu0 0.0
    %2600 = vmatpush1.msra.mxu0 0.0
    %2601 = vmatprep.subr.mxu0 0.0
    %2602 = vmatpush1.msra.mxu0 0.0
    %2603 = vmatprep.subr.mxu0 0.0
    %2604 = vmatpush1.msra.mxu0 0.0
    %2605 = vmatprep.mubr.f32.mxu0 0.0
    %2606 = vmatmul.mubr.f32.gmra.mrb[0].mxu0 %v2387
    %v2607 = vpop.f32.mrb[0].mxu0
    %v2608 = vadd.f32 %v2533, %v2607
    %v2609 = vpop.f32.mrb[0].mxu0
    %2610 = vmatprep.mubr.f32.mxu0 0.0
    %2611 = vmatmul.mubr.f32.gmra.mrb[0].mxu0 %v2389
    %v2612 = vpop.f32.mrb[0].mxu0
    %v2613 = vadd.f32 %v2538, %v2612
    %v2614 = vpop.f32.mrb[0].mxu0
    %2615 = vdwg.mxu0
    %v2616 = vmul.f32 %v2203, %v2458
    %v2617 = vmul.f32 %v2208, %v2463
    %v2618 = vmul.f32 %v2215, %v2608
    %v2619 = vmul.f32 %v2220, %v2613
    %v2620 = vadd.f32 %v2616, %v2618
    %v2621 = vadd.f32 %v2617, %v2619
    %v2622 = vadd.f32 %v2620, %v2226
    %v2623 = vadd.f32 %v2621, %v2227
    %v2624 = vld [vmem:[%s19] sm:$0xff]
    %v2625 = vld [vmem:[%s19 + $0x8] sm:$0xff]
    %v2626 = vld [vmem:[%s19 + $0x10] sm:$0xff]
    %v2627 = vld [vmem:[%s19 + $0x18] sm:$0xff]
    %v2628 = vld [vmem:[%s21] sm:$0xff]
    %v2629 = vld [vmem:[%s21 + $0x8] sm:$0xff]
    %v2630 = vld [vmem:[%s21 + $0x10] sm:$0xff]
    %v2631 = vld [vmem:[%s21 + $0x18] sm:$0xff]
    %v2633 = vsel %vm1093, %v2622, 0
    %v2636 = vsel %vm1093, %v2623, 0
    %2638 = vmatprep.subr.mxu0 0.0
    %2639 = vmatpush1.msra.mxu0 %v2628
    %2640 = vmatprep.subr.mxu0 0.0
    %2641 = vmatpush1.msra.mxu0 %v2629
    %2642 = vmatprep.subr.mxu0 0.0
    %2643 = vmatpush1.msra.mxu0 %v2630
    %2644 = vmatprep.subr.mxu0 0.0
    %2645 = vmatpush1.msra.mxu0 %v2631
    %2646 = vmatprep.subr.mxu0 0.0
    %2647 = vmatpush1.msra.mxu0 0.0
    %2648 = vmatprep.subr.mxu0 0.0
    %2649 = vmatpush1.msra.mxu0 0.0
    %2650 = vmatprep.subr.mxu0 0.0
    %2651 = vmatpush1.msra.mxu0 0.0
    %2652 = vmatprep.subr.mxu0 0.0
    %2653 = vmatpush1.msra.mxu0 0.0
    %2654 = vmatprep.subr.mxu0 0.0
    %2655 = vmatpush1.msra.mxu0 0.0
    %2656 = vmatprep.subr.mxu0 0.0
    %2657 = vmatpush1.msra.mxu0 0.0
    %2658 = vmatprep.subr.mxu0 0.0
    %2659 = vmatpush1.msra.mxu0 0.0
    %2660 = vmatprep.subr.mxu0 0.0
    %2661 = vmatpush1.msra.mxu0 0.0
    %2662 = vmatprep.subr.mxu0 0.0
    %2663 = vmatpush1.msra.mxu0 0.0
    %2664 = vmatprep.subr.mxu0 0.0
    %2665 = vmatpush1.msra.mxu0 0.0
    %2666 = vmatprep.subr.mxu0 0.0
    %2667 = vmatpush1.msra.mxu0 0.0
    %2668 = vmatprep.subr.mxu0 0.0
    %2669 = vmatpush1.msra.mxu0 0.0
    %2670 = vmatprep.subr.mxu0 0.0
    %2671 = vmatpush1.msra.mxu0 0.0
    %2672 = vmatprep.subr.mxu0 0.0
    %2673 = vmatpush1.msra.mxu0 0.0
    %2674 = vmatprep.subr.mxu0 0.0
    %2675 = vmatpush1.msra.mxu0 0.0
    %2676 = vmatprep.subr.mxu0 0.0
    %2677 = vmatpush1.msra.mxu0 0.0
    %2678 = vmatprep.subr.mxu0 0.0
    %2679 = vmatpush1.msra.mxu0 0.0
    %2680 = vmatprep.subr.mxu0 0.0
    %2681 = vmatpush1.msra.mxu0 0.0
    %2682 = vmatprep.subr.mxu0 0.0
    %2683 = vmatpush1.msra.mxu0 0.0
    %2684 = vmatprep.subr.mxu0 0.0
    %2685 = vmatpush1.msra.mxu0 0.0
    %2686 = vmatprep.subr.mxu0 0.0
    %2687 = vmatpush1.msra.mxu0 0.0
    %2688 = vmatprep.subr.mxu0 0.0
    %2689 = vmatpush1.msra.mxu0 0.0
    %2690 = vmatprep.subr.mxu0 0.0
    %2691 = vmatpush1.msra.mxu0 0.0
    %2692 = vmatprep.subr.mxu0 0.0
    %2693 = vmatpush1.msra.mxu0 0.0
    %2694 = vmatprep.subr.mxu0 0.0
    %2695 = vmatpush1.msra.mxu0 0.0
    %2696 = vmatprep.subr.mxu0 0.0
    %2697 = vmatpush1.msra.mxu0 0.0
    %2698 = vmatprep.subr.mxu0 0.0
    %2699 = vmatpush1.msra.mxu0 0.0
    %2700 = vmatprep.subr.mxu0 0.0
    %2701 = vmatpush1.msra.mxu0 0.0
    %2702 = vmatprep.mubr.f32.mxu0 0.0
    %2703 = vmatmul.mubr.f32.gmra.mrb[0].mxu0 %v2633
    %v2704 = vpop.f32.mrb[0].mxu0
    %v2705 = vadd.f32 0.0, %v2704
    %v2706 = vpop.f32.mrb[0].mxu0
    %2707 = vmatprep.mubr.f32.mxu0 0.0
    %2708 = vmatmul.mubr.f32.gmra.mrb[0].mxu0 %v2636
    %v2709 = vpop.f32.mrb[0].mxu0
    %v2710 = vadd.f32 0.0, %v2709
    %v2711 = vpop.f32.mrb[0].mxu0
    %2712 = vdwg.mxu0
    %v2714 = vsel %vm1093, %v2228, 0
    %v2717 = vsel %vm1093, %v2229, 0
    %2719 = vmatprep.subr.mxu0 0.0
    %2720 = vmatpush1.msra.mxu0 %v2624
    %2721 = vmatprep.subr.mxu0 0.0
    %2722 = vmatpush1.msra.mxu0 %v2625
    %2723 = vmatprep.subr.mxu0 0.0
    %2724 = vmatpush1.msra.mxu0 %v2626
    %2725 = vmatprep.subr.mxu0 0.0
    %2726 = vmatpush1.msra.mxu0 %v2627
    %2727 = vmatprep.subr.mxu0 0.0
    %2728 = vmatpush1.msra.mxu0 0.0
    %2729 = vmatprep.subr.mxu0 0.0
    %2730 = vmatpush1.msra.mxu0 0.0
    %2731 = vmatprep.subr.mxu0 0.0
    %2732 = vmatpush1.msra.mxu0 0.0
    %2733 = vmatprep.subr.mxu0 0.0
    %2734 = vmatpush1.msra.mxu0 0.0
    %2735 = vmatprep.subr.mxu0 0.0
    %2736 = vmatpush1.msra.mxu0 0.0
    %2737 = vmatprep.subr.mxu0 0.0
    %2738 = vmatpush1.msra.mxu0 0.0
    %2739 = vmatprep.subr.mxu0 0.0
    %2740 = vmatpush1.msra.mxu0 0.0
    %2741 = vmatprep.subr.mxu0 0.0
    %2742 = vmatpush1.msra.mxu0 0.0
    %2743 = vmatprep.subr.mxu0 0.0
    %2744 = vmatpush1.msra.mxu0 0.0
    %2745 = vmatprep.subr.mxu0 0.0
    %2746 = vmatpush1.msra.mxu0 0.0
    %2747 = vmatprep.subr.mxu0 0.0
    %2748 = vmatpush1.msra.mxu0 0.0
    %2749 = vmatprep.subr.mxu0 0.0
    %2750 = vmatpush1.msra.mxu0 0.0
    %2751 = vmatprep.subr.mxu0 0.0
    %2752 = vmatpush1.msra.mxu0 0.0
    %2753 = vmatprep.subr.mxu0 0.0
    %2754 = vmatpush1.msra.mxu0 0.0
    %2755 = vmatprep.subr.mxu0 0.0
    %2756 = vmatpush1.msra.mxu0 0.0
    %2757 = vmatprep.subr.mxu0 0.0
    %2758 = vmatpush1.msra.mxu0 0.0
    %2759 = vmatprep.subr.mxu0 0.0
    %2760 = vmatpush1.msra.mxu0 0.0
    %2761 = vmatprep.subr.mxu0 0.0
    %2762 = vmatpush1.msra.mxu0 0.0
    %2763 = vmatprep.subr.mxu0 0.0
    %2764 = vmatpush1.msra.mxu0 0.0
    %2765 = vmatprep.subr.mxu0 0.0
    %2766 = vmatpush1.msra.mxu0 0.0
    %2767 = vmatprep.subr.mxu0 0.0
    %2768 = vmatpush1.msra.mxu0 0.0
    %2769 = vmatprep.subr.mxu0 0.0
    %2770 = vmatpush1.msra.mxu0 0.0
    %2771 = vmatprep.subr.mxu0 0.0
    %2772 = vmatpush1.msra.mxu0 0.0
    %2773 = vmatprep.subr.mxu0 0.0
    %2774 = vmatpush1.msra.mxu0 0.0
    %2775 = vmatprep.subr.mxu0 0.0
    %2776 = vmatpush1.msra.mxu0 0.0
    %2777 = vmatprep.subr.mxu0 0.0
    %2778 = vmatpush1.msra.mxu0 0.0
    %2779 = vmatprep.subr.mxu0 0.0
    %2780 = vmatpush1.msra.mxu0 0.0
    %2781 = vmatprep.subr.mxu0 0.0
    %2782 = vmatpush1.msra.mxu0 0.0
    %2783 = vmatprep.mubr.f32.mxu0 0.0
    %2784 = vmatmul.mubr.f32.gmra.mrb[0].mxu0 %v2714
    %v2785 = vpop.f32.mrb[0].mxu0
    %v2786 = vadd.f32 %v2705, %v2785
    %v2787 = vpop.f32.mrb[0].mxu0
    %2788 = vmatprep.mubr.f32.mxu0 0.0
    %2789 = vmatmul.mubr.f32.gmra.mrb[0].mxu0 %v2717
    %v2790 = vpop.f32.mrb[0].mxu0
    %v2791 = vadd.f32 %v2710, %v2790
    %v2792 = vpop.f32.mrb[0].mxu0
    %2793 = vdwg.mxu0
    %v2794 = vld [vmem:[#allocation18] sm:$0x1]
    %v2796 = vlaneseq
    %v2797 = vshrl.u32 %v2796, 7
    %v2798 = vsub.s32 0, %v2797
    %v2799 = vrot.slane %v2794, %v2798
    %v2801 = vadd.f32 %v2786, %v2799
    %v2802 = vadd.f32 %v2791, %v2799
    %v2803 = vmax.f32 %v2801, 0.0
    %v2804 = vmax.f32 %v2802, 0.0
    %v2805 = vld [vmem:[%s25] sm:$0xff]
    %v2806 = vld [vmem:[%s25 + $0x8] sm:$0xff]
    %v2807 = vld [vmem:[%s25 + $0x10] sm:$0xff]
    %v2808 = vld [vmem:[%s25 + $0x18] sm:$0xff]
    %v2809 = vld [vmem:[#allocation20] sm:$0x1]
    %v2811 = vlaneseq
    %v2812 = vshrl.u32 %v2811, 7
    %v2813 = vsub.s32 0, %v2812
    %v2814 = vrot.slane %v2809, %v2813
    %v2817 = vsel %vm1093, %v2803, 0
    %v2820 = vsel %vm1093, %v2804, 0
    %2822 = vmatprep.subr.mxu0 0.0
    %2823 = vmatpush1.msra.mxu0 %v2805
    %2824 = vmatprep.subr.mxu0 0.0
    %2825 = vmatpush1.msra.mxu0 %v2806
    %2826 = vmatprep.subr.mxu0 0.0
    %2827 = vmatpush1.msra.mxu0 %v2807
    %2828 = vmatprep.subr.mxu0 0.0
    %2829 = vmatpush1.msra.mxu0 %v2808
    %2830 = vmatprep.subr.mxu0 0.0
    %2831 = vmatpush1.msra.mxu0 0.0
    %2832 = vmatprep.subr.mxu0 0.0
    %2833 = vmatpush1.msra.mxu0 0.0
    %2834 = vmatprep.subr.mxu0 0.0
    %2835 = vmatpush1.msra.mxu0 0.0
    %2836 = vmatprep.subr.mxu0 0.0
    %2837 = vmatpush1.msra.mxu0 0.0
    %2838 = vmatprep.subr.mxu0 0.0
    %2839 = vmatpush1.msra.mxu0 0.0
    %2840 = vmatprep.subr.mxu0 0.0
    %2841 = vmatpush1.msra.mxu0 0.0
    %2842 = vmatprep.subr.mxu0 0.0
    %2843 = vmatpush1.msra.mxu0 0.0
    %2844 = vmatprep.subr.mxu0 0.0
    %2845 = vmatpush1.msra.mxu0 0.0
    %2846 = vmatprep.subr.mxu0 0.0
    %2847 = vmatpush1.msra.mxu0 0.0
    %2848 = vmatprep.subr.mxu0 0.0
    %2849 = vmatpush1.msra.mxu0 0.0
    %2850 = vmatprep.subr.mxu0 0.0
    %2851 = vmatpush1.msra.mxu0 0.0
    %2852 = vmatprep.subr.mxu0 0.0
    %2853 = vmatpush1.msra.mxu0 0.0
    %2854 = vmatprep.subr.mxu0 0.0
    %2855 = vmatpush1.msra.mxu0 0.0
    %2856 = vmatprep.subr.mxu0 0.0
    %2857 = vmatpush1.msra.mxu0 0.0
    %2858 = vmatprep.subr.mxu0 0.0
    %2859 = vmatpush1.msra.mxu0 0.0
    %2860 = vmatprep.subr.mxu0 0.0
    %2861 = vmatpush1.msra.mxu0 0.0
    %2862 = vmatprep.subr.mxu0 0.0
    %2863 = vmatpush1.msra.mxu0 0.0
    %2864 = vmatprep.subr.mxu0 0.0
    %2865 = vmatpush1.msra.mxu0 0.0
    %2866 = vmatprep.subr.mxu0 0.0
    %2867 = vmatpush1.msra.mxu0 0.0
    %2868 = vmatprep.subr.mxu0 0.0
    %2869 = vmatpush1.msra.mxu0 0.0
    %2870 = vmatprep.subr.mxu0 0.0
    %2871 = vmatpush1.msra.mxu0 0.0
    %2872 = vmatprep.subr.mxu0 0.0
    %2873 = vmatpush1.msra.mxu0 0.0
    %2874 = vmatprep.subr.mxu0 0.0
    %2875 = vmatpush1.msra.mxu0 0.0
    %2876 = vmatprep.subr.mxu0 0.0
    %2877 = vmatpush1.msra.mxu0 0.0
    %2878 = vmatprep.subr.mxu0 0.0
    %2879 = vmatpush1.msra.mxu0 0.0
    %2880 = vmatprep.subr.mxu0 0.0
    %2881 = vmatpush1.msra.mxu0 0.0
    %2882 = vmatprep.subr.mxu0 0.0
    %2883 = vmatpush1.msra.mxu0 0.0
    %2884 = vmatprep.subr.mxu0 0.0
    %2885 = vmatpush1.msra.mxu0 0.0
    %2886 = vmatprep.mubr.f32.mxu0 0.0
    %2887 = vmatmul.mubr.f32.gmra.mrb[0].mxu0 %v2817
    %v2888 = vpop.f32.mrb[0].mxu0
    %v2889 = vadd.f32 %v2814, %v2888
    %v2890 = vpop.f32.mrb[0].mxu0
    %2891 = vmatprep.mubr.f32.mxu0 0.0
    %2892 = vmatmul.mubr.f32.gmra.mrb[0].mxu0 %v2820
    %v2893 = vpop.f32.mrb[0].mxu0
    %v2894 = vadd.f32 %v2814, %v2893
    %v2895 = vpop.f32.mrb[0].mxu0
    %2896 = vdwg.mxu0
    %v2897 = vmax.f32 %v2889, 0.0
    %v2898 = vmax.f32 %v2894, 0.0
    %v2900 = vlaneseq
    %v2901 = vshrl.u32 %v2900, 7
    %v2902 = vsub.s32 0, %v2901
    %v2903 = vrot.slane %v595, %v2902
    %2904 = vset.pattern.permute.xlu0 0
    %2905 = vperm.xlu0 %2904, %v2903
    %v2906 = vpop.permute.xlu0 %2905
    %v2908 = vmul.f32 %v2906, %v1790
    %v2909 = vmul.f32 %v2906, %v1791
    %v2911 = vlaneseq
    %v2912 = vshrl.u32 %v2911, 7
    %v2913 = vsub.s32 0, %v2912
    %v2914 = vrot.slane %v597, %v2913
    %2915 = vset.pattern.permute.xlu0 0
    %2916 = vperm.xlu0 %2915, %v2914
    %v2917 = vpop.permute.xlu0 %2916
    %v2919 = vmul.f32 %v2917, %v1627
    %v2920 = vmul.f32 %v2917, %v1628
    %v2921 = vadd.f32 %v2908, %v2919
    %v2922 = vadd.f32 %v2909, %v2920
    %v2923 = vadd.f32 %v2921, %v2897
    %v2924 = vadd.f32 %v2922, %v2898
    %v2925 = vld [vmem:[%s39] sm:$0xff]
    %v2926 = vld [vmem:[%s39 + $0x8] sm:$0xff]
    %v2927 = vld [vmem:[%s39 + $0x10] sm:$0xff]
    %v2928 = vld [vmem:[%s39 + $0x18] sm:$0xff]
    %v2929 = vld [vmem:[%s39 + $0x20] sm:$0xff]
    %v2930 = vld [vmem:[%s39 + $0x28] sm:$0xff]
    %v2931 = vld [vmem:[%s39 + $0x30] sm:$0xff]
    %v2932 = vld [vmem:[%s39 + $0x38] sm:$0xff]
    %v2933 = vld [vmem:[#allocation23] sm:$0x1]
    %v2935 = vlaneseq
    %v2936 = vshrl.u32 %v2935, 7
    %v2937 = vsub.s32 0, %v2936
    %v2938 = vrot.slane %v2933, %v2937
    %vm2940 = vcmask 523264
    %v2942 = vsel %vm2940, %v2923, 0
    %v2945 = vsel %vm2940, %v2924, 0
    %2947 = vmatprep.subr.mxu0 0.0
    %2948 = vmatpush1.msra.mxu0 %v2925
    %2949 = vmatprep.subr.mxu0 0.0
    %2950 = vmatpush1.msra.mxu0 %v2926
    %2951 = vmatprep.subr.mxu0 0.0
    %2952 = vmatpush1.msra.mxu0 %v2927
    %2953 = vmatprep.subr.mxu0 0.0
    %2954 = vmatpush1.msra.mxu0 %v2928
    %2955 = vmatprep.subr.mxu0 0.0
    %2956 = vmatpush1.msra.mxu0 %v2929
    %2957 = vmatprep.subr.mxu0 0.0
    %2958 = vmatpush1.msra.mxu0 %v2930
    %2959 = vmatprep.subr.mxu0 0.0
    %2960 = vmatpush1.msra.mxu0 %v2931
    %2961 = vmatprep.subr.mxu0 0.0
    %2962 = vmatpush1.msra.mxu0 %v2932
    %2963 = vmatprep.subr.mxu0 0.0
    %2964 = vmatpush1.msra.mxu0 0.0
    %2965 = vmatprep.subr.mxu0 0.0
    %2966 = vmatpush1.msra.mxu0 0.0
    %2967 = vmatprep.subr.mxu0 0.0
    %2968 = vmatpush1.msra.mxu0 0.0
    %2969 = vmatprep.subr.mxu0 0.0
    %2970 = vmatpush1.msra.mxu0 0.0
    %2971 = vmatprep.subr.mxu0 0.0
    %2972 = vmatpush1.msra.mxu0 0.0
    %2973 = vmatprep.subr.mxu0 0.0
    %2974 = vmatpush1.msra.mxu0 0.0
    %2975 = vmatprep.subr.mxu0 0.0
    %2976 = vmatpush1.msra.mxu0 0.0
    %2977 = vmatprep.subr.mxu0 0.0
    %2978 = vmatpush1.msra.mxu0 0.0
    %2979 = vmatprep.subr.mxu0 0.0
    %2980 = vmatpush1.msra.mxu0 0.0
    %2981 = vmatprep.subr.mxu0 0.0
    %2982 = vmatpush1.msra.mxu0 0.0
    %2983 = vmatprep.subr.mxu0 0.0
    %2984 = vmatpush1.msra.mxu0 0.0
    %2985 = vmatprep.subr.mxu0 0.0
    %2986 = vmatpush1.msra.mxu0 0.0
    %2987 = vmatprep.subr.mxu0 0.0
    %2988 = vmatpush1.msra.mxu0 0.0
    %2989 = vmatprep.subr.mxu0 0.0
    %2990 = vmatpush1.msra.mxu0 0.0
    %2991 = vmatprep.subr.mxu0 0.0
    %2992 = vmatpush1.msra.mxu0 0.0
    %2993 = vmatprep.subr.mxu0 0.0
    %2994 = vmatpush1.msra.mxu0 0.0
    %2995 = vmatprep.subr.mxu0 0.0
    %2996 = vmatpush1.msra.mxu0 0.0
    %2997 = vmatprep.subr.mxu0 0.0
    %2998 = vmatpush1.msra.mxu0 0.0
    %2999 = vmatprep.subr.mxu0 0.0
    %3000 = vmatpush1.msra.mxu0 0.0
    %3001 = vmatprep.subr.mxu0 0.0
    %3002 = vmatpush1.msra.mxu0 0.0
    %3003 = vmatprep.subr.mxu0 0.0
    %3004 = vmatpush1.msra.mxu0 0.0
    %3005 = vmatprep.subr.mxu0 0.0
    %3006 = vmatpush1.msra.mxu0 0.0
    %3007 = vmatprep.subr.mxu0 0.0
    %3008 = vmatpush1.msra.mxu0 0.0
    %3009 = vmatprep.subr.mxu0 0.0
    %3010 = vmatpush1.msra.mxu0 0.0
    %3011 = vmatprep.mubr.f32.mxu0 0.0
    %3012 = vmatmul.mubr.f32.gmra.mrb[0].mxu0 %v2942
    %v3013 = vpop.f32.mrb[0].mxu0
    %v3014 = vadd.f32 %v2938, %v3013
    %v3015 = vpop.f32.mrb[0].mxu0
    %3016 = vmatprep.mubr.f32.mxu0 0.0
    %3017 = vmatmul.mubr.f32.gmra.mrb[0].mxu0 %v2945
    %v3018 = vpop.f32.mrb[0].mxu0
    %v3019 = vadd.f32 %v2938, %v3018
    %v3020 = vpop.f32.mrb[0].mxu0
    %3021 = vdwg.mxu0
    %v3022 = vmax.f32 %v3014, 0.0
    %v3023 = vmax.f32 %v3019, 0.0
    %v3024 = vld [vmem:[%s43] sm:$0xff]
    %v3025 = vld [vmem:[%s43 + $0x8] sm:$0xff]
    %v3026 = vld [vmem:[%s43 + $0x10] sm:$0xff]
    %v3027 = vld [vmem:[%s43 + $0x18] sm:$0xff]
    %v3028 = vld [vmem:[#allocation24] sm:$0x1]
    %v3030 = vlaneseq
    %v3031 = vshrl.u32 %v3030, 7
    %v3032 = vsub.s32 0, %v3031
    %v3033 = vrot.slane %v3028, %v3032
    %v3036 = vsel %vm1093, %v3022, 0
    %v3039 = vsel %vm1093, %v3023, 0
    %3041 = vmatprep.subr.mxu0 0.0
    %3042 = vmatpush1.msra.mxu0 %v3024
    %3043 = vmatprep.subr.mxu0 0.0
    %3044 = vmatpush1.msra.mxu0 %v3025
    %3045 = vmatprep.subr.mxu0 0.0
    %3046 = vmatpush1.msra.mxu0 %v3026
    %3047 = vmatprep.subr.mxu0 0.0
    %3048 = vmatpush1.msra.mxu0 %v3027
    %3049 = vmatprep.subr.mxu0 0.0
    %3050 = vmatpush1.msra.mxu0 0.0
    %3051 = vmatprep.subr.mxu0 0.0
    %3052 = vmatpush1.msra.mxu0 0.0
    %3053 = vmatprep.subr.mxu0 0.0
    %3054 = vmatpush1.msra.mxu0 0.0
    %3055 = vmatprep.subr.mxu0 0.0
    %3056 = vmatpush1.msra.mxu0 0.0
    %3057 = vmatprep.subr.mxu0 0.0
    %3058 = vmatpush1.msra.mxu0 0.0
    %3059 = vmatprep.subr.mxu0 0.0
    %3060 = vmatpush1.msra.mxu0 0.0
    %3061 = vmatprep.subr.mxu0 0.0
    %3062 = vmatpush1.msra.mxu0 0.0
    %3063 = vmatprep.subr.mxu0 0.0
    %3064 = vmatpush1.msra.mxu0 0.0
    %3065 = vmatprep.subr.mxu0 0.0
    %3066 = vmatpush1.msra.mxu0 0.0
    %3067 = vmatprep.subr.mxu0 0.0
    %3068 = vmatpush1.msra.mxu0 0.0
    %3069 = vmatprep.subr.mxu0 0.0
    %3070 = vmatpush1.msra.mxu0 0.0
    %3071 = vmatprep.subr.mxu0 0.0
    %3072 = vmatpush1.msra.mxu0 0.0
    %3073 = vmatprep.subr.mxu0 0.0
    %3074 = vmatpush1.msra.mxu0 0.0
    %3075 = vmatprep.subr.mxu0 0.0
    %3076 = vmatpush1.msra.mxu0 0.0
    %3077 = vmatprep.subr.mxu0 0.0
    %3078 = vmatpush1.msra.mxu0 0.0
    %3079 = vmatprep.subr.mxu0 0.0
    %3080 = vmatpush1.msra.mxu0 0.0
    %3081 = vmatprep.subr.mxu0 0.0
    %3082 = vmatpush1.msra.mxu0 0.0
    %3083 = vmatprep.subr.mxu0 0.0
    %3084 = vmatpush1.msra.mxu0 0.0
    %3085 = vmatprep.subr.mxu0 0.0
    %3086 = vmatpush1.msra.mxu0 0.0
    %3087 = vmatprep.subr.mxu0 0.0
    %3088 = vmatpush1.msra.mxu0 0.0
    %3089 = vmatprep.subr.mxu0 0.0
    %3090 = vmatpush1.msra.mxu0 0.0
    %3091 = vmatprep.subr.mxu0 0.0
    %3092 = vmatpush1.msra.mxu0 0.0
    %3093 = vmatprep.subr.mxu0 0.0
    %3094 = vmatpush1.msra.mxu0 0.0
    %3095 = vmatprep.subr.mxu0 0.0
    %3096 = vmatpush1.msra.mxu0 0.0
    %3097 = vmatprep.subr.mxu0 0.0
    %3098 = vmatpush1.msra.mxu0 0.0
    %3099 = vmatprep.subr.mxu0 0.0
    %3100 = vmatpush1.msra.mxu0 0.0
    %3101 = vmatprep.subr.mxu0 0.0
    %3102 = vmatpush1.msra.mxu0 0.0
    %3103 = vmatprep.subr.mxu0 0.0
    %3104 = vmatpush1.msra.mxu0 0.0
    %3105 = vmatprep.mubr.f32.mxu0 0.0
    %3106 = vmatmul.mubr.f32.gmra.mrb[0].mxu0 %v3036
    %v3107 = vpop.f32.mrb[0].mxu0
    %v3108 = vadd.f32 %v3033, %v3107
    %v3109 = vpop.f32.mrb[0].mxu0
    %3110 = vmatprep.mubr.f32.mxu0 0.0
    %3111 = vmatmul.mubr.f32.gmra.mrb[0].mxu0 %v3039
    %v3112 = vpop.f32.mrb[0].mxu0
    %v3113 = vadd.f32 %v3033, %v3112
    %v3114 = vpop.f32.mrb[0].mxu0
    %3115 = vdwg.mxu0
    %v3116 = vmax.f32 %v3108, 0.0
    %v3117 = vmax.f32 %v3113, 0.0
    %v3118 = vld [vmem:[%s65] sm:$0xff]
    %v3119 = vld [vmem:[%s65 + $0x8] sm:$0xff]
    %v3120 = vld [vmem:[%s65 + $0x10] sm:$0xff]
    %v3121 = vld [vmem:[%s65 + $0x18] sm:$0xff]
    %v3122 = vld [vmem:[%s65 + $0x20] sm:$0xff]
    %v3123 = vld [vmem:[%s65 + $0x28] sm:$0xff]
    %v3124 = vld [vmem:[%s65 + $0x30] sm:$0xff]
    %v3125 = vld [vmem:[%s65 + $0x38] sm:$0xff]
    %v3126 = vld [vmem:[%s67] sm:$0xff]
    %v3127 = vld [vmem:[%s67 + $0x8] sm:$0xff]
    %v3128 = vld [vmem:[%s67 + $0x10] sm:$0xff]
    %v3129 = vld [vmem:[%s67 + $0x18] sm:$0xff]
    %v3131 = vsel %vm1093, %v570, 0
    %v3133 = vsel %vm1093, %v571, 0
    %3135 = vmatprep.subr.mxu0 0.0
    %3136 = vmatpush1.msra.mxu0 %v3126
    %3137 = vmatprep.subr.mxu0 0.0
    %3138 = vmatpush1.msra.mxu0 %v3127
    %3139 = vmatprep.subr.mxu0 0.0
    %3140 = vmatpush1.msra.mxu0 %v3128
    %3141 = vmatprep.subr.mxu0 0.0
    %3142 = vmatpush1.msra.mxu0 %v3129
    %3143 = vmatprep.subr.mxu0 0.0
    %3144 = vmatpush1.msra.mxu0 0.0
    %3145 = vmatprep.subr.mxu0 0.0
    %3146 = vmatpush1.msra.mxu0 0.0
    %3147 = vmatprep.subr.mxu0 0.0
    %3148 = vmatpush1.msra.mxu0 0.0
    %3149 = vmatprep.subr.mxu0 0.0
    %3150 = vmatpush1.msra.mxu0 0.0
    %3151 = vmatprep.subr.mxu0 0.0
    %3152 = vmatpush1.msra.mxu0 0.0
    %3153 = vmatprep.subr.mxu0 0.0
    %3154 = vmatpush1.msra.mxu0 0.0
    %3155 = vmatprep.subr.mxu0 0.0
    %3156 = vmatpush1.msra.mxu0 0.0
    %3157 = vmatprep.subr.mxu0 0.0
    %3158 = vmatpush1.msra.mxu0 0.0
    %3159 = vmatprep.subr.mxu0 0.0
    %3160 = vmatpush1.msra.mxu0 0.0
    %3161 = vmatprep.subr.mxu0 0.0
    %3162 = vmatpush1.msra.mxu0 0.0
    %3163 = vmatprep.subr.mxu0 0.0
    %3164 = vmatpush1.msra.mxu0 0.0
    %3165 = vmatprep.subr.mxu0 0.0
    %3166 = vmatpush1.msra.mxu0 0.0
    %3167 = vmatprep.subr.mxu0 0.0
    %3168 = vmatpush1.msra.mxu0 0.0
    %3169 = vmatprep.subr.mxu0 0.0
    %3170 = vmatpush1.msra.mxu0 0.0
    %3171 = vmatprep.subr.mxu0 0.0
    %3172 = vmatpush1.msra.mxu0 0.0
    %3173 = vmatprep.subr.mxu0 0.0
    %3174 = vmatpush1.msra.mxu0 0.0
    %3175 = vmatprep.subr.mxu0 0.0
    %3176 = vmatpush1.msra.mxu0 0.0
    %3177 = vmatprep.subr.mxu0 0.0
    %3178 = vmatpush1.msra.mxu0 0.0
    %3179 = vmatprep.subr.mxu0 0.0
    %3180 = vmatpush1.msra.mxu0 0.0
    %3181 = vmatprep.subr.mxu0 0.0
    %3182 = vmatpush1.msra.mxu0 0.0
    %3183 = vmatprep.subr.mxu0 0.0
    %3184 = vmatpush1.msra.mxu0 0.0
    %3185 = vmatprep.subr.mxu0 0.0
    %3186 = vmatpush1.msra.mxu0 0.0
    %3187 = vmatprep.subr.mxu0 0.0
    %3188 = vmatpush1.msra.mxu0 0.0
    %3189 = vmatprep.subr.mxu0 0.0
    %3190 = vmatpush1.msra.mxu0 0.0
    %3191 = vmatprep.subr.mxu0 0.0
    %3192 = vmatpush1.msra.mxu0 0.0
    %3193 = vmatprep.subr.mxu0 0.0
    %3194 = vmatpush1.msra.mxu0 0.0
    %3195 = vmatprep.subr.mxu0 0.0
    %3196 = vmatpush1.msra.mxu0 0.0
    %3197 = vmatprep.subr.mxu0 0.0
    %3198 = vmatpush1.msra.mxu0 0.0
    %3199 = vmatprep.mubr.f32.mxu0 0.0
    %3200 = vmatmul.mubr.f32.gmra.mrb[0].mxu0 %v3131
    %v3201 = vpop.f32.mrb[0].mxu0
    %v3202 = vadd.f32 0.0, %v3201
    %v3203 = vpop.f32.mrb[0].mxu0
    %3204 = vmatprep.mubr.f32.mxu0 0.0
    %3205 = vmatmul.mubr.f32.gmra.mrb[0].mxu0 %v3133
    %v3206 = vpop.f32.mrb[0].mxu0
    %v3207 = vadd.f32 0.0, %v3206
    %v3208 = vpop.f32.mrb[0].mxu0
    %3209 = vdwg.mxu0
    %v3211 = vsel %vm2940, %v1627, 0
    %v3214 = vsel %vm2940, %v1628, 0
    %3216 = vmatprep.subr.mxu0 0.0
    %3217 = vmatpush1.msra.mxu0 %v3118
    %3218 = vmatprep.subr.mxu0 0.0
    %3219 = vmatpush1.msra.mxu0 %v3119
    %3220 = vmatprep.subr.mxu0 0.0
    %3221 = vmatpush1.msra.mxu0 %v3120
    %3222 = vmatprep.subr.mxu0 0.0
    %3223 = vmatpush1.msra.mxu0 %v3121
    %3224 = vmatprep.subr.mxu0 0.0
    %3225 = vmatpush1.msra.mxu0 %v3122
    %3226 = vmatprep.subr.mxu0 0.0
    %3227 = vmatpush1.msra.mxu0 %v3123
    %3228 = vmatprep.subr.mxu0 0.0
    %3229 = vmatpush1.msra.mxu0 %v3124
    %3230 = vmatprep.subr.mxu0 0.0
    %3231 = vmatpush1.msra.mxu0 %v3125
    %3232 = vmatprep.subr.mxu0 0.0
    %3233 = vmatpush1.msra.mxu0 0.0
    %3234 = vmatprep.subr.mxu0 0.0
    %3235 = vmatpush1.msra.mxu0 0.0
    %3236 = vmatprep.subr.mxu0 0.0
    %3237 = vmatpush1.msra.mxu0 0.0
    %3238 = vmatprep.subr.mxu0 0.0
    %3239 = vmatpush1.msra.mxu0 0.0
    %3240 = vmatprep.subr.mxu0 0.0
    %3241 = vmatpush1.msra.mxu0 0.0
    %3242 = vmatprep.subr.mxu0 0.0
    %3243 = vmatpush1.msra.mxu0 0.0
    %3244 = vmatprep.subr.mxu0 0.0
    %3245 = vmatpush1.msra.mxu0 0.0
    %3246 = vmatprep.subr.mxu0 0.0
    %3247 = vmatpush1.msra.mxu0 0.0
    %3248 = vmatprep.subr.mxu0 0.0
    %3249 = vmatpush1.msra.mxu0 0.0
    %3250 = vmatprep.subr.mxu0 0.0
    %3251 = vmatpush1.msra.mxu0 0.0
    %3252 = vmatprep.subr.mxu0 0.0
    %3253 = vmatpush1.msra.mxu0 0.0
    %3254 = vmatprep.subr.mxu0 0.0
    %3255 = vmatpush1.msra.mxu0 0.0
    %3256 = vmatprep.subr.mxu0 0.0
    %3257 = vmatpush1.msra.mxu0 0.0
    %3258 = vmatprep.subr.mxu0 0.0
    %3259 = vmatpush1.msra.mxu0 0.0
    %3260 = vmatprep.subr.mxu0 0.0
    %3261 = vmatpush1.msra.mxu0 0.0
    %3262 = vmatprep.subr.mxu0 0.0
    %3263 = vmatpush1.msra.mxu0 0.0
    %3264 = vmatprep.subr.mxu0 0.0
    %3265 = vmatpush1.msra.mxu0 0.0
    %3266 = vmatprep.subr.mxu0 0.0
    %3267 = vmatpush1.msra.mxu0 0.0
    %3268 = vmatprep.subr.mxu0 0.0
    %3269 = vmatpush1.msra.mxu0 0.0
    %3270 = vmatprep.subr.mxu0 0.0
    %3271 = vmatpush1.msra.mxu0 0.0
    %3272 = vmatprep.subr.mxu0 0.0
    %3273 = vmatpush1.msra.mxu0 0.0
    %3274 = vmatprep.subr.mxu0 0.0
    %3275 = vmatpush1.msra.mxu0 0.0
    %3276 = vmatprep.subr.mxu0 0.0
    %3277 = vmatpush1.msra.mxu0 0.0
    %3278 = vmatprep.subr.mxu0 0.0
    %3279 = vmatpush1.msra.mxu0 0.0
    %3280 = vmatprep.mubr.f32.mxu0 0.0
    %3281 = vmatmul.mubr.f32.gmra.mrb[0].mxu0 %v3211
    %v3282 = vpop.f32.mrb[0].mxu0
    %v3283 = vadd.f32 %v3202, %v3282
    %v3284 = vpop.f32.mrb[0].mxu0
    %3285 = vmatprep.mubr.f32.mxu0 0.0
    %3286 = vmatmul.mubr.f32.gmra.mrb[0].mxu0 %v3214
    %v3287 = vpop.f32.mrb[0].mxu0
    %v3288 = vadd.f32 %v3207, %v3287
    %v3289 = vpop.f32.mrb[0].mxu0
    %3290 = vdwg.mxu0
    %v3291 = vld [vmem:[#allocation30] sm:$0x1]
    %v3293 = vlaneseq
    %v3294 = vshrl.u32 %v3293, 7
    %v3295 = vsub.s32 0, %v3294
    %v3296 = vrot.slane %v3291, %v3295
    %v3298 = vadd.f32 %v3283, %v3296
    %v3299 = vadd.f32 %v3288, %v3296
    %v3300 = vmax.f32 %v3298, 0.0
    %v3301 = vmax.f32 %v3299, 0.0
    %v3302 = vld [vmem:[%s71] sm:$0xff]
    %v3303 = vld [vmem:[%s71 + $0x8] sm:$0xff]
    %v3304 = vld [vmem:[%s71 + $0x10] sm:$0xff]
    %v3305 = vld [vmem:[%s71 + $0x18] sm:$0xff]
    %v3306 = vld [vmem:[#allocation32] sm:$0x1]
    %v3308 = vlaneseq
    %v3309 = vshrl.u32 %v3308, 7
    %v3310 = vsub.s32 0, %v3309
    %v3311 = vrot.slane %v3306, %v3310
    %v3314 = vsel %vm1093, %v3300, 0
    %v3317 = vsel %vm1093, %v3301, 0
    %3319 = vmatprep.subr.mxu0 0.0
    %3320 = vmatpush1.msra.mxu0 %v3302
    %3321 = vmatprep.subr.mxu0 0.0
    %3322 = vmatpush1.msra.mxu0 %v3303
    %3323 = vmatprep.subr.mxu0 0.0
    %3324 = vmatpush1.msra.mxu0 %v3304
    %3325 = vmatprep.subr.mxu0 0.0
    %3326 = vmatpush1.msra.mxu0 %v3305
    %3327 = vmatprep.subr.mxu0 0.0
    %3328 = vmatpush1.msra.mxu0 0.0
    %3329 = vmatprep.subr.mxu0 0.0
    %3330 = vmatpush1.msra.mxu0 0.0
    %3331 = vmatprep.subr.mxu0 0.0
    %3332 = vmatpush1.msra.mxu0 0.0
    %3333 = vmatprep.subr.mxu0 0.0
    %3334 = vmatpush1.msra.mxu0 0.0
    %3335 = vmatprep.subr.mxu0 0.0
    %3336 = vmatpush1.msra.mxu0 0.0
    %3337 = vmatprep.subr.mxu0 0.0
    %3338 = vmatpush1.msra.mxu0 0.0
    %3339 = vmatprep.subr.mxu0 0.0
    %3340 = vmatpush1.msra.mxu0 0.0
    %3341 = vmatprep.subr.mxu0 0.0
    %3342 = vmatpush1.msra.mxu0 0.0
    %3343 = vmatprep.subr.mxu0 0.0
    %3344 = vmatpush1.msra.mxu0 0.0
    %3345 = vmatprep.subr.mxu0 0.0
    %3346 = vmatpush1.msra.mxu0 0.0
    %3347 = vmatprep.subr.mxu0 0.0
    %3348 = vmatpush1.msra.mxu0 0.0
    %3349 = vmatprep.subr.mxu0 0.0
    %3350 = vmatpush1.msra.mxu0 0.0
    %3351 = vmatprep.subr.mxu0 0.0
    %3352 = vmatpush1.msra.mxu0 0.0
    %3353 = vmatprep.subr.mxu0 0.0
    %3354 = vmatpush1.msra.mxu0 0.0
    %3355 = vmatprep.subr.mxu0 0.0
    %3356 = vmatpush1.msra.mxu0 0.0
    %3357 = vmatprep.subr.mxu0 0.0
    %3358 = vmatpush1.msra.mxu0 0.0
    %3359 = vmatprep.subr.mxu0 0.0
    %3360 = vmatpush1.msra.mxu0 0.0
    %3361 = vmatprep.subr.mxu0 0.0
    %3362 = vmatpush1.msra.mxu0 0.0
    %3363 = vmatprep.subr.mxu0 0.0
    %3364 = vmatpush1.msra.mxu0 0.0
    %3365 = vmatprep.subr.mxu0 0.0
    %3366 = vmatpush1.msra.mxu0 0.0
    %3367 = vmatprep.subr.mxu0 0.0
    %3368 = vmatpush1.msra.mxu0 0.0
    %3369 = vmatprep.subr.mxu0 0.0
    %3370 = vmatpush1.msra.mxu0 0.0
    %3371 = vmatprep.subr.mxu0 0.0
    %3372 = vmatpush1.msra.mxu0 0.0
    %3373 = vmatprep.subr.mxu0 0.0
    %3374 = vmatpush1.msra.mxu0 0.0
    %3375 = vmatprep.subr.mxu0 0.0
    %3376 = vmatpush1.msra.mxu0 0.0
    %3377 = vmatprep.subr.mxu0 0.0
    %3378 = vmatpush1.msra.mxu0 0.0
    %3379 = vmatprep.subr.mxu0 0.0
    %3380 = vmatpush1.msra.mxu0 0.0
    %3381 = vmatprep.subr.mxu0 0.0
    %3382 = vmatpush1.msra.mxu0 0.0
    %3383 = vmatprep.mubr.f32.mxu0 0.0
    %3384 = vmatmul.mubr.f32.gmra.mrb[0].mxu0 %v3314
    %v3385 = vpop.f32.mrb[0].mxu0
    %v3386 = vadd.f32 %v3311, %v3385
    %v3387 = vpop.f32.mrb[0].mxu0
    %3388 = vmatprep.mubr.f32.mxu0 0.0
    %3389 = vmatmul.mubr.f32.gmra.mrb[0].mxu0 %v3317
    %v3390 = vpop.f32.mrb[0].mxu0
    %v3391 = vadd.f32 %v3311, %v3390
    %v3392 = vpop.f32.mrb[0].mxu0
    %3393 = vdwg.mxu0
    %v3394 = vmax.f32 %v3386, 0.0
    %v3395 = vmax.f32 %v3391, 0.0
    %v3397 = vsel %vm772, %v3395, 0
    %3399 = vmatprep.subr.mxu0 0.0
    %3400 = vmatpush1.msra.mxu0 %v3394
    %3401 = vmatprep.subr.mxu0 0.0
    %3402 = vmatpush1.msra.mxu0 %v3397
    %3403 = vmatprep.subr.mxu0 0.0
    %3404 = vmatpush1.msra.mxu0 0.0
    %3405 = vmatprep.subr.mxu0 0.0
    %3406 = vmatpush1.msra.mxu0 0.0
    %3407 = vmatprep.subr.mxu0 0.0
    %3408 = vmatpush1.msra.mxu0 0.0
    %3409 = vmatprep.subr.mxu0 0.0
    %3410 = vmatpush1.msra.mxu0 0.0
    %3411 = vmatprep.subr.mxu0 0.0
    %3412 = vmatpush1.msra.mxu0 0.0
    %3413 = vmatprep.subr.mxu0 0.0
    %3414 = vmatpush1.msra.mxu0 0.0
    %3415 = vmatprep.subr.mxu0 0.0
    %3416 = vmatpush1.msra.mxu0 0.0
    %3417 = vmatprep.subr.mxu0 0.0
    %3418 = vmatpush1.msra.mxu0 0.0
    %3419 = vmatprep.subr.mxu0 0.0
    %3420 = vmatpush1.msra.mxu0 0.0
    %3421 = vmatprep.subr.mxu0 0.0
    %3422 = vmatpush1.msra.mxu0 0.0
    %3423 = vmatprep.subr.mxu0 0.0
    %3424 = vmatpush1.msra.mxu0 0.0
    %3425 = vmatprep.subr.mxu0 0.0
    %3426 = vmatpush1.msra.mxu0 0.0
    %3427 = vmatprep.subr.mxu0 0.0
    %3428 = vmatpush1.msra.mxu0 0.0
    %3429 = vmatprep.subr.mxu0 0.0
    %3430 = vmatpush1.msra.mxu0 0.0
    %3431 = vmatprep.subr.mxu0 0.0
    %3432 = vmatpush1.msra.mxu0 0.0
    %3433 = vmatprep.subr.mxu0 0.0
    %3434 = vmatpush1.msra.mxu0 0.0
    %3435 = vmatprep.subr.mxu0 0.0
    %3436 = vmatpush1.msra.mxu0 0.0
    %3437 = vmatprep.subr.mxu0 0.0
    %3438 = vmatpush1.msra.mxu0 0.0
    %3439 = vmatprep.subr.mxu0 0.0
    %3440 = vmatpush1.msra.mxu0 0.0
    %3441 = vmatprep.subr.mxu0 0.0
    %3442 = vmatpush1.msra.mxu0 0.0
    %3443 = vmatprep.subr.mxu0 0.0
    %3444 = vmatpush1.msra.mxu0 0.0
    %3445 = vmatprep.subr.mxu0 0.0
    %3446 = vmatpush1.msra.mxu0 0.0
    %3447 = vmatprep.subr.mxu0 0.0
    %3448 = vmatpush1.msra.mxu0 0.0
    %3449 = vmatprep.subr.mxu0 0.0
    %3450 = vmatpush1.msra.mxu0 0.0
    %3451 = vmatprep.subr.mxu0 0.0
    %3452 = vmatpush1.msra.mxu0 0.0
    %3453 = vmatprep.subr.mxu0 0.0
    %3454 = vmatpush1.msra.mxu0 0.0
    %3455 = vmatprep.subr.mxu0 0.0
    %3456 = vmatpush1.msra.mxu0 0.0
    %3457 = vmatprep.subr.mxu0 0.0
    %3458 = vmatpush1.msra.mxu0 0.0
    %3459 = vmatprep.subr.mxu0 0.0
    %3460 = vmatpush1.msra.mxu0 0.0
    %3461 = vmatprep.subr.mxu0 0.0
    %3462 = vmatpush1.msra.mxu0 0.0
    %3463 = vmatprep.mubr.f32.mxu0 0.0
    %3464 = vmatmul.mubr.f32.gmra.mrb[0].mxu0 %v767
    %v3465 = vpop.f32.mrb[0].mxu0
    %v3466 = vadd.f32 0.0, %v3465
    %v3467 = vpop.f32.mrb[0].mxu0
    %3468 = vmatprep.mubr.f32.mxu0 0.0
    %3469 = vmatmul.mubr.f32.gmra.mrb[0].mxu0 %v770
    %v3470 = vpop.f32.mrb[0].mxu0
    %v3471 = vadd.f32 0.0, %v3470
    %v3472 = vpop.f32.mrb[0].mxu0
    %3473 = vdwg.mxu0
    %3474 = vmatprep.subr.mxu0 0.0
    %3475 = vmatpush1.msra.mxu0 %v3394
    %3476 = vmatprep.subr.mxu0 0.0
    %3477 = vmatpush1.msra.mxu0 %v3397
    %3478 = vmatprep.subr.mxu0 0.0
    %3479 = vmatpush1.msra.mxu0 0.0
    %3480 = vmatprep.subr.mxu0 0.0
    %3481 = vmatpush1.msra.mxu0 0.0
    %3482 = vmatprep.subr.mxu0 0.0
    %3483 = vmatpush1.msra.mxu0 0.0
    %3484 = vmatprep.subr.mxu0 0.0
    %3485 = vmatpush1.msra.mxu0 0.0
    %3486 = vmatprep.subr.mxu0 0.0
    %3487 = vmatpush1.msra.mxu0 0.0
    %3488 = vmatprep.subr.mxu0 0.0
    %3489 = vmatpush1.msra.mxu0 0.0
    %3490 = vmatprep.subr.mxu0 0.0
    %3491 = vmatpush1.msra.mxu0 0.0
    %3492 = vmatprep.subr.mxu0 0.0
    %3493 = vmatpush1.msra.mxu0 0.0
    %3494 = vmatprep.subr.mxu0 0.0
    %3495 = vmatpush1.msra.mxu0 0.0
    %3496 = vmatprep.subr.mxu0 0.0
    %3497 = vmatpush1.msra.mxu0 0.0
    %3498 = vmatprep.subr.mxu0 0.0
    %3499 = vmatpush1.msra.mxu0 0.0
    %3500 = vmatprep.subr.mxu0 0.0
    %3501 = vmatpush1.msra.mxu0 0.0
    %3502 = vmatprep.subr.mxu0 0.0
    %3503 = vmatpush1.msra.mxu0 0.0
    %3504 = vmatprep.subr.mxu0 0.0
    %3505 = vmatpush1.msra.mxu0 0.0
    %3506 = vmatprep.subr.mxu0 0.0
    %3507 = vmatpush1.msra.mxu0 0.0
    %3508 = vmatprep.subr.mxu0 0.0
    %3509 = vmatpush1.msra.mxu0 0.0
    %3510 = vmatprep.subr.mxu0 0.0
    %3511 = vmatpush1.msra.mxu0 0.0
    %3512 = vmatprep.subr.mxu0 0.0
    %3513 = vmatpush1.msra.mxu0 0.0
    %3514 = vmatprep.subr.mxu0 0.0
    %3515 = vmatpush1.msra.mxu0 0.0
    %3516 = vmatprep.subr.mxu0 0.0
    %3517 = vmatpush1.msra.mxu0 0.0
    %3518 = vmatprep.subr.mxu0 0.0
    %3519 = vmatpush1.msra.mxu0 0.0
    %3520 = vmatprep.subr.mxu0 0.0
    %3521 = vmatpush1.msra.mxu0 0.0
    %3522 = vmatprep.subr.mxu0 0.0
    %3523 = vmatpush1.msra.mxu0 0.0
    %3524 = vmatprep.subr.mxu0 0.0
    %3525 = vmatpush1.msra.mxu0 0.0
    %3526 = vmatprep.subr.mxu0 0.0
    %3527 = vmatpush1.msra.mxu0 0.0
    %3528 = vmatprep.subr.mxu0 0.0
    %3529 = vmatpush1.msra.mxu0 0.0
    %3530 = vmatprep.subr.mxu0 0.0
    %3531 = vmatpush1.msra.mxu0 0.0
    %3532 = vmatprep.subr.mxu0 0.0
    %3533 = vmatpush1.msra.mxu0 0.0
    %3534 = vmatprep.subr.mxu0 0.0
    %3535 = vmatpush1.msra.mxu0 0.0
    %3536 = vmatprep.subr.mxu0 0.0
    %3537 = vmatpush1.msra.mxu0 0.0
    %3538 = vmatprep.mubr.f32.mxu0 0.0
    %3539 = vmatmul.mubr.f32.gmra.mrb[0].mxu0 %v852
    %v3540 = vpop.f32.mrb[0].mxu0
    %v3541 = vadd.f32 0.0, %v3540
    %v3542 = vpop.f32.mrb[0].mxu0
    %3543 = vmatprep.mubr.f32.mxu0 0.0
    %3544 = vmatmul.mubr.f32.gmra.mrb[0].mxu0 %v855
    %v3545 = vpop.f32.mrb[0].mxu0
    %v3546 = vadd.f32 0.0, %v3545
    %v3547 = vpop.f32.mrb[0].mxu0
    %3548 = vdwg.mxu0
    %3551 = vrot.lane.b32.xlu0 %v3541, 32
    %v3552 = vpop.permute.xlu0 %3551
    %3553 = vrot.lane.b32.xlu0 %v3546, 32
    %v3554 = vpop.permute.xlu0 %3553
    %v3557 = vsel %vm1093, %v3466, %v3552
    %v3558 = vsel %vm1093, %v3471, %v3554
    %v3560 = vsel %vm772, %v3558, 0
    %3562 = vmatprep.subr.mxu0 0.0
    %3563 = vmatpush1.msra.mxu0 %v3557
    %3564 = vmatprep.subr.mxu0 0.0
    %3565 = vmatpush1.msra.mxu0 %v3560
    %3566 = vmatprep.subr.mxu0 0.0
    %3567 = vmatpush1.msra.mxu0 0.0
    %3568 = vmatprep.subr.mxu0 0.0
    %3569 = vmatpush1.msra.mxu0 0.0
    %3570 = vmatprep.subr.mxu0 0.0
    %3571 = vmatpush1.msra.mxu0 0.0
    %3572 = vmatprep.subr.mxu0 0.0
    %3573 = vmatpush1.msra.mxu0 0.0
    %3574 = vmatprep.subr.mxu0 0.0
    %3575 = vmatpush1.msra.mxu0 0.0
    %3576 = vmatprep.subr.mxu0 0.0
    %3577 = vmatpush1.msra.mxu0 0.0
    %3578 = vmatprep.subr.mxu0 0.0
    %3579 = vmatpush1.msra.mxu0 0.0
    %3580 = vmatprep.subr.mxu0 0.0
    %3581 = vmatpush1.msra.mxu0 0.0
    %3582 = vmatprep.subr.mxu0 0.0
    %3583 = vmatpush1.msra.mxu0 0.0
    %3584 = vmatprep.subr.mxu0 0.0
    %3585 = vmatpush1.msra.mxu0 0.0
    %3586 = vmatprep.subr.mxu0 0.0
    %3587 = vmatpush1.msra.mxu0 0.0
    %3588 = vmatprep.subr.mxu0 0.0
    %3589 = vmatpush1.msra.mxu0 0.0
    %3590 = vmatprep.subr.mxu0 0.0
    %3591 = vmatpush1.msra.mxu0 0.0
    %3592 = vmatprep.subr.mxu0 0.0
    %3593 = vmatpush1.msra.mxu0 0.0
    %3594 = vmatprep.subr.mxu0 0.0
    %3595 = vmatpush1.msra.mxu0 0.0
    %3596 = vmatprep.subr.mxu0 0.0
    %3597 = vmatpush1.msra.mxu0 0.0
    %3598 = vmatprep.subr.mxu0 0.0
    %3599 = vmatpush1.msra.mxu0 0.0
    %3600 = vmatprep.subr.mxu0 0.0
    %3601 = vmatpush1.msra.mxu0 0.0
    %3602 = vmatprep.subr.mxu0 0.0
    %3603 = vmatpush1.msra.mxu0 0.0
    %3604 = vmatprep.subr.mxu0 0.0
    %3605 = vmatpush1.msra.mxu0 0.0
    %3606 = vmatprep.subr.mxu0 0.0
    %3607 = vmatpush1.msra.mxu0 0.0
    %3608 = vmatprep.subr.mxu0 0.0
    %3609 = vmatpush1.msra.mxu0 0.0
    %3610 = vmatprep.subr.mxu0 0.0
    %3611 = vmatpush1.msra.mxu0 0.0
    %3612 = vmatprep.subr.mxu0 0.0
    %3613 = vmatpush1.msra.mxu0 0.0
    %3614 = vmatprep.subr.mxu0 0.0
    %3615 = vmatpush1.msra.mxu0 0.0
    %3616 = vmatprep.subr.mxu0 0.0
    %3617 = vmatpush1.msra.mxu0 0.0
    %3618 = vmatprep.subr.mxu0 0.0
    %3619 = vmatpush1.msra.mxu0 0.0
    %3620 = vmatprep.subr.mxu0 0.0
    %3621 = vmatpush1.msra.mxu0 0.0
    %3622 = vmatprep.subr.mxu0 0.0
    %3623 = vmatpush1.msra.mxu0 0.0
    %3624 = vmatprep.subr.mxu0 0.0
    %3625 = vmatpush1.msra.mxu0 0.0
    %3626 = vmatprep.mubr.f32.mxu0 0.0
    %3627 = vmatmul.mubr.f32.gmra.mrb[0].mxu0 %v1793
    %v3628 = vpop.f32.mrb[0].mxu0
    %v3629 = vadd.f32 0.0, %v3628
    %v3630 = vpop.f32.mrb[0].mxu0
    %3631 = vmatprep.mubr.f32.mxu0 0.0
    %3632 = vmatmul.mubr.f32.gmra.mrb[0].mxu0 %v1796
    %v3633 = vpop.f32.mrb[0].mxu0
    %v3634 = vadd.f32 0.0, %v3633
    %v3635 = vpop.f32.mrb[0].mxu0
    %3636 = vdwg.mxu0
    %v3637 = vld [vmem:[%s117] sm:$0xff]
    %v3638 = vld [vmem:[%s117 + $0x8] sm:$0xff]
    %v3639 = vld [vmem:[%s117 + $0x10] sm:$0xff]
    %v3640 = vld [vmem:[%s117 + $0x18] sm:$0xff]
    %v3641 = vld [vmem:[%s117 + $0x20] sm:$0xff]
    %v3642 = vld [vmem:[%s117 + $0x28] sm:$0xff]
    %v3643 = vld [vmem:[%s117 + $0x30] sm:$0xff]
    %v3644 = vld [vmem:[%s117 + $0x38] sm:$0xff]
    %v3645 = vld [vmem:[%s121] sm:$0xff]
    %v3646 = vld [vmem:[%s121 + $0x8] sm:$0xff]
    %v3647 = vld [vmem:[%s121 + $0x10] sm:$0xff]
    %v3648 = vld [vmem:[%s121 + $0x18] sm:$0xff]
    %v3649 = vld [vmem:[%s121 + $0x20] sm:$0xff]
    %v3650 = vld [vmem:[%s121 + $0x28] sm:$0xff]
    %v3651 = vld [vmem:[%s121 + $0x30] sm:$0xff]
    %v3652 = vld [vmem:[%s121 + $0x38] sm:$0xff]
    %v3654 = vsel %vm2940, %v3629, 0
    %v3657 = vsel %vm2940, %v3634, 0
    %3659 = vmatprep.subr.mxu0 0.0
    %3660 = vmatpush1.msra.mxu0 %v3645
    %3661 = vmatprep.subr.mxu0 0.0
    %3662 = vmatpush1.msra.mxu0 %v3646
    %3663 = vmatprep.subr.mxu0 0.0
    %3664 = vmatpush1.msra.mxu0 %v3647
    %3665 = vmatprep.subr.mxu0 0.0
    %3666 = vmatpush1.msra.mxu0 %v3648
    %3667 = vmatprep.subr.mxu0 0.0
    %3668 = vmatpush1.msra.mxu0 %v3649
    %3669 = vmatprep.subr.mxu0 0.0
    %3670 = vmatpush1.msra.mxu0 %v3650
    %3671 = vmatprep.subr.mxu0 0.0
    %3672 = vmatpush1.msra.mxu0 %v3651
    %3673 = vmatprep.subr.mxu0 0.0
    %3674 = vmatpush1.msra.mxu0 %v3652
    %3675 = vmatprep.subr.mxu0 0.0
    %3676 = vmatpush1.msra.mxu0 0.0
    %3677 = vmatprep.subr.mxu0 0.0
    %3678 = vmatpush1.msra.mxu0 0.0
    %3679 = vmatprep.subr.mxu0 0.0
    %3680 = vmatpush1.msra.mxu0 0.0
    %3681 = vmatprep.subr.mxu0 0.0
    %3682 = vmatpush1.msra.mxu0 0.0
    %3683 = vmatprep.subr.mxu0 0.0
    %3684 = vmatpush1.msra.mxu0 0.0
    %3685 = vmatprep.subr.mxu0 0.0
    %3686 = vmatpush1.msra.mxu0 0.0
    %3687 = vmatprep.subr.mxu0 0.0
    %3688 = vmatpush1.msra.mxu0 0.0
    %3689 = vmatprep.subr.mxu0 0.0
    %3690 = vmatpush1.msra.mxu0 0.0
    %3691 = vmatprep.subr.mxu0 0.0
    %3692 = vmatpush1.msra.mxu0 0.0
    %3693 = vmatprep.subr.mxu0 0.0
    %3694 = vmatpush1.msra.mxu0 0.0
    %3695 = vmatprep.subr.mxu0 0.0
    %3696 = vmatpush1.msra.mxu0 0.0
    %3697 = vmatprep.subr.mxu0 0.0
    %3698 = vmatpush1.msra.mxu0 0.0
    %3699 = vmatprep.subr.mxu0 0.0
    %3700 = vmatpush1.msra.mxu0 0.0
    %3701 = vmatprep.subr.mxu0 0.0
    %3702 = vmatpush1.msra.mxu0 0.0
    %3703 = vmatprep.subr.mxu0 0.0
    %3704 = vmatpush1.msra.mxu0 0.0
    %3705 = vmatprep.subr.mxu0 0.0
    %3706 = vmatpush1.msra.mxu0 0.0
    %3707 = vmatprep.subr.mxu0 0.0
    %3708 = vmatpush1.msra.mxu0 0.0
    %3709 = vmatprep.subr.mxu0 0.0
    %3710 = vmatpush1.msra.mxu0 0.0
    %3711 = vmatprep.subr.mxu0 0.0
    %3712 = vmatpush1.msra.mxu0 0.0
    %3713 = vmatprep.subr.mxu0 0.0
    %3714 = vmatpush1.msra.mxu0 0.0
    %3715 = vmatprep.subr.mxu0 0.0
    %3716 = vmatpush1.msra.mxu0 0.0
    %3717 = vmatprep.subr.mxu0 0.0
    %3718 = vmatpush1.msra.mxu0 0.0
    %3719 = vmatprep.subr.mxu0 0.0
    %3720 = vmatpush1.msra.mxu0 0.0
    %3721 = vmatprep.subr.mxu0 0.0
    %3722 = vmatpush1.msra.mxu0 0.0
    %3723 = vmatprep.mubr.f32.mxu0 0.0
    %3724 = vmatmul.mubr.f32.gmra.mrb[0].mxu0 %v3654
    %v3725 = vpop.f32.mrb[0].mxu0
    %v3726 = vadd.f32 0.0, %v3725
    %v3727 = vpop.f32.mrb[0].mxu0
    %3728 = vmatprep.mubr.f32.mxu0 0.0
    %3729 = vmatmul.mubr.f32.gmra.mrb[0].mxu0 %v3657
    %v3730 = vpop.f32.mrb[0].mxu0
    %v3731 = vadd.f32 0.0, %v3730
    %v3732 = vpop.f32.mrb[0].mxu0
    %3733 = vdwg.mxu0
    %v3735 = vsel %vm2940, %v3557, 0
    %v3737 = vsel %vm2940, %v3558, 0
    %3739 = vmatprep.subr.mxu0 0.0
    %3740 = vmatpush1.msra.mxu0 %v3637
    %3741 = vmatprep.subr.mxu0 0.0
    %3742 = vmatpush1.msra.mxu0 %v3638
    %3743 = vmatprep.subr.mxu0 0.0
    %3744 = vmatpush1.msra.mxu0 %v3639
    %3745 = vmatprep.subr.mxu0 0.0
    %3746 = vmatpush1.msra.mxu0 %v3640
    %3747 = vmatprep.subr.mxu0 0.0
    %3748 = vmatpush1.msra.mxu0 %v3641
    %3749 = vmatprep.subr.mxu0 0.0
    %3750 = vmatpush1.msra.mxu0 %v3642
    %3751 = vmatprep.subr.mxu0 0.0
    %3752 = vmatpush1.msra.mxu0 %v3643
    %3753 = vmatprep.subr.mxu0 0.0
    %3754 = vmatpush1.msra.mxu0 %v3644
    %3755 = vmatprep.subr.mxu0 0.0
    %3756 = vmatpush1.msra.mxu0 0.0
    %3757 = vmatprep.subr.mxu0 0.0
    %3758 = vmatpush1.msra.mxu0 0.0
    %3759 = vmatprep.subr.mxu0 0.0
    %3760 = vmatpush1.msra.mxu0 0.0
    %3761 = vmatprep.subr.mxu0 0.0
    %3762 = vmatpush1.msra.mxu0 0.0
    %3763 = vmatprep.subr.mxu0 0.0
    %3764 = vmatpush1.msra.mxu0 0.0
    %3765 = vmatprep.subr.mxu0 0.0
    %3766 = vmatpush1.msra.mxu0 0.0
    %3767 = vmatprep.subr.mxu0 0.0
    %3768 = vmatpush1.msra.mxu0 0.0
    %3769 = vmatprep.subr.mxu0 0.0
    %3770 = vmatpush1.msra.mxu0 0.0
    %3771 = vmatprep.subr.mxu0 0.0
    %3772 = vmatpush1.msra.mxu0 0.0
    %3773 = vmatprep.subr.mxu0 0.0
    %3774 = vmatpush1.msra.mxu0 0.0
    %3775 = vmatprep.subr.mxu0 0.0
    %3776 = vmatpush1.msra.mxu0 0.0
    %3777 = vmatprep.subr.mxu0 0.0
    %3778 = vmatpush1.msra.mxu0 0.0
    %3779 = vmatprep.subr.mxu0 0.0
    %3780 = vmatpush1.msra.mxu0 0.0
    %3781 = vmatprep.subr.mxu0 0.0
    %3782 = vmatpush1.msra.mxu0 0.0
    %3783 = vmatprep.subr.mxu0 0.0
    %3784 = vmatpush1.msra.mxu0 0.0
    %3785 = vmatprep.subr.mxu0 0.0
    %3786 = vmatpush1.msra.mxu0 0.0
    %3787 = vmatprep.subr.mxu0 0.0
    %3788 = vmatpush1.msra.mxu0 0.0
    %3789 = vmatprep.subr.mxu0 0.0
    %3790 = vmatpush1.msra.mxu0 0.0
    %3791 = vmatprep.subr.mxu0 0.0
    %3792 = vmatpush1.msra.mxu0 0.0
    %3793 = vmatprep.subr.mxu0 0.0
    %3794 = vmatpush1.msra.mxu0 0.0
    %3795 = vmatprep.subr.mxu0 0.0
    %3796 = vmatpush1.msra.mxu0 0.0
    %3797 = vmatprep.subr.mxu0 0.0
    %3798 = vmatpush1.msra.mxu0 0.0
    %3799 = vmatprep.subr.mxu0 0.0
    %3800 = vmatpush1.msra.mxu0 0.0
    %3801 = vmatprep.subr.mxu0 0.0
    %3802 = vmatpush1.msra.mxu0 0.0
    %3803 = vmatprep.mubr.f32.mxu0 0.0
    %3804 = vmatmul.mubr.f32.gmra.mrb[0].mxu0 %v3735
    %v3805 = vpop.f32.mrb[0].mxu0
    %v3806 = vadd.f32 %v3726, %v3805
    %v3807 = vpop.f32.mrb[0].mxu0
    %3808 = vmatprep.mubr.f32.mxu0 0.0
    %3809 = vmatmul.mubr.f32.gmra.mrb[0].mxu0 %v3737
    %v3810 = vpop.f32.mrb[0].mxu0
    %v3811 = vadd.f32 %v3731, %v3810
    %v3812 = vpop.f32.mrb[0].mxu0
    %3813 = vdwg.mxu0
    %v3814 = vld [vmem:[%s119] sm:$0xff]
    %v3815 = vld [vmem:[%s119 + $0x8] sm:$0xff]
    %v3816 = vld [vmem:[%s119 + $0x10] sm:$0xff]
    %v3817 = vld [vmem:[%s119 + $0x18] sm:$0xff]
    %v3818 = vld [vmem:[%s119 + $0x20] sm:$0xff]
    %v3819 = vld [vmem:[%s119 + $0x28] sm:$0xff]
    %v3820 = vld [vmem:[%s119 + $0x30] sm:$0xff]
    %v3821 = vld [vmem:[%s119 + $0x38] sm:$0xff]
    %v3822 = vld [vmem:[%s123] sm:$0xff]
    %v3823 = vld [vmem:[%s123 + $0x8] sm:$0xff]
    %v3824 = vld [vmem:[%s123 + $0x10] sm:$0xff]
    %v3825 = vld [vmem:[%s123 + $0x18] sm:$0xff]
    %v3826 = vld [vmem:[%s123 + $0x20] sm:$0xff]
    %v3827 = vld [vmem:[%s123 + $0x28] sm:$0xff]
    %v3828 = vld [vmem:[%s123 + $0x30] sm:$0xff]
    %v3829 = vld [vmem:[%s123 + $0x38] sm:$0xff]
    %3830 = vmatprep.subr.mxu0 0.0
    %3831 = vmatpush1.msra.mxu0 %v3822
    %3832 = vmatprep.subr.mxu0 0.0
    %3833 = vmatpush1.msra.mxu0 %v3823
    %3834 = vmatprep.subr.mxu0 0.0
    %3835 = vmatpush1.msra.mxu0 %v3824
    %3836 = vmatprep.subr.mxu0 0.0
    %3837 = vmatpush1.msra.mxu0 %v3825
    %3838 = vmatprep.subr.mxu0 0.0
    %3839 = vmatpush1.msra.mxu0 %v3826
    %3840 = vmatprep.subr.mxu0 0.0
    %3841 = vmatpush1.msra.mxu0 %v3827
    %3842 = vmatprep.subr.mxu0 0.0
    %3843 = vmatpush1.msra.mxu0 %v3828
    %3844 = vmatprep.subr.mxu0 0.0
    %3845 = vmatpush1.msra.mxu0 %v3829
    %3846 = vmatprep.subr.mxu0 0.0
    %3847 = vmatpush1.msra.mxu0 0.0
    %3848 = vmatprep.subr.mxu0 0.0
    %3849 = vmatpush1.msra.mxu0 0.0
    %3850 = vmatprep.subr.mxu0 0.0
    %3851 = vmatpush1.msra.mxu0 0.0
    %3852 = vmatprep.subr.mxu0 0.0
    %3853 = vmatpush1.msra.mxu0 0.0
    %3854 = vmatprep.subr.mxu0 0.0
    %3855 = vmatpush1.msra.mxu0 0.0
    %3856 = vmatprep.subr.mxu0 0.0
    %3857 = vmatpush1.msra.mxu0 0.0
    %3858 = vmatprep.subr.mxu0 0.0
    %3859 = vmatpush1.msra.mxu0 0.0
    %3860 = vmatprep.subr.mxu0 0.0
    %3861 = vmatpush1.msra.mxu0 0.0
    %3862 = vmatprep.subr.mxu0 0.0
    %3863 = vmatpush1.msra.mxu0 0.0
    %3864 = vmatprep.subr.mxu0 0.0
    %3865 = vmatpush1.msra.mxu0 0.0
    %3866 = vmatprep.subr.mxu0 0.0
    %3867 = vmatpush1.msra.mxu0 0.0
    %3868 = vmatprep.subr.mxu0 0.0
    %3869 = vmatpush1.msra.mxu0 0.0
    %3870 = vmatprep.subr.mxu0 0.0
    %3871 = vmatpush1.msra.mxu0 0.0
    %3872 = vmatprep.subr.mxu0 0.0
    %3873 = vmatpush1.msra.mxu0 0.0
    %3874 = vmatprep.subr.mxu0 0.0
    %3875 = vmatpush1.msra.mxu0 0.0
    %3876 = vmatprep.subr.mxu0 0.0
    %3877 = vmatpush1.msra.mxu0 0.0
    %3878 = vmatprep.subr.mxu0 0.0
    %3879 = vmatpush1.msra.mxu0 0.0
    %3880 = vmatprep.subr.mxu0 0.0
    %3881 = vmatpush1.msra.mxu0 0.0
    %3882 = vmatprep.subr.mxu0 0.0
    %3883 = vmatpush1.msra.mxu0 0.0
    %3884 = vmatprep.subr.mxu0 0.0
    %3885 = vmatpush1.msra.mxu0 0.0
    %3886 = vmatprep.subr.mxu0 0.0
    %3887 = vmatpush1.msra.mxu0 0.0
    %3888 = vmatprep.subr.mxu0 0.0
    %3889 = vmatpush1.msra.mxu0 0.0
    %3890 = vmatprep.subr.mxu0 0.0
    %3891 = vmatpush1.msra.mxu0 0.0
    %3892 = vmatprep.subr.mxu0 0.0
    %3893 = vmatpush1.msra.mxu0 0.0
    %3894 = vmatprep.mubr.f32.mxu0 0.0
    %3895 = vmatmul.mubr.f32.gmra.mrb[0].mxu0 %v3654
    %v3896 = vpop.f32.mrb[0].mxu0
    %v3897 = vadd.f32 0.0, %v3896
    %v3898 = vpop.f32.mrb[0].mxu0
    %3899 = vmatprep.mubr.f32.mxu0 0.0
    %3900 = vmatmul.mubr.f32.gmra.mrb[0].mxu0 %v3657
    %v3901 = vpop.f32.mrb[0].mxu0
    %v3902 = vadd.f32 0.0, %v3901
    %v3903 = vpop.f32.mrb[0].mxu0
    %3904 = vdwg.mxu0
    %3905 = vmatprep.subr.mxu0 0.0
    %3906 = vmatpush1.msra.mxu0 %v3814
    %3907 = vmatprep.subr.mxu0 0.0
    %3908 = vmatpush1.msra.mxu0 %v3815
    %3909 = vmatprep.subr.mxu0 0.0
    %3910 = vmatpush1.msra.mxu0 %v3816
    %3911 = vmatprep.subr.mxu0 0.0
    %3912 = vmatpush1.msra.mxu0 %v3817
    %3913 = vmatprep.subr.mxu0 0.0
    %3914 = vmatpush1.msra.mxu0 %v3818
    %3915 = vmatprep.subr.mxu0 0.0
    %3916 = vmatpush1.msra.mxu0 %v3819
    %3917 = vmatprep.subr.mxu0 0.0
    %3918 = vmatpush1.msra.mxu0 %v3820
    %3919 = vmatprep.subr.mxu0 0.0
    %3920 = vmatpush1.msra.mxu0 %v3821
    %3921 = vmatprep.subr.mxu0 0.0
    %3922 = vmatpush1.msra.mxu0 0.0
    %3923 = vmatprep.subr.mxu0 0.0
    %3924 = vmatpush1.msra.mxu0 0.0
    %3925 = vmatprep.subr.mxu0 0.0
    %3926 = vmatpush1.msra.mxu0 0.0
    %3927 = vmatprep.subr.mxu0 0.0
    %3928 = vmatpush1.msra.mxu0 0.0
    %3929 = vmatprep.subr.mxu0 0.0
    %3930 = vmatpush1.msra.mxu0 0.0
    %3931 = vmatprep.subr.mxu0 0.0
    %3932 = vmatpush1.msra.mxu0 0.0
    %3933 = vmatprep.subr.mxu0 0.0
    %3934 = vmatpush1.msra.mxu0 0.0
    %3935 = vmatprep.subr.mxu0 0.0
    %3936 = vmatpush1.msra.mxu0 0.0
    %3937 = vmatprep.subr.mxu0 0.0
    %3938 = vmatpush1.msra.mxu0 0.0
    %3939 = vmatprep.subr.mxu0 0.0
    %3940 = vmatpush1.msra.mxu0 0.0
    %3941 = vmatprep.subr.mxu0 0.0
    %3942 = vmatpush1.msra.mxu0 0.0
    %3943 = vmatprep.subr.mxu0 0.0
    %3944 = vmatpush1.msra.mxu0 0.0
    %3945 = vmatprep.subr.mxu0 0.0
    %3946 = vmatpush1.msra.mxu0 0.0
    %3947 = vmatprep.subr.mxu0 0.0
    %3948 = vmatpush1.msra.mxu0 0.0
    %3949 = vmatprep.subr.mxu0 0.0
    %3950 = vmatpush1.msra.mxu0 0.0
    %3951 = vmatprep.subr.mxu0 0.0
    %3952 = vmatpush1.msra.mxu0 0.0
    %3953 = vmatprep.subr.mxu0 0.0
    %3954 = vmatpush1.msra.mxu0 0.0
    %3955 = vmatprep.subr.mxu0 0.0
    %3956 = vmatpush1.msra.mxu0 0.0
    %3957 = vmatprep.subr.mxu0 0.0
    %3958 = vmatpush1.msra.mxu0 0.0
    %3959 = vmatprep.subr.mxu0 0.0
    %3960 = vmatpush1.msra.mxu0 0.0
    %3961 = vmatprep.subr.mxu0 0.0
    %3962 = vmatpush1.msra.mxu0 0.0
    %3963 = vmatprep.subr.mxu0 0.0
    %3964 = vmatpush1.msra.mxu0 0.0
    %3965 = vmatprep.subr.mxu0 0.0
    %3966 = vmatpush1.msra.mxu0 0.0
    %3967 = vmatprep.subr.mxu0 0.0
    %3968 = vmatpush1.msra.mxu0 0.0
    %3969 = vmatprep.mubr.f32.mxu0 0.0
    %3970 = vmatmul.mubr.f32.gmra.mrb[0].mxu0 %v3735
    %v3971 = vpop.f32.mrb[0].mxu0
    %v3972 = vadd.f32 %v3897, %v3971
    %v3973 = vpop.f32.mrb[0].mxu0
    %3974 = vmatprep.mubr.f32.mxu0 0.0
    %3975 = vmatmul.mubr.f32.gmra.mrb[0].mxu0 %v3737
    %v3976 = vpop.f32.mrb[0].mxu0
    %v3977 = vadd.f32 %v3902, %v3976
    %v3978 = vpop.f32.mrb[0].mxu0
    %3979 = vdwg.mxu0
    %v3980 = vmul.f32 %v2203, %v3806
    %v3981 = vmul.f32 %v2208, %v3811
    %v3982 = vmul.f32 %v2215, %v3972
    %v3983 = vmul.f32 %v2220, %v3977
    %v3984 = vadd.f32 %v3980, %v3982
    %v3985 = vadd.f32 %v3981, %v3983
    %v3986 = vld [vmem:[%s115] sm:$0xff]
    %v3987 = vld [vmem:[%s115 + $0x8] sm:$0x7]
    %v3988 = vadd.f32 %v3984, %v3986
    %v3989 = vadd.f32 %v3985, %v3987
    %v3991 = vsel %vm765, %v586, 0
    %v3994 = vsel %vm765, %v587, 0
    %v3997 = vsel %vm772, %v3989, 0
    %3999 = vmatprep.subr.mxu0 0.0
    %4000 = vmatpush1.msra.mxu0 %v3988
    %4001 = vmatprep.subr.mxu0 0.0
    %4002 = vmatpush1.msra.mxu0 %v3997
    %4003 = vmatprep.subr.mxu0 0.0
    %4004 = vmatpush1.msra.mxu0 0.0
    %4005 = vmatprep.subr.mxu0 0.0
    %4006 = vmatpush1.msra.mxu0 0.0
    %4007 = vmatprep.subr.mxu0 0.0
    %4008 = vmatpush1.msra.mxu0 0.0
    %4009 = vmatprep.subr.mxu0 0.0
    %4010 = vmatpush1.msra.mxu0 0.0
    %4011 = vmatprep.subr.mxu0 0.0
    %4012 = vmatpush1.msra.mxu0 0.0
    %4013 = vmatprep.subr.mxu0 0.0
    %4014 = vmatpush1.msra.mxu0 0.0
    %4015 = vmatprep.subr.mxu0 0.0
    %4016 = vmatpush1.msra.mxu0 0.0
    %4017 = vmatprep.subr.mxu0 0.0
    %4018 = vmatpush1.msra.mxu0 0.0
    %4019 = vmatprep.subr.mxu0 0.0
    %4020 = vmatpush1.msra.mxu0 0.0
    %4021 = vmatprep.subr.mxu0 0.0
    %4022 = vmatpush1.msra.mxu0 0.0
    %4023 = vmatprep.subr.mxu0 0.0
    %4024 = vmatpush1.msra.mxu0 0.0
    %4025 = vmatprep.subr.mxu0 0.0
    %4026 = vmatpush1.msra.mxu0 0.0
    %4027 = vmatprep.subr.mxu0 0.0
    %4028 = vmatpush1.msra.mxu0 0.0
    %4029 = vmatprep.subr.mxu0 0.0
    %4030 = vmatpush1.msra.mxu0 0.0
    %4031 = vmatprep.subr.mxu0 0.0
    %4032 = vmatpush1.msra.mxu0 0.0
    %4033 = vmatprep.subr.mxu0 0.0
    %4034 = vmatpush1.msra.mxu0 0.0
    %4035 = vmatprep.subr.mxu0 0.0
    %4036 = vmatpush1.msra.mxu0 0.0
    %4037 = vmatprep.subr.mxu0 0.0
    %4038 = vmatpush1.msra.mxu0 0.0
    %4039 = vmatprep.subr.mxu0 0.0
    %4040 = vmatpush1.msra.mxu0 0.0
    %4041 = vmatprep.subr.mxu0 0.0
    %4042 = vmatpush1.msra.mxu0 0.0
    %4043 = vmatprep.subr.mxu0 0.0
    %4044 = vmatpush1.msra.mxu0 0.0
    %4045 = vmatprep.subr.mxu0 0.0
    %4046 = vmatpush1.msra.mxu0 0.0
    %4047 = vmatprep.subr.mxu0 0.0
    %4048 = vmatpush1.msra.mxu0 0.0
    %4049 = vmatprep.subr.mxu0 0.0
    %4050 = vmatpush1.msra.mxu0 0.0
    %4051 = vmatprep.subr.mxu0 0.0
    %4052 = vmatpush1.msra.mxu0 0.0
    %4053 = vmatprep.subr.mxu0 0.0
    %4054 = vmatpush1.msra.mxu0 0.0
    %4055 = vmatprep.subr.mxu0 0.0
    %4056 = vmatpush1.msra.mxu0 0.0
    %4057 = vmatprep.subr.mxu0 0.0
    %4058 = vmatpush1.msra.mxu0 0.0
    %4059 = vmatprep.subr.mxu0 0.0
    %4060 = vmatpush1.msra.mxu0 0.0
    %4061 = vmatprep.subr.mxu0 0.0
    %4062 = vmatpush1.msra.mxu0 0.0
    %4063 = vmatprep.mubr.f32.mxu0 0.0
    %4064 = vmatmul.mubr.f32.gmra.mrb[0].mxu0 %v3991
    %v4065 = vpop.f32.mrb[0].mxu0
    %v4066 = vadd.f32 0.0, %v4065
    %v4067 = vpop.f32.mrb[0].mxu0
    %4068 = vmatprep.mubr.f32.mxu0 0.0
    %4069 = vmatmul.mubr.f32.gmra.mrb[0].mxu0 %v3994
    %v4070 = vpop.f32.mrb[0].mxu0
    %v4071 = vadd.f32 0.0, %v4070
    %v4072 = vpop.f32.mrb[0].mxu0
    %4073 = vdwg.mxu0
    %v4075 = vsel %vm765, %v588, 0
    %v4078 = vsel %vm765, %v589, 0
    %4080 = vmatprep.subr.mxu0 0.0
    %4081 = vmatpush1.msra.mxu0 %v3988
    %4082 = vmatprep.subr.mxu0 0.0
    %4083 = vmatpush1.msra.mxu0 %v3997
    %4084 = vmatprep.subr.mxu0 0.0
    %4085 = vmatpush1.msra.mxu0 0.0
    %4086 = vmatprep.subr.mxu0 0.0
    %4087 = vmatpush1.msra.mxu0 0.0
    %4088 = vmatprep.subr.mxu0 0.0
    %4089 = vmatpush1.msra.mxu0 0.0
    %4090 = vmatprep.subr.mxu0 0.0
    %4091 = vmatpush1.msra.mxu0 0.0
    %4092 = vmatprep.subr.mxu0 0.0
    %4093 = vmatpush1.msra.mxu0 0.0
    %4094 = vmatprep.subr.mxu0 0.0
    %4095 = vmatpush1.msra.mxu0 0.0
    %4096 = vmatprep.subr.mxu0 0.0
    %4097 = vmatpush1.msra.mxu0 0.0
    %4098 = vmatprep.subr.mxu0 0.0
    %4099 = vmatpush1.msra.mxu0 0.0
    %4100 = vmatprep.subr.mxu0 0.0
    %4101 = vmatpush1.msra.mxu0 0.0
    %4102 = vmatprep.subr.mxu0 0.0
    %4103 = vmatpush1.msra.mxu0 0.0
    %4104 = vmatprep.subr.mxu0 0.0
    %4105 = vmatpush1.msra.mxu0 0.0
    %4106 = vmatprep.subr.mxu0 0.0
    %4107 = vmatpush1.msra.mxu0 0.0
    %4108 = vmatprep.subr.mxu0 0.0
    %4109 = vmatpush1.msra.mxu0 0.0
    %4110 = vmatprep.subr.mxu0 0.0
    %4111 = vmatpush1.msra.mxu0 0.0
    %4112 = vmatprep.subr.mxu0 0.0
    %4113 = vmatpush1.msra.mxu0 0.0
    %4114 = vmatprep.subr.mxu0 0.0
    %4115 = vmatpush1.msra.mxu0 0.0
    %4116 = vmatprep.subr.mxu0 0.0
    %4117 = vmatpush1.msra.mxu0 0.0
    %4118 = vmatprep.subr.mxu0 0.0
    %4119 = vmatpush1.msra.mxu0 0.0
    %4120 = vmatprep.subr.mxu0 0.0
    %4121 = vmatpush1.msra.mxu0 0.0
    %4122 = vmatprep.subr.mxu0 0.0
    %4123 = vmatpush1.msra.mxu0 0.0
    %4124 = vmatprep.subr.mxu0 0.0
    %4125 = vmatpush1.msra.mxu0 0.0
    %4126 = vmatprep.subr.mxu0 0.0
    %4127 = vmatpush1.msra.mxu0 0.0
    %4128 = vmatprep.subr.mxu0 0.0
    %4129 = vmatpush1.msra.mxu0 0.0
    %4130 = vmatprep.subr.mxu0 0.0
    %4131 = vmatpush1.msra.mxu0 0.0
    %4132 = vmatprep.subr.mxu0 0.0
    %4133 = vmatpush1.msra.mxu0 0.0
    %4134 = vmatprep.subr.mxu0 0.0
    %4135 = vmatpush1.msra.mxu0 0.0
    %4136 = vmatprep.subr.mxu0 0.0
    %4137 = vmatpush1.msra.mxu0 0.0
    %4138 = vmatprep.subr.mxu0 0.0
    %4139 = vmatpush1.msra.mxu0 0.0
    %4140 = vmatprep.subr.mxu0 0.0
    %4141 = vmatpush1.msra.mxu0 0.0
    %4142 = vmatprep.subr.mxu0 0.0
    %4143 = vmatpush1.msra.mxu0 0.0
    %4144 = vmatprep.mubr.f32.mxu0 0.0
    %4145 = vmatmul.mubr.f32.gmra.mrb[0].mxu0 %v4075
    %v4146 = vpop.f32.mrb[0].mxu0
    %v4147 = vadd.f32 0.0, %v4146
    %v4148 = vpop.f32.mrb[0].mxu0
    %4149 = vmatprep.mubr.f32.mxu0 0.0
    %4150 = vmatmul.mubr.f32.gmra.mrb[0].mxu0 %v4078
    %v4151 = vpop.f32.mrb[0].mxu0
    %v4152 = vadd.f32 0.0, %v4151
    %v4153 = vpop.f32.mrb[0].mxu0
    %4154 = vdwg.mxu0
    %4155 = vmatprep.subr.mxu0 0.0
    %4156 = vmatpush1.msra.mxu0 %v3557
    %4157 = vmatprep.subr.mxu0 0.0
    %4158 = vmatpush1.msra.mxu0 %v3560
    %4159 = vmatprep.subr.mxu0 0.0
    %4160 = vmatpush1.msra.mxu0 0.0
    %4161 = vmatprep.subr.mxu0 0.0
    %4162 = vmatpush1.msra.mxu0 0.0
    %4163 = vmatprep.subr.mxu0 0.0
    %4164 = vmatpush1.msra.mxu0 0.0
    %4165 = vmatprep.subr.mxu0 0.0
    %4166 = vmatpush1.msra.mxu0 0.0
    %4167 = vmatprep.subr.mxu0 0.0
    %4168 = vmatpush1.msra.mxu0 0.0
    %4169 = vmatprep.subr.mxu0 0.0
    %4170 = vmatpush1.msra.mxu0 0.0
    %4171 = vmatprep.subr.mxu0 0.0
    %4172 = vmatpush1.msra.mxu0 0.0
    %4173 = vmatprep.subr.mxu0 0.0
    %4174 = vmatpush1.msra.mxu0 0.0
    %4175 = vmatprep.subr.mxu0 0.0
    %4176 = vmatpush1.msra.mxu0 0.0
    %4177 = vmatprep.subr.mxu0 0.0
    %4178 = vmatpush1.msra.mxu0 0.0
    %4179 = vmatprep.subr.mxu0 0.0
    %4180 = vmatpush1.msra.mxu0 0.0
    %4181 = vmatprep.subr.mxu0 0.0
    %4182 = vmatpush1.msra.mxu0 0.0
    %4183 = vmatprep.subr.mxu0 0.0
    %4184 = vmatpush1.msra.mxu0 0.0
    %4185 = vmatprep.subr.mxu0 0.0
    %4186 = vmatpush1.msra.mxu0 0.0
    %4187 = vmatprep.subr.mxu0 0.0
    %4188 = vmatpush1.msra.mxu0 0.0
    %4189 = vmatprep.subr.mxu0 0.0
    %4190 = vmatpush1.msra.mxu0 0.0
    %4191 = vmatprep.subr.mxu0 0.0
    %4192 = vmatpush1.msra.mxu0 0.0
    %4193 = vmatprep.subr.mxu0 0.0
    %4194 = vmatpush1.msra.mxu0 0.0
    %4195 = vmatprep.subr.mxu0 0.0
    %4196 = vmatpush1.msra.mxu0 0.0
    %4197 = vmatprep.subr.mxu0 0.0
    %4198 = vmatpush1.msra.mxu0 0.0
    %4199 = vmatprep.subr.mxu0 0.0
    %4200 = vmatpush1.msra.mxu0 0.0
    %4201 = vmatprep.subr.mxu0 0.0
    %4202 = vmatpush1.msra.mxu0 0.0
    %4203 = vmatprep.subr.mxu0 0.0
    %4204 = vmatpush1.msra.mxu0 0.0
    %4205 = vmatprep.subr.mxu0 0.0
    %4206 = vmatpush1.msra.mxu0 0.0
    %4207 = vmatprep.subr.mxu0 0.0
    %4208 = vmatpush1.msra.mxu0 0.0
    %4209 = vmatprep.subr.mxu0 0.0
    %4210 = vmatpush1.msra.mxu0 0.0
    %4211 = vmatprep.subr.mxu0 0.0
    %4212 = vmatpush1.msra.mxu0 0.0
    %4213 = vmatprep.subr.mxu0 0.0
    %4214 = vmatpush1.msra.mxu0 0.0
    %4215 = vmatprep.subr.mxu0 0.0
    %4216 = vmatpush1.msra.mxu0 0.0
    %4217 = vmatprep.subr.mxu0 0.0
    %4218 = vmatpush1.msra.mxu0 0.0
    %4219 = vmatprep.mubr.f32.mxu0 0.0
    %4220 = vmatmul.mubr.f32.gmra.mrb[0].mxu0 %v3991
    %v4221 = vpop.f32.mrb[0].mxu0
    %v4222 = vadd.f32 0.0, %v4221
    %v4223 = vpop.f32.mrb[0].mxu0
    %4224 = vmatprep.mubr.f32.mxu0 0.0
    %4225 = vmatmul.mubr.f32.gmra.mrb[0].mxu0 %v3994
    %v4226 = vpop.f32.mrb[0].mxu0
    %v4227 = vadd.f32 0.0, %v4226
    %v4228 = vpop.f32.mrb[0].mxu0
    %4229 = vdwg.mxu0
    %4230 = vmatprep.subr.mxu0 0.0
    %4231 = vmatpush1.msra.mxu0 %v3557
    %4232 = vmatprep.subr.mxu0 0.0
    %4233 = vmatpush1.msra.mxu0 %v3560
    %4234 = vmatprep.subr.mxu0 0.0
    %4235 = vmatpush1.msra.mxu0 0.0
    %4236 = vmatprep.subr.mxu0 0.0
    %4237 = vmatpush1.msra.mxu0 0.0
    %4238 = vmatprep.subr.mxu0 0.0
    %4239 = vmatpush1.msra.mxu0 0.0
    %4240 = vmatprep.subr.mxu0 0.0
    %4241 = vmatpush1.msra.mxu0 0.0
    %4242 = vmatprep.subr.mxu0 0.0
    %4243 = vmatpush1.msra.mxu0 0.0
    %4244 = vmatprep.subr.mxu0 0.0
    %4245 = vmatpush1.msra.mxu0 0.0
    %4246 = vmatprep.subr.mxu0 0.0
    %4247 = vmatpush1.msra.mxu0 0.0
    %4248 = vmatprep.subr.mxu0 0.0
    %4249 = vmatpush1.msra.mxu0 0.0
    %4250 = vmatprep.subr.mxu0 0.0
    %4251 = vmatpush1.msra.mxu0 0.0
    %4252 = vmatprep.subr.mxu0 0.0
    %4253 = vmatpush1.msra.mxu0 0.0
    %4254 = vmatprep.subr.mxu0 0.0
    %4255 = vmatpush1.msra.mxu0 0.0
    %4256 = vmatprep.subr.mxu0 0.0
    %4257 = vmatpush1.msra.mxu0 0.0
    %4258 = vmatprep.subr.mxu0 0.0
    %4259 = vmatpush1.msra.mxu0 0.0
    %4260 = vmatprep.subr.mxu0 0.0
    %4261 = vmatpush1.msra.mxu0 0.0
    %4262 = vmatprep.subr.mxu0 0.0
    %4263 = vmatpush1.msra.mxu0 0.0
    %4264 = vmatprep.subr.mxu0 0.0
    %4265 = vmatpush1.msra.mxu0 0.0
    %4266 = vmatprep.subr.mxu0 0.0
    %4267 = vmatpush1.msra.mxu0 0.0
    %4268 = vmatprep.subr.mxu0 0.0
    %4269 = vmatpush1.msra.mxu0 0.0
    %4270 = vmatprep.subr.mxu0 0.0
    %4271 = vmatpush1.msra.mxu0 0.0
    %4272 = vmatprep.subr.mxu0 0.0
    %4273 = vmatpush1.msra.mxu0 0.0
    %4274 = vmatprep.subr.mxu0 0.0
    %4275 = vmatpush1.msra.mxu0 0.0
    %4276 = vmatprep.subr.mxu0 0.0
    %4277 = vmatpush1.msra.mxu0 0.0
    %4278 = vmatprep.subr.mxu0 0.0
    %4279 = vmatpush1.msra.mxu0 0.0
    %4280 = vmatprep.subr.mxu0 0.0
    %4281 = vmatpush1.msra.mxu0 0.0
    %4282 = vmatprep.subr.mxu0 0.0
    %4283 = vmatpush1.msra.mxu0 0.0
    %4284 = vmatprep.subr.mxu0 0.0
    %4285 = vmatpush1.msra.mxu0 0.0
    %4286 = vmatprep.subr.mxu0 0.0
    %4287 = vmatpush1.msra.mxu0 0.0
    %4288 = vmatprep.subr.mxu0 0.0
    %4289 = vmatpush1.msra.mxu0 0.0
    %4290 = vmatprep.subr.mxu0 0.0
    %4291 = vmatpush1.msra.mxu0 0.0
    %4292 = vmatprep.subr.mxu0 0.0
    %4293 = vmatpush1.msra.mxu0 0.0
    %4294 = vmatprep.mubr.f32.mxu0 0.0
    %4295 = vmatmul.mubr.f32.gmra.mrb[0].mxu0 %v4075
    %v4296 = vpop.f32.mrb[0].mxu0
    %v4297 = vadd.f32 0.0, %v4296
    %v4298 = vpop.f32.mrb[0].mxu0
    %4299 = vmatprep.mubr.f32.mxu0 0.0
    %4300 = vmatmul.mubr.f32.gmra.mrb[0].mxu0 %v4078
    %v4301 = vpop.f32.mrb[0].mxu0
    %v4302 = vadd.f32 0.0, %v4301
    %v4303 = vpop.f32.mrb[0].mxu0
    %4304 = vdwg.mxu0
    %v4305 = vld [vmem:[%s83] sm:$0xff]
    %v4306 = vld [vmem:[%s83 + $0x8] sm:$0xff]
    %v4307 = vld [vmem:[%s83 + $0x10] sm:$0xff]
    %v4308 = vld [vmem:[%s83 + $0x18] sm:$0xff]
    %v4309 = vld [vmem:[%s83 + $0x20] sm:$0xff]
    %v4310 = vld [vmem:[%s83 + $0x28] sm:$0xff]
    %v4311 = vld [vmem:[%s83 + $0x30] sm:$0xff]
    %v4312 = vld [vmem:[%s83 + $0x38] sm:$0xff]
    %v4313 = vld [vmem:[%s85] sm:$0xff]
    %v4314 = vld [vmem:[%s85 + $0x8] sm:$0xff]
    %v4315 = vld [vmem:[%s85 + $0x10] sm:$0xff]
    %v4316 = vld [vmem:[%s85 + $0x18] sm:$0xff]
    %v4317 = vld [vmem:[%s85 + $0x20] sm:$0xff]
    %v4318 = vld [vmem:[%s85 + $0x28] sm:$0xff]
    %v4319 = vld [vmem:[%s85 + $0x30] sm:$0xff]
    %v4320 = vld [vmem:[%s85 + $0x38] sm:$0xff]
    %v4322 = vsel %vm2940, %v4297, 0
    %v4325 = vsel %vm2940, %v4302, 0
    %4327 = vmatprep.subr.mxu0 0.0
    %4328 = vmatpush1.msra.mxu0 %v4313
    %4329 = vmatprep.subr.mxu0 0.0
    %4330 = vmatpush1.msra.mxu0 %v4314
    %4331 = vmatprep.subr.mxu0 0.0
    %4332 = vmatpush1.msra.mxu0 %v4315
    %4333 = vmatprep.subr.mxu0 0.0
    %4334 = vmatpush1.msra.mxu0 %v4316
    %4335 = vmatprep.subr.mxu0 0.0
    %4336 = vmatpush1.msra.mxu0 %v4317
    %4337 = vmatprep.subr.mxu0 0.0
    %4338 = vmatpush1.msra.mxu0 %v4318
    %4339 = vmatprep.subr.mxu0 0.0
    %4340 = vmatpush1.msra.mxu0 %v4319
    %4341 = vmatprep.subr.mxu0 0.0
    %4342 = vmatpush1.msra.mxu0 %v4320
    %4343 = vmatprep.subr.mxu0 0.0
    %4344 = vmatpush1.msra.mxu0 0.0
    %4345 = vmatprep.subr.mxu0 0.0
    %4346 = vmatpush1.msra.mxu0 0.0
    %4347 = vmatprep.subr.mxu0 0.0
    %4348 = vmatpush1.msra.mxu0 0.0
    %4349 = vmatprep.subr.mxu0 0.0
    %4350 = vmatpush1.msra.mxu0 0.0
    %4351 = vmatprep.subr.mxu0 0.0
    %4352 = vmatpush1.msra.mxu0 0.0
    %4353 = vmatprep.subr.mxu0 0.0
    %4354 = vmatpush1.msra.mxu0 0.0
    %4355 = vmatprep.subr.mxu0 0.0
    %4356 = vmatpush1.msra.mxu0 0.0
    %4357 = vmatprep.subr.mxu0 0.0
    %4358 = vmatpush1.msra.mxu0 0.0
    %4359 = vmatprep.subr.mxu0 0.0
    %4360 = vmatpush1.msra.mxu0 0.0
    %4361 = vmatprep.subr.mxu0 0.0
    %4362 = vmatpush1.msra.mxu0 0.0
    %4363 = vmatprep.subr.mxu0 0.0
    %4364 = vmatpush1.msra.mxu0 0.0
    %4365 = vmatprep.subr.mxu0 0.0
    %4366 = vmatpush1.msra.mxu0 0.0
    %4367 = vmatprep.subr.mxu0 0.0
    %4368 = vmatpush1.msra.mxu0 0.0
    %4369 = vmatprep.subr.mxu0 0.0
    %4370 = vmatpush1.msra.mxu0 0.0
    %4371 = vmatprep.subr.mxu0 0.0
    %4372 = vmatpush1.msra.mxu0 0.0
    %4373 = vmatprep.subr.mxu0 0.0
    %4374 = vmatpush1.msra.mxu0 0.0
    %4375 = vmatprep.subr.mxu0 0.0
    %4376 = vmatpush1.msra.mxu0 0.0
    %4377 = vmatprep.subr.mxu0 0.0
    %4378 = vmatpush1.msra.mxu0 0.0
    %4379 = vmatprep.subr.mxu0 0.0
    %4380 = vmatpush1.msra.mxu0 0.0
    %4381 = vmatprep.subr.mxu0 0.0
    %4382 = vmatpush1.msra.mxu0 0.0
    %4383 = vmatprep.subr.mxu0 0.0
    %4384 = vmatpush1.msra.mxu0 0.0
    %4385 = vmatprep.subr.mxu0 0.0
    %4386 = vmatpush1.msra.mxu0 0.0
    %4387 = vmatprep.subr.mxu0 0.0
    %4388 = vmatpush1.msra.mxu0 0.0
    %4389 = vmatprep.subr.mxu0 0.0
    %4390 = vmatpush1.msra.mxu0 0.0
    %4391 = vmatprep.mubr.f32.mxu0 0.0
    %4392 = vmatmul.mubr.f32.gmra.mrb[0].mxu0 %v4322
    %v4393 = vpop.f32.mrb[0].mxu0
    %v4394 = vadd.f32 0.0, %v4393
    %v4395 = vpop.f32.mrb[0].mxu0
    %4396 = vmatprep.mubr.f32.mxu0 0.0
    %4397 = vmatmul.mubr.f32.gmra.mrb[0].mxu0 %v4325
    %v4398 = vpop.f32.mrb[0].mxu0
    %v4399 = vadd.f32 0.0, %v4398
    %v4400 = vpop.f32.mrb[0].mxu0
    %4401 = vdwg.mxu0
    %v4403 = vsel %vm2940, %v4222, 0
    %v4406 = vsel %vm2940, %v4227, 0
    %4408 = vmatprep.subr.mxu0 0.0
    %4409 = vmatpush1.msra.mxu0 %v4305
    %4410 = vmatprep.subr.mxu0 0.0
    %4411 = vmatpush1.msra.mxu0 %v4306
    %4412 = vmatprep.subr.mxu0 0.0
    %4413 = vmatpush1.msra.mxu0 %v4307
    %4414 = vmatprep.subr.mxu0 0.0
    %4415 = vmatpush1.msra.mxu0 %v4308
    %4416 = vmatprep.subr.mxu0 0.0
    %4417 = vmatpush1.msra.mxu0 %v4309
    %4418 = vmatprep.subr.mxu0 0.0
    %4419 = vmatpush1.msra.mxu0 %v4310
    %4420 = vmatprep.subr.mxu0 0.0
    %4421 = vmatpush1.msra.mxu0 %v4311
    %4422 = vmatprep.subr.mxu0 0.0
    %4423 = vmatpush1.msra.mxu0 %v4312
    %4424 = vmatprep.subr.mxu0 0.0
    %4425 = vmatpush1.msra.mxu0 0.0
    %4426 = vmatprep.subr.mxu0 0.0
    %4427 = vmatpush1.msra.mxu0 0.0
    %4428 = vmatprep.subr.mxu0 0.0
    %4429 = vmatpush1.msra.mxu0 0.0
    %4430 = vmatprep.subr.mxu0 0.0
    %4431 = vmatpush1.msra.mxu0 0.0
    %4432 = vmatprep.subr.mxu0 0.0
    %4433 = vmatpush1.msra.mxu0 0.0
    %4434 = vmatprep.subr.mxu0 0.0
    %4435 = vmatpush1.msra.mxu0 0.0
    %4436 = vmatprep.subr.mxu0 0.0
    %4437 = vmatpush1.msra.mxu0 0.0
    %4438 = vmatprep.subr.mxu0 0.0
    %4439 = vmatpush1.msra.mxu0 0.0
    %4440 = vmatprep.subr.mxu0 0.0
    %4441 = vmatpush1.msra.mxu0 0.0
    %4442 = vmatprep.subr.mxu0 0.0
    %4443 = vmatpush1.msra.mxu0 0.0
    %4444 = vmatprep.subr.mxu0 0.0
    %4445 = vmatpush1.msra.mxu0 0.0
    %4446 = vmatprep.subr.mxu0 0.0
    %4447 = vmatpush1.msra.mxu0 0.0
    %4448 = vmatprep.subr.mxu0 0.0
    %4449 = vmatpush1.msra.mxu0 0.0
    %4450 = vmatprep.subr.mxu0 0.0
    %4451 = vmatpush1.msra.mxu0 0.0
    %4452 = vmatprep.subr.mxu0 0.0
    %4453 = vmatpush1.msra.mxu0 0.0
    %4454 = vmatprep.subr.mxu0 0.0
    %4455 = vmatpush1.msra.mxu0 0.0
    %4456 = vmatprep.subr.mxu0 0.0
    %4457 = vmatpush1.msra.mxu0 0.0
    %4458 = vmatprep.subr.mxu0 0.0
    %4459 = vmatpush1.msra.mxu0 0.0
    %4460 = vmatprep.subr.mxu0 0.0
    %4461 = vmatpush1.msra.mxu0 0.0
    %4462 = vmatprep.subr.mxu0 0.0
    %4463 = vmatpush1.msra.mxu0 0.0
    %4464 = vmatprep.subr.mxu0 0.0
    %4465 = vmatpush1.msra.mxu0 0.0
    %4466 = vmatprep.subr.mxu0 0.0
    %4467 = vmatpush1.msra.mxu0 0.0
    %4468 = vmatprep.subr.mxu0 0.0
    %4469 = vmatpush1.msra.mxu0 0.0
    %4470 = vmatprep.subr.mxu0 0.0
    %4471 = vmatpush1.msra.mxu0 0.0
    %4472 = vmatprep.mubr.f32.mxu0 0.0
    %4473 = vmatmul.mubr.f32.gmra.mrb[0].mxu0 %v4403
    %v4474 = vpop.f32.mrb[0].mxu0
    %v4475 = vadd.f32 %v4394, %v4474
    %v4476 = vpop.f32.mrb[0].mxu0
    %4477 = vmatprep.mubr.f32.mxu0 0.0
    %4478 = vmatmul.mubr.f32.gmra.mrb[0].mxu0 %v4406
    %v4479 = vpop.f32.mrb[0].mxu0
    %v4480 = vadd.f32 %v4399, %v4479
    %v4481 = vpop.f32.mrb[0].mxu0
    %4482 = vdwg.mxu0
    %v4483 = vld [vmem:[#allocation36] sm:$0x1]
    %v4485 = vlaneseq
    %v4486 = vshrl.u32 %v4485, 7
    %v4487 = vsub.s32 0, %v4486
    %v4488 = vrot.slane %v4483, %v4487
    %v4490 = vadd.f32 %v4475, %v4488
    %v4491 = vadd.f32 %v4480, %v4488
    %v4492 = vmax.f32 %v4490, 0.0
    %v4493 = vmax.f32 %v4491, 0.0
    %v4494 = vld [vmem:[%s89] sm:$0xff]
    %v4495 = vld [vmem:[%s89 + $0x8] sm:$0xff]
    %v4496 = vld [vmem:[%s89 + $0x10] sm:$0xff]
    %v4497 = vld [vmem:[%s89 + $0x18] sm:$0xff]
    %v4498 = vld [vmem:[#allocation38] sm:$0x1]
    %v4500 = vlaneseq
    %v4501 = vshrl.u32 %v4500, 7
    %v4502 = vsub.s32 0, %v4501
    %v4503 = vrot.slane %v4498, %v4502
    %v4506 = vsel %vm1093, %v4492, 0
    %v4509 = vsel %vm1093, %v4493, 0
    %4511 = vmatprep.subr.mxu0 0.0
    %4512 = vmatpush1.msra.mxu0 %v4494
    %4513 = vmatprep.subr.mxu0 0.0
    %4514 = vmatpush1.msra.mxu0 %v4495
    %4515 = vmatprep.subr.mxu0 0.0
    %4516 = vmatpush1.msra.mxu0 %v4496
    %4517 = vmatprep.subr.mxu0 0.0
    %4518 = vmatpush1.msra.mxu0 %v4497
    %4519 = vmatprep.subr.mxu0 0.0
    %4520 = vmatpush1.msra.mxu0 0.0
    %4521 = vmatprep.subr.mxu0 0.0
    %4522 = vmatpush1.msra.mxu0 0.0
    %4523 = vmatprep.subr.mxu0 0.0
    %4524 = vmatpush1.msra.mxu0 0.0
    %4525 = vmatprep.subr.mxu0 0.0
    %4526 = vmatpush1.msra.mxu0 0.0
    %4527 = vmatprep.subr.mxu0 0.0
    %4528 = vmatpush1.msra.mxu0 0.0
    %4529 = vmatprep.subr.mxu0 0.0
    %4530 = vmatpush1.msra.mxu0 0.0
    %4531 = vmatprep.subr.mxu0 0.0
    %4532 = vmatpush1.msra.mxu0 0.0
    %4533 = vmatprep.subr.mxu0 0.0
    %4534 = vmatpush1.msra.mxu0 0.0
    %4535 = vmatprep.subr.mxu0 0.0
    %4536 = vmatpush1.msra.mxu0 0.0
    %4537 = vmatprep.subr.mxu0 0.0
    %4538 = vmatpush1.msra.mxu0 0.0
    %4539 = vmatprep.subr.mxu0 0.0
    %4540 = vmatpush1.msra.mxu0 0.0
    %4541 = vmatprep.subr.mxu0 0.0
    %4542 = vmatpush1.msra.mxu0 0.0
    %4543 = vmatprep.subr.mxu0 0.0
    %4544 = vmatpush1.msra.mxu0 0.0
    %4545 = vmatprep.subr.mxu0 0.0
    %4546 = vmatpush1.msra.mxu0 0.0
    %4547 = vmatprep.subr.mxu0 0.0
    %4548 = vmatpush1.msra.mxu0 0.0
    %4549 = vmatprep.subr.mxu0 0.0
    %4550 = vmatpush1.msra.mxu0 0.0
    %4551 = vmatprep.subr.mxu0 0.0
    %4552 = vmatpush1.msra.mxu0 0.0
    %4553 = vmatprep.subr.mxu0 0.0
    %4554 = vmatpush1.msra.mxu0 0.0
    %4555 = vmatprep.subr.mxu0 0.0
    %4556 = vmatpush1.msra.mxu0 0.0
    %4557 = vmatprep.subr.mxu0 0.0
    %4558 = vmatpush1.msra.mxu0 0.0
    %4559 = vmatprep.subr.mxu0 0.0
    %4560 = vmatpush1.msra.mxu0 0.0
    %4561 = vmatprep.subr.mxu0 0.0
    %4562 = vmatpush1.msra.mxu0 0.0
    %4563 = vmatprep.subr.mxu0 0.0
    %4564 = vmatpush1.msra.mxu0 0.0
    %4565 = vmatprep.subr.mxu0 0.0
    %4566 = vmatpush1.msra.mxu0 0.0
    %4567 = vmatprep.subr.mxu0 0.0
    %4568 = vmatpush1.msra.mxu0 0.0
    %4569 = vmatprep.subr.mxu0 0.0
    %4570 = vmatpush1.msra.mxu0 0.0
    %4571 = vmatprep.subr.mxu0 0.0
    %4572 = vmatpush1.msra.mxu0 0.0
    %4573 = vmatprep.subr.mxu0 0.0
    %4574 = vmatpush1.msra.mxu0 0.0
    %4575 = vmatprep.mubr.f32.mxu0 0.0
    %4576 = vmatmul.mubr.f32.gmra.mrb[0].mxu0 %v4506
    %v4577 = vpop.f32.mrb[0].mxu0
    %v4578 = vadd.f32 %v4503, %v4577
    %v4579 = vpop.f32.mrb[0].mxu0
    %4580 = vmatprep.mubr.f32.mxu0 0.0
    %4581 = vmatmul.mubr.f32.gmra.mrb[0].mxu0 %v4509
    %v4582 = vpop.f32.mrb[0].mxu0
    %v4583 = vadd.f32 %v4503, %v4582
    %v4584 = vpop.f32.mrb[0].mxu0
    %4585 = vdwg.mxu0
    %v4586 = vmax.f32 %v4578, 0.0
    %v4587 = vmax.f32 %v4583, 0.0
    %v4588 = vld [vmem:[%s93] sm:$0xff]
    %v4589 = vld [vmem:[%s93 + $0x8] sm:$0xff]
    %v4590 = vld [vmem:[%s93 + $0x10] sm:$0xff]
    %v4591 = vld [vmem:[%s93 + $0x18] sm:$0xff]
    %v4592 = vld [vmem:[#allocation39] sm:$0x1]
    %v4594 = vlaneseq
    %v4595 = vshrl.u32 %v4594, 7
    %v4596 = vsub.s32 0, %v4595
    %v4597 = vrot.slane %v4592, %v4596
    %v4600 = vsel %vm1093, %v4586, 0
    %v4603 = vsel %vm1093, %v4587, 0
    %4605 = vmatprep.subr.mxu0 0.0
    %4606 = vmatpush1.msra.mxu0 %v4588
    %4607 = vmatprep.subr.mxu0 0.0
    %4608 = vmatpush1.msra.mxu0 %v4589
    %4609 = vmatprep.subr.mxu0 0.0
    %4610 = vmatpush1.msra.mxu0 %v4590
    %4611 = vmatprep.subr.mxu0 0.0
    %4612 = vmatpush1.msra.mxu0 %v4591
    %4613 = vmatprep.subr.mxu0 0.0
    %4614 = vmatpush1.msra.mxu0 0.0
    %4615 = vmatprep.subr.mxu0 0.0
    %4616 = vmatpush1.msra.mxu0 0.0
    %4617 = vmatprep.subr.mxu0 0.0
    %4618 = vmatpush1.msra.mxu0 0.0
    %4619 = vmatprep.subr.mxu0 0.0
    %4620 = vmatpush1.msra.mxu0 0.0
    %4621 = vmatprep.subr.mxu0 0.0
    %4622 = vmatpush1.msra.mxu0 0.0
    %4623 = vmatprep.subr.mxu0 0.0
    %4624 = vmatpush1.msra.mxu0 0.0
    %4625 = vmatprep.subr.mxu0 0.0
    %4626 = vmatpush1.msra.mxu0 0.0
    %4627 = vmatprep.subr.mxu0 0.0
    %4628 = vmatpush1.msra.mxu0 0.0
    %4629 = vmatprep.subr.mxu0 0.0
    %4630 = vmatpush1.msra.mxu0 0.0
    %4631 = vmatprep.subr.mxu0 0.0
    %4632 = vmatpush1.msra.mxu0 0.0
    %4633 = vmatprep.subr.mxu0 0.0
    %4634 = vmatpush1.msra.mxu0 0.0
    %4635 = vmatprep.subr.mxu0 0.0
    %4636 = vmatpush1.msra.mxu0 0.0
    %4637 = vmatprep.subr.mxu0 0.0
    %4638 = vmatpush1.msra.mxu0 0.0
    %4639 = vmatprep.subr.mxu0 0.0
    %4640 = vmatpush1.msra.mxu0 0.0
    %4641 = vmatprep.subr.mxu0 0.0
    %4642 = vmatpush1.msra.mxu0 0.0
    %4643 = vmatprep.subr.mxu0 0.0
    %4644 = vmatpush1.msra.mxu0 0.0
    %4645 = vmatprep.subr.mxu0 0.0
    %4646 = vmatpush1.msra.mxu0 0.0
    %4647 = vmatprep.subr.mxu0 0.0
    %4648 = vmatpush1.msra.mxu0 0.0
    %4649 = vmatprep.subr.mxu0 0.0
    %4650 = vmatpush1.msra.mxu0 0.0
    %4651 = vmatprep.subr.mxu0 0.0
    %4652 = vmatpush1.msra.mxu0 0.0
    %4653 = vmatprep.subr.mxu0 0.0
    %4654 = vmatpush1.msra.mxu0 0.0
    %4655 = vmatprep.subr.mxu0 0.0
    %4656 = vmatpush1.msra.mxu0 0.0
    %4657 = vmatprep.subr.mxu0 0.0
    %4658 = vmatpush1.msra.mxu0 0.0
    %4659 = vmatprep.subr.mxu0 0.0
    %4660 = vmatpush1.msra.mxu0 0.0
    %4661 = vmatprep.subr.mxu0 0.0
    %4662 = vmatpush1.msra.mxu0 0.0
    %4663 = vmatprep.subr.mxu0 0.0
    %4664 = vmatpush1.msra.mxu0 0.0
    %4665 = vmatprep.subr.mxu0 0.0
    %4666 = vmatpush1.msra.mxu0 0.0
    %4667 = vmatprep.subr.mxu0 0.0
    %4668 = vmatpush1.msra.mxu0 0.0
    %4669 = vmatprep.mubr.f32.mxu0 0.0
    %4670 = vmatmul.mubr.f32.gmra.mrb[0].mxu0 %v4600
    %v4671 = vpop.f32.mrb[0].mxu0
    %v4672 = vadd.f32 %v4597, %v4671
    %v4673 = vpop.f32.mrb[0].mxu0
    %4674 = vmatprep.mubr.f32.mxu0 0.0
    %4675 = vmatmul.mubr.f32.gmra.mrb[0].mxu0 %v4603
    %v4676 = vpop.f32.mrb[0].mxu0
    %v4677 = vadd.f32 %v4597, %v4676
    %v4678 = vpop.f32.mrb[0].mxu0
    %4679 = vdwg.mxu0
    %v4680 = vmax.f32 %v4672, 0.0
    %v4681 = vmax.f32 %v4677, 0.0
    %v4682 = vld [vmem:[%s97] sm:$0xff]
    %v4683 = vld [vmem:[%s97 + $0x8] sm:$0xff]
    %v4684 = vld [vmem:[%s97 + $0x10] sm:$0xff]
    %v4685 = vld [vmem:[%s97 + $0x18] sm:$0xff]
    %v4686 = vld [vmem:[%s99] sm:$0xff]
    %v4687 = vld [vmem:[%s99 + $0x8] sm:$0xff]
    %v4688 = vld [vmem:[%s99 + $0x10] sm:$0xff]
    %v4689 = vld [vmem:[%s99 + $0x18] sm:$0xff]
    %v4691 = vsel %vm1093, %v4147, 0
    %v4694 = vsel %vm1093, %v4152, 0
    %4696 = vmatprep.subr.mxu0 0.0
    %4697 = vmatpush1.msra.mxu0 %v4686
    %4698 = vmatprep.subr.mxu0 0.0
    %4699 = vmatpush1.msra.mxu0 %v4687
    %4700 = vmatprep.subr.mxu0 0.0
    %4701 = vmatpush1.msra.mxu0 %v4688
    %4702 = vmatprep.subr.mxu0 0.0
    %4703 = vmatpush1.msra.mxu0 %v4689
    %4704 = vmatprep.subr.mxu0 0.0
    %4705 = vmatpush1.msra.mxu0 0.0
    %4706 = vmatprep.subr.mxu0 0.0
    %4707 = vmatpush1.msra.mxu0 0.0
    %4708 = vmatprep.subr.mxu0 0.0
    %4709 = vmatpush1.msra.mxu0 0.0
    %4710 = vmatprep.subr.mxu0 0.0
    %4711 = vmatpush1.msra.mxu0 0.0
    %4712 = vmatprep.subr.mxu0 0.0
    %4713 = vmatpush1.msra.mxu0 0.0
    %4714 = vmatprep.subr.mxu0 0.0
    %4715 = vmatpush1.msra.mxu0 0.0
    %4716 = vmatprep.subr.mxu0 0.0
    %4717 = vmatpush1.msra.mxu0 0.0
    %4718 = vmatprep.subr.mxu0 0.0
    %4719 = vmatpush1.msra.mxu0 0.0
    %4720 = vmatprep.subr.mxu0 0.0
    %4721 = vmatpush1.msra.mxu0 0.0
    %4722 = vmatprep.subr.mxu0 0.0
    %4723 = vmatpush1.msra.mxu0 0.0
    %4724 = vmatprep.subr.mxu0 0.0
    %4725 = vmatpush1.msra.mxu0 0.0
    %4726 = vmatprep.subr.mxu0 0.0
    %4727 = vmatpush1.msra.mxu0 0.0
    %4728 = vmatprep.subr.mxu0 0.0
    %4729 = vmatpush1.msra.mxu0 0.0
    %4730 = vmatprep.subr.mxu0 0.0
    %4731 = vmatpush1.msra.mxu0 0.0
    %4732 = vmatprep.subr.mxu0 0.0
    %4733 = vmatpush1.msra.mxu0 0.0
    %4734 = vmatprep.subr.mxu0 0.0
    %4735 = vmatpush1.msra.mxu0 0.0
    %4736 = vmatprep.subr.mxu0 0.0
    %4737 = vmatpush1.msra.mxu0 0.0
    %4738 = vmatprep.subr.mxu0 0.0
    %4739 = vmatpush1.msra.mxu0 0.0
    %4740 = vmatprep.subr.mxu0 0.0
    %4741 = vmatpush1.msra.mxu0 0.0
    %4742 = vmatprep.subr.mxu0 0.0
    %4743 = vmatpush1.msra.mxu0 0.0
    %4744 = vmatprep.subr.mxu0 0.0
    %4745 = vmatpush1.msra.mxu0 0.0
    %4746 = vmatprep.subr.mxu0 0.0
    %4747 = vmatpush1.msra.mxu0 0.0
    %4748 = vmatprep.subr.mxu0 0.0
    %4749 = vmatpush1.msra.mxu0 0.0
    %4750 = vmatprep.subr.mxu0 0.0
    %4751 = vmatpush1.msra.mxu0 0.0
    %4752 = vmatprep.subr.mxu0 0.0
    %4753 = vmatpush1.msra.mxu0 0.0
    %4754 = vmatprep.subr.mxu0 0.0
    %4755 = vmatpush1.msra.mxu0 0.0
    %4756 = vmatprep.subr.mxu0 0.0
    %4757 = vmatpush1.msra.mxu0 0.0
    %4758 = vmatprep.subr.mxu0 0.0
    %4759 = vmatpush1.msra.mxu0 0.0
    %4760 = vmatprep.mubr.f32.mxu0 0.0
    %4761 = vmatmul.mubr.f32.gmra.mrb[0].mxu0 %v4691
    %v4762 = vpop.f32.mrb[0].mxu0
    %v4763 = vadd.f32 0.0, %v4762
    %v4764 = vpop.f32.mrb[0].mxu0
    %4765 = vmatprep.mubr.f32.mxu0 0.0
    %4766 = vmatmul.mubr.f32.gmra.mrb[0].mxu0 %v4694
    %v4767 = vpop.f32.mrb[0].mxu0
    %v4768 = vadd.f32 0.0, %v4767
    %v4769 = vpop.f32.mrb[0].mxu0
    %4770 = vdwg.mxu0
    %v4772 = vsel %vm1093, %v4066, 0
    %v4775 = vsel %vm1093, %v4071, 0
    %4777 = vmatprep.subr.mxu0 0.0
    %4778 = vmatpush1.msra.mxu0 %v4682
    %4779 = vmatprep.subr.mxu0 0.0
    %4780 = vmatpush1.msra.mxu0 %v4683
    %4781 = vmatprep.subr.mxu0 0.0
    %4782 = vmatpush1.msra.mxu0 %v4684
    %4783 = vmatprep.subr.mxu0 0.0
    %4784 = vmatpush1.msra.mxu0 %v4685
    %4785 = vmatprep.subr.mxu0 0.0
    %4786 = vmatpush1.msra.mxu0 0.0
    %4787 = vmatprep.subr.mxu0 0.0
    %4788 = vmatpush1.msra.mxu0 0.0
    %4789 = vmatprep.subr.mxu0 0.0
    %4790 = vmatpush1.msra.mxu0 0.0
    %4791 = vmatprep.subr.mxu0 0.0
    %4792 = vmatpush1.msra.mxu0 0.0
    %4793 = vmatprep.subr.mxu0 0.0
    %4794 = vmatpush1.msra.mxu0 0.0
    %4795 = vmatprep.subr.mxu0 0.0
    %4796 = vmatpush1.msra.mxu0 0.0
    %4797 = vmatprep.subr.mxu0 0.0
    %4798 = vmatpush1.msra.mxu0 0.0
    %4799 = vmatprep.subr.mxu0 0.0
    %4800 = vmatpush1.msra.mxu0 0.0
    %4801 = vmatprep.subr.mxu0 0.0
    %4802 = vmatpush1.msra.mxu0 0.0
    %4803 = vmatprep.subr.mxu0 0.0
    %4804 = vmatpush1.msra.mxu0 0.0
    %4805 = vmatprep.subr.mxu0 0.0
    %4806 = vmatpush1.msra.mxu0 0.0
    %4807 = vmatprep.subr.mxu0 0.0
    %4808 = vmatpush1.msra.mxu0 0.0
    %4809 = vmatprep.subr.mxu0 0.0
    %4810 = vmatpush1.msra.mxu0 0.0
    %4811 = vmatprep.subr.mxu0 0.0
    %4812 = vmatpush1.msra.mxu0 0.0
    %4813 = vmatprep.subr.mxu0 0.0
    %4814 = vmatpush1.msra.mxu0 0.0
    %4815 = vmatprep.subr.mxu0 0.0
    %4816 = vmatpush1.msra.mxu0 0.0
    %4817 = vmatprep.subr.mxu0 0.0
    %4818 = vmatpush1.msra.mxu0 0.0
    %4819 = vmatprep.subr.mxu0 0.0
    %4820 = vmatpush1.msra.mxu0 0.0
    %4821 = vmatprep.subr.mxu0 0.0
    %4822 = vmatpush1.msra.mxu0 0.0
    %4823 = vmatprep.subr.mxu0 0.0
    %4824 = vmatpush1.msra.mxu0 0.0
    %4825 = vmatprep.subr.mxu0 0.0
    %4826 = vmatpush1.msra.mxu0 0.0
    %4827 = vmatprep.subr.mxu0 0.0
    %4828 = vmatpush1.msra.mxu0 0.0
    %4829 = vmatprep.subr.mxu0 0.0
    %4830 = vmatpush1.msra.mxu0 0.0
    %4831 = vmatprep.subr.mxu0 0.0
    %4832 = vmatpush1.msra.mxu0 0.0
    %4833 = vmatprep.subr.mxu0 0.0
    %4834 = vmatpush1.msra.mxu0 0.0
    %4835 = vmatprep.subr.mxu0 0.0
    %4836 = vmatpush1.msra.mxu0 0.0
    %4837 = vmatprep.subr.mxu0 0.0
    %4838 = vmatpush1.msra.mxu0 0.0
    %4839 = vmatprep.subr.mxu0 0.0
    %4840 = vmatpush1.msra.mxu0 0.0
    %4841 = vmatprep.mubr.f32.mxu0 0.0
    %4842 = vmatmul.mubr.f32.gmra.mrb[0].mxu0 %v4772
    %v4843 = vpop.f32.mrb[0].mxu0
    %v4844 = vadd.f32 %v4763, %v4843
    %v4845 = vpop.f32.mrb[0].mxu0
    %4846 = vmatprep.mubr.f32.mxu0 0.0
    %4847 = vmatmul.mubr.f32.gmra.mrb[0].mxu0 %v4775
    %v4848 = vpop.f32.mrb[0].mxu0
    %v4849 = vadd.f32 %v4768, %v4848
    %v4850 = vpop.f32.mrb[0].mxu0
    %4851 = vdwg.mxu0
    %v4852 = vld [vmem:[#allocation41] sm:$0x1]
    %v4854 = vlaneseq
    %v4855 = vshrl.u32 %v4854, 7
    %v4856 = vsub.s32 0, %v4855
    %v4857 = vrot.slane %v4852, %v4856
    %v4859 = vadd.f32 %v4844, %v4857
    %v4860 = vadd.f32 %v4849, %v4857
    %v4861 = vmax.f32 %v4859, 0.0
    %v4862 = vmax.f32 %v4860, 0.0
    %v4863 = vld [vmem:[%s103] sm:$0xff]
    %v4864 = vld [vmem:[%s103 + $0x8] sm:$0xff]
    %v4865 = vld [vmem:[%s103 + $0x10] sm:$0xff]
    %v4866 = vld [vmem:[%s103 + $0x18] sm:$0xff]
    %v4867 = vld [vmem:[#allocation42] sm:$0x1]
    %v4869 = vlaneseq
    %v4870 = vshrl.u32 %v4869, 7
    %v4871 = vsub.s32 0, %v4870
    %v4872 = vrot.slane %v4867, %v4871
    %v4875 = vsel %vm1093, %v4861, 0
    %v4878 = vsel %vm1093, %v4862, 0
    %4880 = vmatprep.subr.mxu0 0.0
    %4881 = vmatpush1.msra.mxu0 %v4863
    %4882 = vmatprep.subr.mxu0 0.0
    %4883 = vmatpush1.msra.mxu0 %v4864
    %4884 = vmatprep.subr.mxu0 0.0
    %4885 = vmatpush1.msra.mxu0 %v4865
    %4886 = vmatprep.subr.mxu0 0.0
    %4887 = vmatpush1.msra.mxu0 %v4866
    %4888 = vmatprep.subr.mxu0 0.0
    %4889 = vmatpush1.msra.mxu0 0.0
    %4890 = vmatprep.subr.mxu0 0.0
    %4891 = vmatpush1.msra.mxu0 0.0
    %4892 = vmatprep.subr.mxu0 0.0
    %4893 = vmatpush1.msra.mxu0 0.0
    %4894 = vmatprep.subr.mxu0 0.0
    %4895 = vmatpush1.msra.mxu0 0.0
    %4896 = vmatprep.subr.mxu0 0.0
    %4897 = vmatpush1.msra.mxu0 0.0
    %4898 = vmatprep.subr.mxu0 0.0
    %4899 = vmatpush1.msra.mxu0 0.0
    %4900 = vmatprep.subr.mxu0 0.0
    %4901 = vmatpush1.msra.mxu0 0.0
    %4902 = vmatprep.subr.mxu0 0.0
    %4903 = vmatpush1.msra.mxu0 0.0
    %4904 = vmatprep.subr.mxu0 0.0
    %4905 = vmatpush1.msra.mxu0 0.0
    %4906 = vmatprep.subr.mxu0 0.0
    %4907 = vmatpush1.msra.mxu0 0.0
    %4908 = vmatprep.subr.mxu0 0.0
    %4909 = vmatpush1.msra.mxu0 0.0
    %4910 = vmatprep.subr.mxu0 0.0
    %4911 = vmatpush1.msra.mxu0 0.0
    %4912 = vmatprep.subr.mxu0 0.0
    %4913 = vmatpush1.msra.mxu0 0.0
    %4914 = vmatprep.subr.mxu0 0.0
    %4915 = vmatpush1.msra.mxu0 0.0
    %4916 = vmatprep.subr.mxu0 0.0
    %4917 = vmatpush1.msra.mxu0 0.0
    %4918 = vmatprep.subr.mxu0 0.0
    %4919 = vmatpush1.msra.mxu0 0.0
    %4920 = vmatprep.subr.mxu0 0.0
    %4921 = vmatpush1.msra.mxu0 0.0
    %4922 = vmatprep.subr.mxu0 0.0
    %4923 = vmatpush1.msra.mxu0 0.0
    %4924 = vmatprep.subr.mxu0 0.0
    %4925 = vmatpush1.msra.mxu0 0.0
    %4926 = vmatprep.subr.mxu0 0.0
    %4927 = vmatpush1.msra.mxu0 0.0
    %4928 = vmatprep.subr.mxu0 0.0
    %4929 = vmatpush1.msra.mxu0 0.0
    %4930 = vmatprep.subr.mxu0 0.0
    %4931 = vmatpush1.msra.mxu0 0.0
    %4932 = vmatprep.subr.mxu0 0.0
    %4933 = vmatpush1.msra.mxu0 0.0
    %4934 = vmatprep.subr.mxu0 0.0
    %4935 = vmatpush1.msra.mxu0 0.0
    %4936 = vmatprep.subr.mxu0 0.0
    %4937 = vmatpush1.msra.mxu0 0.0
    %4938 = vmatprep.subr.mxu0 0.0
    %4939 = vmatpush1.msra.mxu0 0.0
    %4940 = vmatprep.subr.mxu0 0.0
    %4941 = vmatpush1.msra.mxu0 0.0
    %4942 = vmatprep.subr.mxu0 0.0
    %4943 = vmatpush1.msra.mxu0 0.0
    %4944 = vmatprep.mubr.f32.mxu0 0.0
    %4945 = vmatmul.mubr.f32.gmra.mrb[0].mxu0 %v4875
    %v4946 = vpop.f32.mrb[0].mxu0
    %v4947 = vadd.f32 %v4872, %v4946
    %v4948 = vpop.f32.mrb[0].mxu0
    %4949 = vmatprep.mubr.f32.mxu0 0.0
    %4950 = vmatmul.mubr.f32.gmra.mrb[0].mxu0 %v4878
    %v4951 = vpop.f32.mrb[0].mxu0
    %v4952 = vadd.f32 %v4872, %v4951
    %v4953 = vpop.f32.mrb[0].mxu0
    %4954 = vdwg.mxu0
    %v4955 = vmax.f32 %v4947, 0.0
    %v4956 = vmax.f32 %v4952, 0.0
    %v4958 = vlaneseq
    %v4959 = vshrl.u32 %v4958, 7
    %v4960 = vsub.s32 0, %v4959
    %v4961 = vrot.slane %v591, %v4960
    %4962 = vset.pattern.permute.xlu0 0
    %4963 = vperm.xlu0 %4962, %v4961
    %v4964 = vpop.permute.xlu0 %4963
    %v4966 = vmul.f32 %v4964, %v568
    %v4967 = vmul.f32 %v4964, %v569
    %v4969 = vlaneseq
    %v4970 = vshrl.u32 %v4969, 7
    %v4971 = vsub.s32 0, %v4970
    %v4972 = vrot.slane %v593, %v4971
    %4973 = vset.pattern.permute.xlu0 0
    %4974 = vperm.xlu0 %4973, %v4972
    %v4975 = vpop.permute.xlu0 %4974
    %v4977 = vmul.f32 %v4975, %v4680
    %v4978 = vmul.f32 %v4975, %v4681
    %v4979 = vadd.f32 %v4966, %v4977
    %v4980 = vadd.f32 %v4967, %v4978
    %v4981 = vadd.f32 %v4979, %v4955
    %v4982 = vadd.f32 %v4980, %v4956
    %v4983 = vld [vmem:[%s75] sm:$0xff]
    %v4984 = vld [vmem:[%s75 + $0x8] sm:$0xff]
    %v4985 = vld [vmem:[%s75 + $0x10] sm:$0xff]
    %v4986 = vld [vmem:[%s75 + $0x18] sm:$0xff]
    %v4987 = vld [vmem:[#allocation33] sm:$0x1]
    %v4989 = vlaneseq
    %v4990 = vshrl.u32 %v4989, 7
    %v4991 = vsub.s32 0, %v4990
    %v4992 = vrot.slane %v4987, %v4991
    %v4995 = vsel %vm1093, %v4981, 0
    %v4998 = vsel %vm1093, %v4982, 0
    %5000 = vmatprep.subr.mxu0 0.0
    %5001 = vmatpush1.msra.mxu0 %v4983
    %5002 = vmatprep.subr.mxu0 0.0
    %5003 = vmatpush1.msra.mxu0 %v4984
    %5004 = vmatprep.subr.mxu0 0.0
    %5005 = vmatpush1.msra.mxu0 %v4985
    %5006 = vmatprep.subr.mxu0 0.0
    %5007 = vmatpush1.msra.mxu0 %v4986
    %5008 = vmatprep.subr.mxu0 0.0
    %5009 = vmatpush1.msra.mxu0 0.0
    %5010 = vmatprep.subr.mxu0 0.0
    %5011 = vmatpush1.msra.mxu0 0.0
    %5012 = vmatprep.subr.mxu0 0.0
    %5013 = vmatpush1.msra.mxu0 0.0
    %5014 = vmatprep.subr.mxu0 0.0
    %5015 = vmatpush1.msra.mxu0 0.0
    %5016 = vmatprep.subr.mxu0 0.0
    %5017 = vmatpush1.msra.mxu0 0.0
    %5018 = vmatprep.subr.mxu0 0.0
    %5019 = vmatpush1.msra.mxu0 0.0
    %5020 = vmatprep.subr.mxu0 0.0
    %5021 = vmatpush1.msra.mxu0 0.0
    %5022 = vmatprep.subr.mxu0 0.0
    %5023 = vmatpush1.msra.mxu0 0.0
    %5024 = vmatprep.subr.mxu0 0.0
    %5025 = vmatpush1.msra.mxu0 0.0
    %5026 = vmatprep.subr.mxu0 0.0
    %5027 = vmatpush1.msra.mxu0 0.0
    %5028 = vmatprep.subr.mxu0 0.0
    %5029 = vmatpush1.msra.mxu0 0.0
    %5030 = vmatprep.subr.mxu0 0.0
    %5031 = vmatpush1.msra.mxu0 0.0
    %5032 = vmatprep.subr.mxu0 0.0
    %5033 = vmatpush1.msra.mxu0 0.0
    %5034 = vmatprep.subr.mxu0 0.0
    %5035 = vmatpush1.msra.mxu0 0.0
    %5036 = vmatprep.subr.mxu0 0.0
    %5037 = vmatpush1.msra.mxu0 0.0
    %5038 = vmatprep.subr.mxu0 0.0
    %5039 = vmatpush1.msra.mxu0 0.0
    %5040 = vmatprep.subr.mxu0 0.0
    %5041 = vmatpush1.msra.mxu0 0.0
    %5042 = vmatprep.subr.mxu0 0.0
    %5043 = vmatpush1.msra.mxu0 0.0
    %5044 = vmatprep.subr.mxu0 0.0
    %5045 = vmatpush1.msra.mxu0 0.0
    %5046 = vmatprep.subr.mxu0 0.0
    %5047 = vmatpush1.msra.mxu0 0.0
    %5048 = vmatprep.subr.mxu0 0.0
    %5049 = vmatpush1.msra.mxu0 0.0
    %5050 = vmatprep.subr.mxu0 0.0
    %5051 = vmatpush1.msra.mxu0 0.0
    %5052 = vmatprep.subr.mxu0 0.0
    %5053 = vmatpush1.msra.mxu0 0.0
    %5054 = vmatprep.subr.mxu0 0.0
    %5055 = vmatpush1.msra.mxu0 0.0
    %5056 = vmatprep.subr.mxu0 0.0
    %5057 = vmatpush1.msra.mxu0 0.0
    %5058 = vmatprep.subr.mxu0 0.0
    %5059 = vmatpush1.msra.mxu0 0.0
    %5060 = vmatprep.subr.mxu0 0.0
    %5061 = vmatpush1.msra.mxu0 0.0
    %5062 = vmatprep.subr.mxu0 0.0
    %5063 = vmatpush1.msra.mxu0 0.0
    %5064 = vmatprep.mubr.f32.mxu0 0.0
    %5065 = vmatmul.mubr.f32.gmra.mrb[0].mxu0 %v4995
    %v5066 = vpop.f32.mrb[0].mxu0
    %v5067 = vadd.f32 %v4992, %v5066
    %v5068 = vpop.f32.mrb[0].mxu0
    %5069 = vmatprep.mubr.f32.mxu0 0.0
    %5070 = vmatmul.mubr.f32.gmra.mrb[0].mxu0 %v4998
    %v5071 = vpop.f32.mrb[0].mxu0
    %v5072 = vadd.f32 %v4992, %v5071
    %v5073 = vpop.f32.mrb[0].mxu0
    %5074 = vdwg.mxu0
    %v5075 = vmax.f32 %v5067, 0.0
    %v5076 = vmax.f32 %v5072, 0.0
    %v5077 = vld [vmem:[%s79] sm:$0xff]
    %v5078 = vld [vmem:[%s79 + $0x8] sm:$0xff]
    %v5079 = vld [vmem:[%s79 + $0x10] sm:$0xff]
    %v5080 = vld [vmem:[%s79 + $0x18] sm:$0xff]
    %v5081 = vld [vmem:[#allocation35] sm:$0x1]
    %v5083 = vlaneseq
    %v5084 = vshrl.u32 %v5083, 7
    %v5085 = vsub.s32 0, %v5084
    %v5086 = vrot.slane %v5081, %v5085
    %v5089 = vsel %vm1093, %v5075, 0
    %v5092 = vsel %vm1093, %v5076, 0
    %5094 = vmatprep.subr.mxu0 0.0
    %5095 = vmatpush1.msra.mxu0 %v5077
    %5096 = vmatprep.subr.mxu0 0.0
    %5097 = vmatpush1.msra.mxu0 %v5078
    %5098 = vmatprep.subr.mxu0 0.0
    %5099 = vmatpush1.msra.mxu0 %v5079
    %5100 = vmatprep.subr.mxu0 0.0
    %5101 = vmatpush1.msra.mxu0 %v5080
    %5102 = vmatprep.subr.mxu0 0.0
    %5103 = vmatpush1.msra.mxu0 0.0
    %5104 = vmatprep.subr.mxu0 0.0
    %5105 = vmatpush1.msra.mxu0 0.0
    %5106 = vmatprep.subr.mxu0 0.0
    %5107 = vmatpush1.msra.mxu0 0.0
    %5108 = vmatprep.subr.mxu0 0.0
    %5109 = vmatpush1.msra.mxu0 0.0
    %5110 = vmatprep.subr.mxu0 0.0
    %5111 = vmatpush1.msra.mxu0 0.0
    %5112 = vmatprep.subr.mxu0 0.0
    %5113 = vmatpush1.msra.mxu0 0.0
    %5114 = vmatprep.subr.mxu0 0.0
    %5115 = vmatpush1.msra.mxu0 0.0
    %5116 = vmatprep.subr.mxu0 0.0
    %5117 = vmatpush1.msra.mxu0 0.0
    %5118 = vmatprep.subr.mxu0 0.0
    %5119 = vmatpush1.msra.mxu0 0.0
    %5120 = vmatprep.subr.mxu0 0.0
    %5121 = vmatpush1.msra.mxu0 0.0
    %5122 = vmatprep.subr.mxu0 0.0
    %5123 = vmatpush1.msra.mxu0 0.0
    %5124 = vmatprep.subr.mxu0 0.0
    %5125 = vmatpush1.msra.mxu0 0.0
    %5126 = vmatprep.subr.mxu0 0.0
    %5127 = vmatpush1.msra.mxu0 0.0
    %5128 = vmatprep.subr.mxu0 0.0
    %5129 = vmatpush1.msra.mxu0 0.0
    %5130 = vmatprep.subr.mxu0 0.0
    %5131 = vmatpush1.msra.mxu0 0.0
    %5132 = vmatprep.subr.mxu0 0.0
    %5133 = vmatpush1.msra.mxu0 0.0
    %5134 = vmatprep.subr.mxu0 0.0
    %5135 = vmatpush1.msra.mxu0 0.0
    %5136 = vmatprep.subr.mxu0 0.0
    %5137 = vmatpush1.msra.mxu0 0.0
    %5138 = vmatprep.subr.mxu0 0.0
    %5139 = vmatpush1.msra.mxu0 0.0
    %5140 = vmatprep.subr.mxu0 0.0
    %5141 = vmatpush1.msra.mxu0 0.0
    %5142 = vmatprep.subr.mxu0 0.0
    %5143 = vmatpush1.msra.mxu0 0.0
    %5144 = vmatprep.subr.mxu0 0.0
    %5145 = vmatpush1.msra.mxu0 0.0
    %5146 = vmatprep.subr.mxu0 0.0
    %5147 = vmatpush1.msra.mxu0 0.0
    %5148 = vmatprep.subr.mxu0 0.0
    %5149 = vmatpush1.msra.mxu0 0.0
    %5150 = vmatprep.subr.mxu0 0.0
    %5151 = vmatpush1.msra.mxu0 0.0
    %5152 = vmatprep.subr.mxu0 0.0
    %5153 = vmatpush1.msra.mxu0 0.0
    %5154 = vmatprep.subr.mxu0 0.0
    %5155 = vmatpush1.msra.mxu0 0.0
    %5156 = vmatprep.subr.mxu0 0.0
    %5157 = vmatpush1.msra.mxu0 0.0
    %5158 = vmatprep.mubr.f32.mxu0 0.0
    %5159 = vmatmul.mubr.f32.gmra.mrb[0].mxu0 %v5089
    %v5160 = vpop.f32.mrb[0].mxu0
    %v5161 = vadd.f32 %v5086, %v5160
    %v5162 = vpop.f32.mrb[0].mxu0
    %5163 = vmatprep.mubr.f32.mxu0 0.0
    %5164 = vmatmul.mubr.f32.gmra.mrb[0].mxu0 %v5092
    %v5165 = vpop.f32.mrb[0].mxu0
    %v5166 = vadd.f32 %v5086, %v5165
    %v5167 = vpop.f32.mrb[0].mxu0
    %5168 = vdwg.mxu0
    %v5169 = vmax.f32 %v5161, 0.0
    %v5170 = vmax.f32 %v5166, 0.0
    %5171 = vst.msk [vmem:[#allocation44] sm:$0xff] %vm1093, %v5169
    %vm5172 = vcmask 257024
    %5173 = vst.msk [vmem:[#allocation44 + $0x8] sm:$0xf] %vm5172, %v5170
    %5174 = vst.msk [vmem:[#allocation45] sm:$0xff] %vm1093, %v3116
    %vm5175 = vcmask 256000
    %5176 = vst.msk [vmem:[#allocation45 + $0x8] sm:$0x7] %vm5175, %v3117
    // Predicated region
    $region354: #{tpu_custom_call.1} parent=1 // pred_check
      _
    $region355: #{tpu_custom_call.1} parent=1 // pred_check_branch
      %5178 = sbr.rel (0) target = $region357
    $region356: #{tpu_custom_call.1} parent=1 // pred_region
      %s5180 = ssub.s32 256, 256
      %5181 = vsyncadd [#allocation8], %s5180
      %s5182 = sshll.u32 [#allocation44], 4
      %s5183 = int_to_ptr.vmem [resolvable:$true] %s5182
      %5188 = dma.vmem_to_hbm [thread:$0]  %s5183, 256, %s129, [#allocation8], 128, 128, 8
    $region357: #{tpu_custom_call.1} parent=1 // pred_fallthru
      _
    // Predicated region
    $region358: #{tpu_custom_call.1} parent=1 // pred_check
      _
    $region359: #{tpu_custom_call.1} parent=1 // pred_check_branch
      %5190 = sbr.rel (0) target = $region361
    $region360: #{tpu_custom_call.1} parent=1 // pred_region
      %s5192 = ssub.s32 256, 256
      %5193 = vsyncadd [#allocation46], %s5192
      %s5194 = sshll.u32 [#allocation45], 4
      %s5195 = int_to_ptr.vmem [resolvable:$true] %s5194
      %5200 = dma.vmem_to_hbm [thread:$0]  %s5195, 256, %s131, [#allocation46], 128, 128, 8
    $region361: #{tpu_custom_call.1} parent=1 // pred_fallthru
      _
    // Predicated region
    $region362: #{tpu_custom_call.1} parent=1 // pred_check
      _
    $region363: #{tpu_custom_call.1} parent=1 // pred_check_branch
      %5202 = sbr.rel (0) target = $region365
    $region364: #{tpu_custom_call.1} parent=1 // pred_region
      %5203 = dma.done [#allocation8], 256
    $region365: #{tpu_custom_call.1} parent=1 // pred_fallthru
      _
    // Predicated region
    $region366: #{tpu_custom_call.1} parent=1 // pred_check
      _
    $region367: #{tpu_custom_call.1} parent=1 // pred_check_branch
      %5205 = sbr.rel (0) target = $region369
    $region368: #{tpu_custom_call.1} parent=1 // pred_region
      %5206 = dma.done [#allocation46], 256
    $region369: #{tpu_custom_call.1} parent=1 // pred_fallthru
      _
    %5207 = vsyncpa [#allocation7], 1
    %5208 = vsyncpa [#allocation10], 1
    %5209 = vsyncpa [#allocation13], 1
    %5210 = vsyncpa [#allocation16], 1
    %5211 = vsyncpa [#allocation19], 1
    %5212 = vsyncpa [#allocation22], 1
    %5213 = vsyncpa [#allocation25], 1
    %5214 = vsyncpa [#allocation28], 1
    %5215 = vsyncpa [#allocation31], 1
    %5216 = vsyncpa [#allocation34], 1
    %5217 = vsyncpa [#allocation37], 1
    %5218 = vsyncpa [#allocation40], 1
    %5219 = vsyncpa [#allocation43], 1
    %5220 = vsyncpa [#allocation8], 1
    %5221 = vsyncpa [#allocation46], 1

</llo_original>
